<compile_context>
chip_gen: v6e
topology: v6e:2x2x1
jax: 0.10.0
libtpu: 0.0.40
codegen_flags: <defaults>
</compile_context>

<pallas_src>
import functools

import jax
import jax.numpy as jnp
from jax import lax
from jax.experimental import pallas as pl
from jax.experimental.pallas import tpu as pltpu

CONFIG = dict(
    vocab_size=64,
    hidden_dims=32,
    num_heads_q=4,
    num_heads_kv=2,
    seq_length=8,
    ffn_multiplier=2,
    num_blocks=2,
    eps=1e-5,
)


# --------------------------- Pallas kernel ----------------------------------

def _fwd_kernel(hq, hkv, eps,
                x_ref, wq_ref, wqr_ref, wk_ref, wkr_ref, wv_ref, wo_ref,
                w1_ref, w3_ref, w2_ref, s1_ref, s2_ref, cos_ref, sin_ref,
                fs_ref, fw_ref, o_ref):
    """Entire forward pass for one batch element (grid axis = batch)."""
    S, H = x_ref.shape[1], x_ref.shape[2]
    L = wq_ref.shape[0]
    d = wq_ref.shape[-1]
    rep = hq // hkv
    f32 = jnp.float32
    bf16 = jnp.bfloat16

    x = x_ref[0].astype(f32)            # [S, H] residual stream (kept in f32)
    cos = cos_ref[...]                  # [S, d]
    sin = sin_ref[...]                  # [S, d]
    scale = 1.0 / (d ** 0.5)

    row = lax.broadcasted_iota(jnp.int32, (S, S), 0)
    col = lax.broadcasted_iota(jnp.int32, (S, S), 1)
    causal = col <= row

    def rmsnorm(v, shift):              # v: [S, H] f32, shift: [1, H] f32
        ms = jnp.mean(v * v, axis=-1, keepdims=True)
        return v * lax.rsqrt(ms + eps) * shift

    for l in range(L):
        # ---- attention sub-block ------------------------------------------
        h = rmsnorm(x, s1_ref[l]).astype(bf16)        # bf16 MXU operand

        # K / V per KV head, computed once and reused by the q heads of the
        # group (GQA without any repeat/materialization).  RoPE: rotate_half
        # is pre-folded into wkr / wqr = W @ R on the host, so in-kernel RoPE
        # is just a second tiny matmul + VPU mul/add.
        ks, vs = [], []
        for g in range(hkv):
            k_lin = jnp.dot(h, wk_ref[l, g], preferred_element_type=f32)
            k_rot = jnp.dot(h, wkr_ref[l, g], preferred_element_type=f32)
            ks.append(k_lin * cos + k_rot * sin)      # [S, d] f32
            vs.append(jnp.dot(h, wv_ref[l, g], preferred_element_type=f32))

        attn = jnp.zeros((S, H), f32)
        for hh in range(hq):
            g = hh // rep                             # GQA head mapping
            q_lin = jnp.dot(h, wq_ref[l, hh], preferred_element_type=f32)
            q_rot = jnp.dot(h, wqr_ref[l, hh], preferred_element_type=f32)
            q = q_lin * cos + q_rot * sin             # [S, d]
            s = lax.dot_general(q, ks[g], (((1,), (1,)), ((), ())),
                                preferred_element_type=f32) * scale   # [S, S]
            s = jnp.where(causal, s, -1e30)
            s = s - jnp.max(s, axis=-1, keepdims=True)
            p = jnp.exp(s)
            p = p * pl.reciprocal(jnp.sum(p, axis=-1, keepdims=True), approx=True)
            o_h = jnp.dot(p, vs[g], preferred_element_type=f32)        # [S, d]
            # sum_h (o_h @ wo[h]) == concat_h(o_h) @ wo
            attn = attn + jnp.dot(o_h.astype(bf16), wo_ref[l, hh],
                                  preferred_element_type=f32)          # [S, H]
        x = x + attn                                   # residual

        # ---- FFN sub-block (reference has NO residual around the FFN) -----
        h2 = rmsnorm(x, s2_ref[l]).astype(bf16)
        h1 = jnp.dot(h2, w1_ref[l], preferred_element_type=f32)        # [S, F]
        h1 = h1 * jax.nn.sigmoid(h1)                                   # SiLU (f32)
        h3 = jnp.dot(h2, w3_ref[l], preferred_element_type=f32)
        x = jnp.dot((h1 * h3).astype(bf16), w2_ref[l],
                    preferred_element_type=f32)                        # [S, H]

    # ---- final RMSNorm + logits projection (fused, no extra launch) -------
    xn = rmsnorm(x, fs_ref[...]).astype(bf16)
    logits = jnp.dot(xn, fw_ref[...], preferred_element_type=f32)      # [S, V]
    o_ref[0] = logits.astype(o_ref.dtype)


# --------------------------- JAX glue ----------------------------------------

def rope_tables(seq_len, head_dim, base=10000.0):
    half = head_dim // 2
    inv_freq = 1.0 / (base ** (jnp.arange(half, dtype=jnp.float32) / half))
    t = jnp.arange(seq_len, dtype=jnp.float32)
    freqs = jnp.outer(t, inv_freq)                      # [S, D/2]
    emb = jnp.concatenate([freqs, freqs], axis=-1)      # [S, D]
    cos, sin = jnp.cos(emb), jnp.sin(emb)
    # signed permutation R so that (x @ R) == rotate_half(x) == concat(-x2, x1)
    rot = jnp.zeros((head_dim, head_dim), jnp.float32)
    rot = rot.at[half:, :half].set(-jnp.eye(half, dtype=jnp.float32))
    rot = rot.at[:half, half:].set(jnp.eye(half, dtype=jnp.float32))
    return cos, sin, rot


def init_params(key, cfg):
    h = cfg["hidden_dims"]
    v = cfg["vocab_size"]
    f = cfg["ffn_multiplier"] * h
    hq, hkv = cfg["num_heads_q"], cfg["num_heads_kv"]
    d = h // hq

    def nrm(k, shape, scale=0.02):
        return scale * jax.random.normal(k, shape, dtype=jnp.float32)

    keys = iter(jax.random.split(key, 2 + 7 * cfg["num_blocks"]))
    params = dict(
        embedding=nrm(next(keys), (v, h)),
        final_w=nrm(next(keys), (h, v)),          # final_layer weight, stored [in, out]
        final_norm_shift=jnp.ones((h,), jnp.float32),
        blocks=[],
    )
    for _ in range(cfg["num_blocks"]):
        params["blocks"].append(dict(
            wq=nrm(next(keys), (h, hq * d)),
            wk=nrm(next(keys), (h, hkv * d)),
            wv=nrm(next(keys), (h, hkv * d)),
            wo=nrm(next(keys), (hq * d, h)),
            w1=nrm(next(keys), (h, f)),
            w3=nrm(next(keys), (h, f)),
            w2=nrm(next(keys), (f, h)),
            norm1_shift=jnp.ones((h,), jnp.float32),
            norm2_shift=jnp.ones((h,), jnp.float32),
        ))
    return params


def _rep_spec(arr):
    """Whole-array block, same block for every grid step (weights / tables)."""
    nd = arr.ndim

    def imap(b):
        return (0,) * nd

    return pl.BlockSpec(arr.shape, imap)


@jax.jit
def llama_forward(tokens, params):
    cfg = CONFIG
    B, S = tokens.shape
    H = cfg["hidden_dims"]
    hq, hkv = cfg["num_heads_q"], cfg["num_heads_kv"]
    d = H // hq
    V = cfg["vocab_size"]
    L = cfg["num_blocks"]
    bf16 = jnp.bfloat16

    cos, sin, rot = rope_tables(S, d)

    stack = lambda name: jnp.stack([blk[name] for blk in params["blocks"]])
    # Per-head projection weights [L, n_heads, H, d]; RoPE rotate_half folded
    # into the *_r variants (W @ R) in f32 on the host before the bf16 cast.
    wq = stack("wq").reshape(L, H, hq, d).transpose(0, 2, 1, 3)
    wk = stack("wk").reshape(L, H, hkv, d).transpose(0, 2, 1, 3)
    wv = stack("wv").reshape(L, H, hkv, d).transpose(0, 2, 1, 3)
    wqr = jnp.matmul(wq, rot)
    wkr = jnp.matmul(wk, rot)
    wo = stack("wo").reshape(L, hq, d, H)
    w1, w3, w2 = stack("w1"), stack("w3"), stack("w2")
    s1 = stack("norm1_shift").reshape(L, 1, H)
    s2 = stack("norm2_shift").reshape(L, 1, H)
    fs = params["final_norm_shift"].reshape(1, H)
    fw = params["final_w"]

    # embedding lookup (gather) stays in plain JAX glue
    x = jnp.take(params["embedding"], tokens, axis=0)   # [B, S, H] f32

    operands = (
        [x]
        + [a.astype(bf16) for a in (wq, wqr, wk, wkr, wv, wo, w1, w3, w2)]
        + [s1, s2, cos, sin, fs, fw.astype(bf16)]
    )

    in_specs = ([pl.BlockSpec((1, S, H), lambda b: (b, 0, 0))]
                + [_rep_spec(a) for a in operands[1:]])

    kernel = functools.partial(_fwd_kernel, hq, hkv, cfg["eps"])
    logits = pl.pallas_call(
        kernel,
        grid=(B,),
        out_shape=jax.ShapeDtypeStruct((B, S, V), jnp.float32),
        in_specs=in_specs,
        out_specs=pl.BlockSpec((1, S, V), lambda b: (b, 0, 0)),
        compiler_params=pltpu.CompilerParams(
            dimension_semantics=("parallel",)),
    )(*operands)
    return logits


if __name__ == "__main__":
    key = jax.random.PRNGKey(0)
    pkey, tkey = jax.random.split(key)
    params = init_params(pkey, CONFIG)

    B, S = 2, CONFIG["seq_length"]
    tokens = jax.random.randint(tkey, (B, S), 0, CONFIG["vocab_size"], dtype=jnp.int32)

    logits = llama_forward(tokens, params)
    jax.block_until_ready(logits)

    assert logits.shape == (B, S, CONFIG["vocab_size"]), logits.shape
    assert bool(jnp.all(jnp.isfinite(logits)))
    print("KERNEL_OK")
</pallas_src>

<mosaic_0001>
module attributes {stable_mosaic.version = 11 : i64} {
  func.func @_fwd_kernel(%arg0: i32, %arg1: memref<1x8x32xf32, #tpu.memory_space<vmem>>, %arg2: memref<2x4x32x8xbf16, #tpu.memory_space<vmem>>, %arg3: memref<2x4x32x8xbf16, #tpu.memory_space<vmem>>, %arg4: memref<2x2x32x8xbf16, #tpu.memory_space<vmem>>, %arg5: memref<2x2x32x8xbf16, #tpu.memory_space<vmem>>, %arg6: memref<2x2x32x8xbf16, #tpu.memory_space<vmem>>, %arg7: memref<2x4x8x32xbf16, #tpu.memory_space<vmem>>, %arg8: memref<2x32x64xbf16, #tpu.memory_space<vmem>>, %arg9: memref<2x32x64xbf16, #tpu.memory_space<vmem>>, %arg10: memref<2x64x32xbf16, #tpu.memory_space<vmem>>, %arg11: memref<2x1x32xf32, #tpu.memory_space<vmem>>, %arg12: memref<2x1x32xf32, #tpu.memory_space<vmem>>, %arg13: memref<8x8xf32, #tpu.memory_space<vmem>>, %arg14: memref<8x8xf32, #tpu.memory_space<vmem>>, %arg15: memref<1x32xf32, #tpu.memory_space<vmem>>, %arg16: memref<32x64xbf16, #tpu.memory_space<vmem>>, %arg17: memref<1x8x64xf32, #tpu.memory_space<vmem>>) attributes {dimension_semantics = [#tpu.dimension_semantics<parallel>], iteration_bounds = array<i64: 2>, scalar_prefetch = 0 : i64, scratch_operands = 0 : i64, tpu.core_type = #tpu.core_type<tc>, window_params = [{transform_indices = @transform_0, window_bounds = array<i64: 1, 8, 32>}, {pipeline_mode = #tpu.pipeline_mode<synchronous>, transform_indices = @transform_1, window_bounds = array<i64: 2, 4, 32, 8>}, {pipeline_mode = #tpu.pipeline_mode<synchronous>, transform_indices = @transform_2, window_bounds = array<i64: 2, 4, 32, 8>}, {pipeline_mode = #tpu.pipeline_mode<synchronous>, transform_indices = @transform_3, window_bounds = array<i64: 2, 2, 32, 8>}, {pipeline_mode = #tpu.pipeline_mode<synchronous>, transform_indices = @transform_4, window_bounds = array<i64: 2, 2, 32, 8>}, {pipeline_mode = #tpu.pipeline_mode<synchronous>, transform_indices = @transform_5, window_bounds = array<i64: 2, 2, 32, 8>}, {pipeline_mode = #tpu.pipeline_mode<synchronous>, transform_indices = @transform_6, window_bounds = array<i64: 2, 4, 8, 32>}, {pipeline_mode = #tpu.pipeline_mode<synchronous>, transform_indices = @transform_7, window_bounds = array<i64: 2, 32, 64>}, {pipeline_mode = #tpu.pipeline_mode<synchronous>, transform_indices = @transform_8, window_bounds = array<i64: 2, 32, 64>}, {pipeline_mode = #tpu.pipeline_mode<synchronous>, transform_indices = @transform_9, window_bounds = array<i64: 2, 64, 32>}, {pipeline_mode = #tpu.pipeline_mode<synchronous>, transform_indices = @transform_10, window_bounds = array<i64: 2, 1, 32>}, {pipeline_mode = #tpu.pipeline_mode<synchronous>, transform_indices = @transform_11, window_bounds = array<i64: 2, 1, 32>}, {pipeline_mode = #tpu.pipeline_mode<synchronous>, transform_indices = @transform_12, window_bounds = array<i64: 8, 8>}, {pipeline_mode = #tpu.pipeline_mode<synchronous>, transform_indices = @transform_13, window_bounds = array<i64: 8, 8>}, {pipeline_mode = #tpu.pipeline_mode<synchronous>, transform_indices = @transform_14, window_bounds = array<i64: 1, 32>}, {pipeline_mode = #tpu.pipeline_mode<synchronous>, transform_indices = @transform_15, window_bounds = array<i64: 32, 64>}, {transform_indices = @transform_16, window_bounds = array<i64: 1, 8, 64>}]} {
    %c0 = arith.constant 0 : index
    %c0_0 = arith.constant 0 : index
    %c0_1 = arith.constant 0 : index
    %0 = vector.load %arg1[%c0, %c0_0, %c0_1] : memref<1x8x32xf32, #tpu.memory_space<vmem>>, vector<1x8x32xf32>
    %1 = vector.shape_cast %0 : vector<1x8x32xf32> to vector<8x32xf32>
    %c0_2 = arith.constant 0 : index
    %c0_3 = arith.constant 0 : index
    %2 = vector.load %arg13[%c0_2, %c0_3] : memref<8x8xf32, #tpu.memory_space<vmem>>, vector<8x8xf32>
    %c0_4 = arith.constant 0 : index
    %c0_5 = arith.constant 0 : index
    %3 = vector.load %arg14[%c0_4, %c0_5] : memref<8x8xf32, #tpu.memory_space<vmem>>, vector<8x8xf32>
    %4 = tpu.iota {dimensions = array<i32: 0>} : vector<8x8xi32>
    %5 = tpu.iota {dimensions = array<i32: 1>} : vector<8x8xi32>
    %6 = arith.cmpi sle, %5, %4 : vector<8x8xi32>
    %c0_6 = arith.constant 0 : index
    %c0_7 = arith.constant 0 : index
    %c0_8 = arith.constant 0 : index
    %7 = vector.load %arg11[%c0_6, %c0_7, %c0_8] : memref<2x1x32xf32, #tpu.memory_space<vmem>>, vector<1x1x32xf32>
    %8 = vector.shape_cast %7 : vector<1x1x32xf32> to vector<1x32xf32>
    %9 = arith.mulf %1, %1 : vector<8x32xf32>
    %cst = arith.constant dense<0.000000e+00> : vector<8xf32>
    %10 = vector.multi_reduction <add>, %9, %cst [1] : vector<8x32xf32> to vector<8xf32>
    %11 = vector.shape_cast %10 : vector<8xf32> to vector<8x1xf32>
    %cst_9 = arith.constant 3.200000e+01 : f32
    %12 = vector.broadcast %cst_9 : f32 to vector<8x1xf32>
    %13 = arith.divf %11, %12 : vector<8x1xf32>
    %cst_10 = arith.constant 9.99999974E-6 : f32
    %14 = vector.broadcast %cst_10 : f32 to vector<8x1xf32>
    %15 = arith.addf %13, %14 : vector<8x1xf32>
    %16 = math.rsqrt %15 : vector<8x1xf32>
    %17 = vector.broadcast %16 : vector<8x1xf32> to vector<8x32xf32>
    %18 = arith.mulf %1, %17 : vector<8x32xf32>
    %19 = vector.broadcast %8 : vector<1x32xf32> to vector<8x32xf32>
    %20 = arith.mulf %18, %19 : vector<8x32xf32>
    %21 = arith.truncf %20 : vector<8x32xf32> to vector<8x32xbf16>
    %c0_11 = arith.constant 0 : index
    %c0_12 = arith.constant 0 : index
    %c0_13 = arith.constant 0 : index
    %c0_14 = arith.constant 0 : index
    %22 = vector.load %arg4[%c0_11, %c0_12, %c0_13, %c0_14] : memref<2x2x32x8xbf16, #tpu.memory_space<vmem>>, vector<1x1x32x8xbf16>
    %23 = vector.shape_cast %22 : vector<1x1x32x8xbf16> to vector<32x8xbf16>
    %cst_15 = arith.constant dense<0.000000e+00> : vector<8x8xf32>
    %24 = tpu.matmul %21, %23, %cst_15 {dimension_numbers = #tpu.dot_dimension_numbers<[1], [0], [0], [1], [0, 0, 1, 1], [], []>} : vector<8x32xbf16>, vector<32x8xbf16>, vector<8x8xf32> -> vector<8x8xf32>
    %c0_16 = arith.constant 0 : index
    %c0_17 = arith.constant 0 : index
    %c0_18 = arith.constant 0 : index
    %c0_19 = arith.constant 0 : index
    %25 = vector.load %arg5[%c0_16, %c0_17, %c0_18, %c0_19] : memref<2x2x32x8xbf16, #tpu.memory_space<vmem>>, vector<1x1x32x8xbf16>
    %26 = vector.shape_cast %25 : vector<1x1x32x8xbf16> to vector<32x8xbf16>
    %cst_20 = arith.constant dense<0.000000e+00> : vector<8x8xf32>
    %27 = tpu.matmul %21, %26, %cst_20 {dimension_numbers = #tpu.dot_dimension_numbers<[1], [0], [0], [1], [0, 0, 1, 1], [], []>} : vector<8x32xbf16>, vector<32x8xbf16>, vector<8x8xf32> -> vector<8x8xf32>
    %28 = arith.mulf %24, %2 : vector<8x8xf32>
    %29 = arith.mulf %27, %3 : vector<8x8xf32>
    %30 = arith.addf %28, %29 : vector<8x8xf32>
    %c0_21 = arith.constant 0 : index
    %c0_22 = arith.constant 0 : index
    %c0_23 = arith.constant 0 : index
    %c0_24 = arith.constant 0 : index
    %31 = vector.load %arg6[%c0_21, %c0_22, %c0_23, %c0_24] : memref<2x2x32x8xbf16, #tpu.memory_space<vmem>>, vector<1x1x32x8xbf16>
    %32 = vector.shape_cast %31 : vector<1x1x32x8xbf16> to vector<32x8xbf16>
    %cst_25 = arith.constant dense<0.000000e+00> : vector<8x8xf32>
    %33 = tpu.matmul %21, %32, %cst_25 {dimension_numbers = #tpu.dot_dimension_numbers<[1], [0], [0], [1], [0, 0, 1, 1], [], []>} : vector<8x32xbf16>, vector<32x8xbf16>, vector<8x8xf32> -> vector<8x8xf32>
    %c0_26 = arith.constant 0 : index
    %c1 = arith.constant 1 : index
    %c0_27 = arith.constant 0 : index
    %c0_28 = arith.constant 0 : index
    %34 = vector.load %arg4[%c0_26, %c1, %c0_27, %c0_28] : memref<2x2x32x8xbf16, #tpu.memory_space<vmem>>, vector<1x1x32x8xbf16>
    %35 = vector.shape_cast %34 : vector<1x1x32x8xbf16> to vector<32x8xbf16>
    %cst_29 = arith.constant dense<0.000000e+00> : vector<8x8xf32>
    %36 = tpu.matmul %21, %35, %cst_29 {dimension_numbers = #tpu.dot_dimension_numbers<[1], [0], [0], [1], [0, 0, 1, 1], [], []>} : vector<8x32xbf16>, vector<32x8xbf16>, vector<8x8xf32> -> vector<8x8xf32>
    %c0_30 = arith.constant 0 : index
    %c1_31 = arith.constant 1 : index
    %c0_32 = arith.constant 0 : index
    %c0_33 = arith.constant 0 : index
    %37 = vector.load %arg5[%c0_30, %c1_31, %c0_32, %c0_33] : memref<2x2x32x8xbf16, #tpu.memory_space<vmem>>, vector<1x1x32x8xbf16>
    %38 = vector.shape_cast %37 : vector<1x1x32x8xbf16> to vector<32x8xbf16>
    %cst_34 = arith.constant dense<0.000000e+00> : vector<8x8xf32>
    %39 = tpu.matmul %21, %38, %cst_34 {dimension_numbers = #tpu.dot_dimension_numbers<[1], [0], [0], [1], [0, 0, 1, 1], [], []>} : vector<8x32xbf16>, vector<32x8xbf16>, vector<8x8xf32> -> vector<8x8xf32>
    %40 = arith.mulf %36, %2 : vector<8x8xf32>
    %41 = arith.mulf %39, %3 : vector<8x8xf32>
    %42 = arith.addf %40, %41 : vector<8x8xf32>
    %c0_35 = arith.constant 0 : index
    %c1_36 = arith.constant 1 : index
    %c0_37 = arith.constant 0 : index
    %c0_38 = arith.constant 0 : index
    %43 = vector.load %arg6[%c0_35, %c1_36, %c0_37, %c0_38] : memref<2x2x32x8xbf16, #tpu.memory_space<vmem>>, vector<1x1x32x8xbf16>
    %44 = vector.shape_cast %43 : vector<1x1x32x8xbf16> to vector<32x8xbf16>
    %cst_39 = arith.constant dense<0.000000e+00> : vector<8x8xf32>
    %45 = tpu.matmul %21, %44, %cst_39 {dimension_numbers = #tpu.dot_dimension_numbers<[1], [0], [0], [1], [0, 0, 1, 1], [], []>} : vector<8x32xbf16>, vector<32x8xbf16>, vector<8x8xf32> -> vector<8x8xf32>
    %cst_40 = arith.constant 0.000000e+00 : f32
    %46 = vector.broadcast %cst_40 : f32 to vector<8x32xf32>
    %c0_41 = arith.constant 0 : index
    %c0_42 = arith.constant 0 : index
    %c0_43 = arith.constant 0 : index
    %c0_44 = arith.constant 0 : index
    %47 = vector.load %arg2[%c0_41, %c0_42, %c0_43, %c0_44] : memref<2x4x32x8xbf16, #tpu.memory_space<vmem>>, vector<1x1x32x8xbf16>
    %48 = vector.shape_cast %47 : vector<1x1x32x8xbf16> to vector<32x8xbf16>
    %cst_45 = arith.constant dense<0.000000e+00> : vector<8x8xf32>
    %49 = tpu.matmul %21, %48, %cst_45 {dimension_numbers = #tpu.dot_dimension_numbers<[1], [0], [0], [1], [0, 0, 1, 1], [], []>} : vector<8x32xbf16>, vector<32x8xbf16>, vector<8x8xf32> -> vector<8x8xf32>
    %c0_46 = arith.constant 0 : index
    %c0_47 = arith.constant 0 : index
    %c0_48 = arith.constant 0 : index
    %c0_49 = arith.constant 0 : index
    %50 = vector.load %arg3[%c0_46, %c0_47, %c0_48, %c0_49] : memref<2x4x32x8xbf16, #tpu.memory_space<vmem>>, vector<1x1x32x8xbf16>
    %51 = vector.shape_cast %50 : vector<1x1x32x8xbf16> to vector<32x8xbf16>
    %cst_50 = arith.constant dense<0.000000e+00> : vector<8x8xf32>
    %52 = tpu.matmul %21, %51, %cst_50 {dimension_numbers = #tpu.dot_dimension_numbers<[1], [0], [0], [1], [0, 0, 1, 1], [], []>} : vector<8x32xbf16>, vector<32x8xbf16>, vector<8x8xf32> -> vector<8x8xf32>
    %53 = arith.mulf %49, %2 : vector<8x8xf32>
    %54 = arith.mulf %52, %3 : vector<8x8xf32>
    %55 = arith.addf %53, %54 : vector<8x8xf32>
    %cst_51 = arith.constant dense<0.000000e+00> : vector<8x8xf32>
    %56 = tpu.matmul %55, %30, %cst_51 {dimension_numbers = #tpu.dot_dimension_numbers<[1], [1], [0], [0], [0, 0, 1, 0], [], []>} : vector<8x8xf32>, vector<8x8xf32>, vector<8x8xf32> -> vector<8x8xf32>
    %cst_52 = arith.constant 0.353553385 : f32
    %57 = vector.broadcast %cst_52 : f32 to vector<8x8xf32>
    %58 = arith.mulf %56, %57 : vector<8x8xf32>
    %cst_53 = arith.constant -1.000000e+30 : f32
    %59 = vector.broadcast %cst_53 : f32 to vector<8x8xf32>
    %60 = arith.select %6, %58, %59 : vector<8x8xi1>, vector<8x8xf32>
    %cst_54 = arith.constant dense<0xFF800000> : vector<8xf32>
    %61 = vector.multi_reduction <maximumf>, %60, %cst_54 [1] : vector<8x8xf32> to vector<8xf32>
    %62 = vector.shape_cast %61 : vector<8xf32> to vector<8x1xf32>
    %63 = vector.broadcast %62 : vector<8x1xf32> to vector<8x8xf32>
    %64 = arith.subf %60, %63 : vector<8x8xf32>
    %65 = math.exp %64 : vector<8x8xf32>
    %cst_55 = arith.constant dense<0.000000e+00> : vector<8xf32>
    %66 = vector.multi_reduction <add>, %65, %cst_55 [1] : vector<8x8xf32> to vector<8xf32>
    %67 = vector.shape_cast %66 : vector<8xf32> to vector<8x1xf32>
    %68 = tpu.reciprocal %67 {approx = true} : vector<8x1xf32> -> vector<8x1xf32>
    %69 = vector.broadcast %68 : vector<8x1xf32> to vector<8x8xf32>
    %70 = arith.mulf %65, %69 : vector<8x8xf32>
    %cst_56 = arith.constant dense<0.000000e+00> : vector<8x8xf32>
    %71 = tpu.matmul %70, %33, %cst_56 {dimension_numbers = #tpu.dot_dimension_numbers<[1], [0], [0], [1], [0, 0, 1, 1], [], []>} : vector<8x8xf32>, vector<8x8xf32>, vector<8x8xf32> -> vector<8x8xf32>
    %72 = arith.truncf %71 : vector<8x8xf32> to vector<8x8xbf16>
    %c0_57 = arith.constant 0 : index
    %c0_58 = arith.constant 0 : index
    %c0_59 = arith.constant 0 : index
    %c0_60 = arith.constant 0 : index
    %73 = vector.load %arg7[%c0_57, %c0_58, %c0_59, %c0_60] : memref<2x4x8x32xbf16, #tpu.memory_space<vmem>>, vector<1x1x8x32xbf16>
    %74 = vector.shape_cast %73 : vector<1x1x8x32xbf16> to vector<8x32xbf16>
    %cst_61 = arith.constant dense<0.000000e+00> : vector<8x32xf32>
    %75 = tpu.matmul %72, %74, %cst_61 {dimension_numbers = #tpu.dot_dimension_numbers<[1], [0], [0], [1], [0, 0, 1, 1], [], []>} : vector<8x8xbf16>, vector<8x32xbf16>, vector<8x32xf32> -> vector<8x32xf32>
    %76 = arith.addf %46, %75 : vector<8x32xf32>
    %c0_62 = arith.constant 0 : index
    %c1_63 = arith.constant 1 : index
    %c0_64 = arith.constant 0 : index
    %c0_65 = arith.constant 0 : index
    %77 = vector.load %arg2[%c0_62, %c1_63, %c0_64, %c0_65] : memref<2x4x32x8xbf16, #tpu.memory_space<vmem>>, vector<1x1x32x8xbf16>
    %78 = vector.shape_cast %77 : vector<1x1x32x8xbf16> to vector<32x8xbf16>
    %cst_66 = arith.constant dense<0.000000e+00> : vector<8x8xf32>
    %79 = tpu.matmul %21, %78, %cst_66 {dimension_numbers = #tpu.dot_dimension_numbers<[1], [0], [0], [1], [0, 0, 1, 1], [], []>} : vector<8x32xbf16>, vector<32x8xbf16>, vector<8x8xf32> -> vector<8x8xf32>
    %c0_67 = arith.constant 0 : index
    %c1_68 = arith.constant 1 : index
    %c0_69 = arith.constant 0 : index
    %c0_70 = arith.constant 0 : index
    %80 = vector.load %arg3[%c0_67, %c1_68, %c0_69, %c0_70] : memref<2x4x32x8xbf16, #tpu.memory_space<vmem>>, vector<1x1x32x8xbf16>
    %81 = vector.shape_cast %80 : vector<1x1x32x8xbf16> to vector<32x8xbf16>
    %cst_71 = arith.constant dense<0.000000e+00> : vector<8x8xf32>
    %82 = tpu.matmul %21, %81, %cst_71 {dimension_numbers = #tpu.dot_dimension_numbers<[1], [0], [0], [1], [0, 0, 1, 1], [], []>} : vector<8x32xbf16>, vector<32x8xbf16>, vector<8x8xf32> -> vector<8x8xf32>
    %83 = arith.mulf %79, %2 : vector<8x8xf32>
    %84 = arith.mulf %82, %3 : vector<8x8xf32>
    %85 = arith.addf %83, %84 : vector<8x8xf32>
    %cst_72 = arith.constant dense<0.000000e+00> : vector<8x8xf32>
    %86 = tpu.matmul %85, %30, %cst_72 {dimension_numbers = #tpu.dot_dimension_numbers<[1], [1], [0], [0], [0, 0, 1, 0], [], []>} : vector<8x8xf32>, vector<8x8xf32>, vector<8x8xf32> -> vector<8x8xf32>
    %cst_73 = arith.constant 0.353553385 : f32
    %87 = vector.broadcast %cst_73 : f32 to vector<8x8xf32>
    %88 = arith.mulf %86, %87 : vector<8x8xf32>
    %cst_74 = arith.constant -1.000000e+30 : f32
    %89 = vector.broadcast %cst_74 : f32 to vector<8x8xf32>
    %90 = arith.select %6, %88, %89 : vector<8x8xi1>, vector<8x8xf32>
    %cst_75 = arith.constant dense<0xFF800000> : vector<8xf32>
    %91 = vector.multi_reduction <maximumf>, %90, %cst_75 [1] : vector<8x8xf32> to vector<8xf32>
    %92 = vector.shape_cast %91 : vector<8xf32> to vector<8x1xf32>
    %93 = vector.broadcast %92 : vector<8x1xf32> to vector<8x8xf32>
    %94 = arith.subf %90, %93 : vector<8x8xf32>
    %95 = math.exp %94 : vector<8x8xf32>
    %cst_76 = arith.constant dense<0.000000e+00> : vector<8xf32>
    %96 = vector.multi_reduction <add>, %95, %cst_76 [1] : vector<8x8xf32> to vector<8xf32>
    %97 = vector.shape_cast %96 : vector<8xf32> to vector<8x1xf32>
    %98 = tpu.reciprocal %97 {approx = true} : vector<8x1xf32> -> vector<8x1xf32>
    %99 = vector.broadcast %98 : vector<8x1xf32> to vector<8x8xf32>
    %100 = arith.mulf %95, %99 : vector<8x8xf32>
    %cst_77 = arith.constant dense<0.000000e+00> : vector<8x8xf32>
    %101 = tpu.matmul %100, %33, %cst_77 {dimension_numbers = #tpu.dot_dimension_numbers<[1], [0], [0], [1], [0, 0, 1, 1], [], []>} : vector<8x8xf32>, vector<8x8xf32>, vector<8x8xf32> -> vector<8x8xf32>
    %102 = arith.truncf %101 : vector<8x8xf32> to vector<8x8xbf16>
    %c0_78 = arith.constant 0 : index
    %c1_79 = arith.constant 1 : index
    %c0_80 = arith.constant 0 : index
    %c0_81 = arith.constant 0 : index
    %103 = vector.load %arg7[%c0_78, %c1_79, %c0_80, %c0_81] : memref<2x4x8x32xbf16, #tpu.memory_space<vmem>>, vector<1x1x8x32xbf16>
    %104 = vector.shape_cast %103 : vector<1x1x8x32xbf16> to vector<8x32xbf16>
    %cst_82 = arith.constant dense<0.000000e+00> : vector<8x32xf32>
    %105 = tpu.matmul %102, %104, %cst_82 {dimension_numbers = #tpu.dot_dimension_numbers<[1], [0], [0], [1], [0, 0, 1, 1], [], []>} : vector<8x8xbf16>, vector<8x32xbf16>, vector<8x32xf32> -> vector<8x32xf32>
    %106 = arith.addf %76, %105 : vector<8x32xf32>
    %c0_83 = arith.constant 0 : index
    %c2 = arith.constant 2 : index
    %c0_84 = arith.constant 0 : index
    %c0_85 = arith.constant 0 : index
    %107 = vector.load %arg2[%c0_83, %c2, %c0_84, %c0_85] : memref<2x4x32x8xbf16, #tpu.memory_space<vmem>>, vector<1x1x32x8xbf16>
    %108 = vector.shape_cast %107 : vector<1x1x32x8xbf16> to vector<32x8xbf16>
    %cst_86 = arith.constant dense<0.000000e+00> : vector<8x8xf32>
    %109 = tpu.matmul %21, %108, %cst_86 {dimension_numbers = #tpu.dot_dimension_numbers<[1], [0], [0], [1], [0, 0, 1, 1], [], []>} : vector<8x32xbf16>, vector<32x8xbf16>, vector<8x8xf32> -> vector<8x8xf32>
    %c0_87 = arith.constant 0 : index
    %c2_88 = arith.constant 2 : index
    %c0_89 = arith.constant 0 : index
    %c0_90 = arith.constant 0 : index
    %110 = vector.load %arg3[%c0_87, %c2_88, %c0_89, %c0_90] : memref<2x4x32x8xbf16, #tpu.memory_space<vmem>>, vector<1x1x32x8xbf16>
    %111 = vector.shape_cast %110 : vector<1x1x32x8xbf16> to vector<32x8xbf16>
    %cst_91 = arith.constant dense<0.000000e+00> : vector<8x8xf32>
    %112 = tpu.matmul %21, %111, %cst_91 {dimension_numbers = #tpu.dot_dimension_numbers<[1], [0], [0], [1], [0, 0, 1, 1], [], []>} : vector<8x32xbf16>, vector<32x8xbf16>, vector<8x8xf32> -> vector<8x8xf32>
    %113 = arith.mulf %109, %2 : vector<8x8xf32>
    %114 = arith.mulf %112, %3 : vector<8x8xf32>
    %115 = arith.addf %113, %114 : vector<8x8xf32>
    %cst_92 = arith.constant dense<0.000000e+00> : vector<8x8xf32>
    %116 = tpu.matmul %115, %42, %cst_92 {dimension_numbers = #tpu.dot_dimension_numbers<[1], [1], [0], [0], [0, 0, 1, 0], [], []>} : vector<8x8xf32>, vector<8x8xf32>, vector<8x8xf32> -> vector<8x8xf32>
    %cst_93 = arith.constant 0.353553385 : f32
    %117 = vector.broadcast %cst_93 : f32 to vector<8x8xf32>
    %118 = arith.mulf %116, %117 : vector<8x8xf32>
    %cst_94 = arith.constant -1.000000e+30 : f32
    %119 = vector.broadcast %cst_94 : f32 to vector<8x8xf32>
    %120 = arith.select %6, %118, %119 : vector<8x8xi1>, vector<8x8xf32>
    %cst_95 = arith.constant dense<0xFF800000> : vector<8xf32>
    %121 = vector.multi_reduction <maximumf>, %120, %cst_95 [1] : vector<8x8xf32> to vector<8xf32>
    %122 = vector.shape_cast %121 : vector<8xf32> to vector<8x1xf32>
    %123 = vector.broadcast %122 : vector<8x1xf32> to vector<8x8xf32>
    %124 = arith.subf %120, %123 : vector<8x8xf32>
    %125 = math.exp %124 : vector<8x8xf32>
    %cst_96 = arith.constant dense<0.000000e+00> : vector<8xf32>
    %126 = vector.multi_reduction <add>, %125, %cst_96 [1] : vector<8x8xf32> to vector<8xf32>
    %127 = vector.shape_cast %126 : vector<8xf32> to vector<8x1xf32>
    %128 = tpu.reciprocal %127 {approx = true} : vector<8x1xf32> -> vector<8x1xf32>
    %129 = vector.broadcast %128 : vector<8x1xf32> to vector<8x8xf32>
    %130 = arith.mulf %125, %129 : vector<8x8xf32>
    %cst_97 = arith.constant dense<0.000000e+00> : vector<8x8xf32>
    %131 = tpu.matmul %130, %45, %cst_97 {dimension_numbers = #tpu.dot_dimension_numbers<[1], [0], [0], [1], [0, 0, 1, 1], [], []>} : vector<8x8xf32>, vector<8x8xf32>, vector<8x8xf32> -> vector<8x8xf32>
    %132 = arith.truncf %131 : vector<8x8xf32> to vector<8x8xbf16>
    %c0_98 = arith.constant 0 : index
    %c2_99 = arith.constant 2 : index
    %c0_100 = arith.constant 0 : index
    %c0_101 = arith.constant 0 : index
    %133 = vector.load %arg7[%c0_98, %c2_99, %c0_100, %c0_101] : memref<2x4x8x32xbf16, #tpu.memory_space<vmem>>, vector<1x1x8x32xbf16>
    %134 = vector.shape_cast %133 : vector<1x1x8x32xbf16> to vector<8x32xbf16>
    %cst_102 = arith.constant dense<0.000000e+00> : vector<8x32xf32>
    %135 = tpu.matmul %132, %134, %cst_102 {dimension_numbers = #tpu.dot_dimension_numbers<[1], [0], [0], [1], [0, 0, 1, 1], [], []>} : vector<8x8xbf16>, vector<8x32xbf16>, vector<8x32xf32> -> vector<8x32xf32>
    %136 = arith.addf %106, %135 : vector<8x32xf32>
    %c0_103 = arith.constant 0 : index
    %c3 = arith.constant 3 : index
    %c0_104 = arith.constant 0 : index
    %c0_105 = arith.constant 0 : index
    %137 = vector.load %arg2[%c0_103, %c3, %c0_104, %c0_105] : memref<2x4x32x8xbf16, #tpu.memory_space<vmem>>, vector<1x1x32x8xbf16>
    %138 = vector.shape_cast %137 : vector<1x1x32x8xbf16> to vector<32x8xbf16>
    %cst_106 = arith.constant dense<0.000000e+00> : vector<8x8xf32>
    %139 = tpu.matmul %21, %138, %cst_106 {dimension_numbers = #tpu.dot_dimension_numbers<[1], [0], [0], [1], [0, 0, 1, 1], [], []>} : vector<8x32xbf16>, vector<32x8xbf16>, vector<8x8xf32> -> vector<8x8xf32>
    %c0_107 = arith.constant 0 : index
    %c3_108 = arith.constant 3 : index
    %c0_109 = arith.constant 0 : index
    %c0_110 = arith.constant 0 : index
    %140 = vector.load %arg3[%c0_107, %c3_108, %c0_109, %c0_110] : memref<2x4x32x8xbf16, #tpu.memory_space<vmem>>, vector<1x1x32x8xbf16>
    %141 = vector.shape_cast %140 : vector<1x1x32x8xbf16> to vector<32x8xbf16>
    %cst_111 = arith.constant dense<0.000000e+00> : vector<8x8xf32>
    %142 = tpu.matmul %21, %141, %cst_111 {dimension_numbers = #tpu.dot_dimension_numbers<[1], [0], [0], [1], [0, 0, 1, 1], [], []>} : vector<8x32xbf16>, vector<32x8xbf16>, vector<8x8xf32> -> vector<8x8xf32>
    %143 = arith.mulf %139, %2 : vector<8x8xf32>
    %144 = arith.mulf %142, %3 : vector<8x8xf32>
    %145 = arith.addf %143, %144 : vector<8x8xf32>
    %cst_112 = arith.constant dense<0.000000e+00> : vector<8x8xf32>
    %146 = tpu.matmul %145, %42, %cst_112 {dimension_numbers = #tpu.dot_dimension_numbers<[1], [1], [0], [0], [0, 0, 1, 0], [], []>} : vector<8x8xf32>, vector<8x8xf32>, vector<8x8xf32> -> vector<8x8xf32>
    %cst_113 = arith.constant 0.353553385 : f32
    %147 = vector.broadcast %cst_113 : f32 to vector<8x8xf32>
    %148 = arith.mulf %146, %147 : vector<8x8xf32>
    %cst_114 = arith.constant -1.000000e+30 : f32
    %149 = vector.broadcast %cst_114 : f32 to vector<8x8xf32>
    %150 = arith.select %6, %148, %149 : vector<8x8xi1>, vector<8x8xf32>
    %cst_115 = arith.constant dense<0xFF800000> : vector<8xf32>
    %151 = vector.multi_reduction <maximumf>, %150, %cst_115 [1] : vector<8x8xf32> to vector<8xf32>
    %152 = vector.shape_cast %151 : vector<8xf32> to vector<8x1xf32>
    %153 = vector.broadcast %152 : vector<8x1xf32> to vector<8x8xf32>
    %154 = arith.subf %150, %153 : vector<8x8xf32>
    %155 = math.exp %154 : vector<8x8xf32>
    %cst_116 = arith.constant dense<0.000000e+00> : vector<8xf32>
    %156 = vector.multi_reduction <add>, %155, %cst_116 [1] : vector<8x8xf32> to vector<8xf32>
    %157 = vector.shape_cast %156 : vector<8xf32> to vector<8x1xf32>
    %158 = tpu.reciprocal %157 {approx = true} : vector<8x1xf32> -> vector<8x1xf32>
    %159 = vector.broadcast %158 : vector<8x1xf32> to vector<8x8xf32>
    %160 = arith.mulf %155, %159 : vector<8x8xf32>
    %cst_117 = arith.constant dense<0.000000e+00> : vector<8x8xf32>
    %161 = tpu.matmul %160, %45, %cst_117 {dimension_numbers = #tpu.dot_dimension_numbers<[1], [0], [0], [1], [0, 0, 1, 1], [], []>} : vector<8x8xf32>, vector<8x8xf32>, vector<8x8xf32> -> vector<8x8xf32>
    %162 = arith.truncf %161 : vector<8x8xf32> to vector<8x8xbf16>
    %c0_118 = arith.constant 0 : index
    %c3_119 = arith.constant 3 : index
    %c0_120 = arith.constant 0 : index
    %c0_121 = arith.constant 0 : index
    %163 = vector.load %arg7[%c0_118, %c3_119, %c0_120, %c0_121] : memref<2x4x8x32xbf16, #tpu.memory_space<vmem>>, vector<1x1x8x32xbf16>
    %164 = vector.shape_cast %163 : vector<1x1x8x32xbf16> to vector<8x32xbf16>
    %cst_122 = arith.constant dense<0.000000e+00> : vector<8x32xf32>
    %165 = tpu.matmul %162, %164, %cst_122 {dimension_numbers = #tpu.dot_dimension_numbers<[1], [0], [0], [1], [0, 0, 1, 1], [], []>} : vector<8x8xbf16>, vector<8x32xbf16>, vector<8x32xf32> -> vector<8x32xf32>
    %166 = arith.addf %136, %165 : vector<8x32xf32>
    %167 = arith.addf %1, %166 : vector<8x32xf32>
    %c0_123 = arith.constant 0 : index
    %c0_124 = arith.constant 0 : index
    %c0_125 = arith.constant 0 : index
    %168 = vector.load %arg12[%c0_123, %c0_124, %c0_125] : memref<2x1x32xf32, #tpu.memory_space<vmem>>, vector<1x1x32xf32>
    %169 = vector.shape_cast %168 : vector<1x1x32xf32> to vector<1x32xf32>
    %170 = arith.mulf %167, %167 : vector<8x32xf32>
    %cst_126 = arith.constant dense<0.000000e+00> : vector<8xf32>
    %171 = vector.multi_reduction <add>, %170, %cst_126 [1] : vector<8x32xf32> to vector<8xf32>
    %172 = vector.shape_cast %171 : vector<8xf32> to vector<8x1xf32>
    %cst_127 = arith.constant 3.200000e+01 : f32
    %173 = vector.broadcast %cst_127 : f32 to vector<8x1xf32>
    %174 = arith.divf %172, %173 : vector<8x1xf32>
    %cst_128 = arith.constant 9.99999974E-6 : f32
    %175 = vector.broadcast %cst_128 : f32 to vector<8x1xf32>
    %176 = arith.addf %174, %175 : vector<8x1xf32>
    %177 = math.rsqrt %176 : vector<8x1xf32>
    %178 = vector.broadcast %177 : vector<8x1xf32> to vector<8x32xf32>
    %179 = arith.mulf %167, %178 : vector<8x32xf32>
    %180 = vector.broadcast %169 : vector<1x32xf32> to vector<8x32xf32>
    %181 = arith.mulf %179, %180 : vector<8x32xf32>
    %182 = arith.truncf %181 : vector<8x32xf32> to vector<8x32xbf16>
    %c0_129 = arith.constant 0 : index
    %c0_130 = arith.constant 0 : index
    %c0_131 = arith.constant 0 : index
    %183 = vector.load %arg8[%c0_129, %c0_130, %c0_131] : memref<2x32x64xbf16, #tpu.memory_space<vmem>>, vector<1x32x64xbf16>
    %184 = vector.shape_cast %183 : vector<1x32x64xbf16> to vector<32x64xbf16>
    %cst_132 = arith.constant dense<0.000000e+00> : vector<8x64xf32>
    %185 = tpu.matmul %182, %184, %cst_132 {dimension_numbers = #tpu.dot_dimension_numbers<[1], [0], [0], [1], [0, 0, 1, 1], [], []>} : vector<8x32xbf16>, vector<32x64xbf16>, vector<8x64xf32> -> vector<8x64xf32>
    %186 = arith.negf %185 : vector<8x64xf32>
    %187 = math.exp %186 : vector<8x64xf32>
    %cst_133 = arith.constant 1.000000e+00 : f32
    %188 = vector.broadcast %cst_133 : f32 to vector<8x64xf32>
    %189 = arith.addf %188, %187 : vector<8x64xf32>
    %190 = arith.divf %188, %189 : vector<8x64xf32>
    %191 = arith.mulf %185, %190 : vector<8x64xf32>
    %c0_134 = arith.constant 0 : index
    %c0_135 = arith.constant 0 : index
    %c0_136 = arith.constant 0 : index
    %192 = vector.load %arg9[%c0_134, %c0_135, %c0_136] : memref<2x32x64xbf16, #tpu.memory_space<vmem>>, vector<1x32x64xbf16>
    %193 = vector.shape_cast %192 : vector<1x32x64xbf16> to vector<32x64xbf16>
    %cst_137 = arith.constant dense<0.000000e+00> : vector<8x64xf32>
    %194 = tpu.matmul %182, %193, %cst_137 {dimension_numbers = #tpu.dot_dimension_numbers<[1], [0], [0], [1], [0, 0, 1, 1], [], []>} : vector<8x32xbf16>, vector<32x64xbf16>, vector<8x64xf32> -> vector<8x64xf32>
    %195 = arith.mulf %191, %194 : vector<8x64xf32>
    %196 = arith.truncf %195 : vector<8x64xf32> to vector<8x64xbf16>
    %c0_138 = arith.constant 0 : index
    %c0_139 = arith.constant 0 : index
    %c0_140 = arith.constant 0 : index
    %197 = vector.load %arg10[%c0_138, %c0_139, %c0_140] : memref<2x64x32xbf16, #tpu.memory_space<vmem>>, vector<1x64x32xbf16>
    %198 = vector.shape_cast %197 : vector<1x64x32xbf16> to vector<64x32xbf16>
    %cst_141 = arith.constant dense<0.000000e+00> : vector<8x32xf32>
    %199 = tpu.matmul %196, %198, %cst_141 {dimension_numbers = #tpu.dot_dimension_numbers<[1], [0], [0], [1], [0, 0, 1, 1], [], []>} : vector<8x64xbf16>, vector<64x32xbf16>, vector<8x32xf32> -> vector<8x32xf32>
    %c1_142 = arith.constant 1 : index
    %c0_143 = arith.constant 0 : index
    %c0_144 = arith.constant 0 : index
    %200 = vector.load %arg11[%c1_142, %c0_143, %c0_144] : memref<2x1x32xf32, #tpu.memory_space<vmem>>, vector<1x1x32xf32>
    %201 = vector.shape_cast %200 : vector<1x1x32xf32> to vector<1x32xf32>
    %202 = arith.mulf %199, %199 : vector<8x32xf32>
    %cst_145 = arith.constant dense<0.000000e+00> : vector<8xf32>
    %203 = vector.multi_reduction <add>, %202, %cst_145 [1] : vector<8x32xf32> to vector<8xf32>
    %204 = vector.shape_cast %203 : vector<8xf32> to vector<8x1xf32>
    %cst_146 = arith.constant 3.200000e+01 : f32
    %205 = vector.broadcast %cst_146 : f32 to vector<8x1xf32>
    %206 = arith.divf %204, %205 : vector<8x1xf32>
    %cst_147 = arith.constant 9.99999974E-6 : f32
    %207 = vector.broadcast %cst_147 : f32 to vector<8x1xf32>
    %208 = arith.addf %206, %207 : vector<8x1xf32>
    %209 = math.rsqrt %208 : vector<8x1xf32>
    %210 = vector.broadcast %209 : vector<8x1xf32> to vector<8x32xf32>
    %211 = arith.mulf %199, %210 : vector<8x32xf32>
    %212 = vector.broadcast %201 : vector<1x32xf32> to vector<8x32xf32>
    %213 = arith.mulf %211, %212 : vector<8x32xf32>
    %214 = arith.truncf %213 : vector<8x32xf32> to vector<8x32xbf16>
    %c1_148 = arith.constant 1 : index
    %c0_149 = arith.constant 0 : index
    %c0_150 = arith.constant 0 : index
    %c0_151 = arith.constant 0 : index
    %215 = vector.load %arg4[%c1_148, %c0_149, %c0_150, %c0_151] : memref<2x2x32x8xbf16, #tpu.memory_space<vmem>>, vector<1x1x32x8xbf16>
    %216 = vector.shape_cast %215 : vector<1x1x32x8xbf16> to vector<32x8xbf16>
    %cst_152 = arith.constant dense<0.000000e+00> : vector<8x8xf32>
    %217 = tpu.matmul %214, %216, %cst_152 {dimension_numbers = #tpu.dot_dimension_numbers<[1], [0], [0], [1], [0, 0, 1, 1], [], []>} : vector<8x32xbf16>, vector<32x8xbf16>, vector<8x8xf32> -> vector<8x8xf32>
    %c1_153 = arith.constant 1 : index
    %c0_154 = arith.constant 0 : index
    %c0_155 = arith.constant 0 : index
    %c0_156 = arith.constant 0 : index
    %218 = vector.load %arg5[%c1_153, %c0_154, %c0_155, %c0_156] : memref<2x2x32x8xbf16, #tpu.memory_space<vmem>>, vector<1x1x32x8xbf16>
    %219 = vector.shape_cast %218 : vector<1x1x32x8xbf16> to vector<32x8xbf16>
    %cst_157 = arith.constant dense<0.000000e+00> : vector<8x8xf32>
    %220 = tpu.matmul %214, %219, %cst_157 {dimension_numbers = #tpu.dot_dimension_numbers<[1], [0], [0], [1], [0, 0, 1, 1], [], []>} : vector<8x32xbf16>, vector<32x8xbf16>, vector<8x8xf32> -> vector<8x8xf32>
    %221 = arith.mulf %217, %2 : vector<8x8xf32>
    %222 = arith.mulf %220, %3 : vector<8x8xf32>
    %223 = arith.addf %221, %222 : vector<8x8xf32>
    %c1_158 = arith.constant 1 : index
    %c0_159 = arith.constant 0 : index
    %c0_160 = arith.constant 0 : index
    %c0_161 = arith.constant 0 : index
    %224 = vector.load %arg6[%c1_158, %c0_159, %c0_160, %c0_161] : memref<2x2x32x8xbf16, #tpu.memory_space<vmem>>, vector<1x1x32x8xbf16>
    %225 = vector.shape_cast %224 : vector<1x1x32x8xbf16> to vector<32x8xbf16>
    %cst_162 = arith.constant dense<0.000000e+00> : vector<8x8xf32>
    %226 = tpu.matmul %214, %225, %cst_162 {dimension_numbers = #tpu.dot_dimension_numbers<[1], [0], [0], [1], [0, 0, 1, 1], [], []>} : vector<8x32xbf16>, vector<32x8xbf16>, vector<8x8xf32> -> vector<8x8xf32>
    %c1_163 = arith.constant 1 : index
    %c1_164 = arith.constant 1 : index
    %c0_165 = arith.constant 0 : index
    %c0_166 = arith.constant 0 : index
    %227 = vector.load %arg4[%c1_163, %c1_164, %c0_165, %c0_166] : memref<2x2x32x8xbf16, #tpu.memory_space<vmem>>, vector<1x1x32x8xbf16>
    %228 = vector.shape_cast %227 : vector<1x1x32x8xbf16> to vector<32x8xbf16>
    %cst_167 = arith.constant dense<0.000000e+00> : vector<8x8xf32>
    %229 = tpu.matmul %214, %228, %cst_167 {dimension_numbers = #tpu.dot_dimension_numbers<[1], [0], [0], [1], [0, 0, 1, 1], [], []>} : vector<8x32xbf16>, vector<32x8xbf16>, vector<8x8xf32> -> vector<8x8xf32>
    %c1_168 = arith.constant 1 : index
    %c1_169 = arith.constant 1 : index
    %c0_170 = arith.constant 0 : index
    %c0_171 = arith.constant 0 : index
    %230 = vector.load %arg5[%c1_168, %c1_169, %c0_170, %c0_171] : memref<2x2x32x8xbf16, #tpu.memory_space<vmem>>, vector<1x1x32x8xbf16>
    %231 = vector.shape_cast %230 : vector<1x1x32x8xbf16> to vector<32x8xbf16>
    %cst_172 = arith.constant dense<0.000000e+00> : vector<8x8xf32>
    %232 = tpu.matmul %214, %231, %cst_172 {dimension_numbers = #tpu.dot_dimension_numbers<[1], [0], [0], [1], [0, 0, 1, 1], [], []>} : vector<8x32xbf16>, vector<32x8xbf16>, vector<8x8xf32> -> vector<8x8xf32>
    %233 = arith.mulf %229, %2 : vector<8x8xf32>
    %234 = arith.mulf %232, %3 : vector<8x8xf32>
    %235 = arith.addf %233, %234 : vector<8x8xf32>
    %c1_173 = arith.constant 1 : index
    %c1_174 = arith.constant 1 : index
    %c0_175 = arith.constant 0 : index
    %c0_176 = arith.constant 0 : index
    %236 = vector.load %arg6[%c1_173, %c1_174, %c0_175, %c0_176] : memref<2x2x32x8xbf16, #tpu.memory_space<vmem>>, vector<1x1x32x8xbf16>
    %237 = vector.shape_cast %236 : vector<1x1x32x8xbf16> to vector<32x8xbf16>
    %cst_177 = arith.constant dense<0.000000e+00> : vector<8x8xf32>
    %238 = tpu.matmul %214, %237, %cst_177 {dimension_numbers = #tpu.dot_dimension_numbers<[1], [0], [0], [1], [0, 0, 1, 1], [], []>} : vector<8x32xbf16>, vector<32x8xbf16>, vector<8x8xf32> -> vector<8x8xf32>
    %cst_178 = arith.constant 0.000000e+00 : f32
    %239 = vector.broadcast %cst_178 : f32 to vector<8x32xf32>
    %c1_179 = arith.constant 1 : index
    %c0_180 = arith.constant 0 : index
    %c0_181 = arith.constant 0 : index
    %c0_182 = arith.constant 0 : index
    %240 = vector.load %arg2[%c1_179, %c0_180, %c0_181, %c0_182] : memref<2x4x32x8xbf16, #tpu.memory_space<vmem>>, vector<1x1x32x8xbf16>
    %241 = vector.shape_cast %240 : vector<1x1x32x8xbf16> to vector<32x8xbf16>
    %cst_183 = arith.constant dense<0.000000e+00> : vector<8x8xf32>
    %242 = tpu.matmul %214, %241, %cst_183 {dimension_numbers = #tpu.dot_dimension_numbers<[1], [0], [0], [1], [0, 0, 1, 1], [], []>} : vector<8x32xbf16>, vector<32x8xbf16>, vector<8x8xf32> -> vector<8x8xf32>
    %c1_184 = arith.constant 1 : index
    %c0_185 = arith.constant 0 : index
    %c0_186 = arith.constant 0 : index
    %c0_187 = arith.constant 0 : index
    %243 = vector.load %arg3[%c1_184, %c0_185, %c0_186, %c0_187] : memref<2x4x32x8xbf16, #tpu.memory_space<vmem>>, vector<1x1x32x8xbf16>
    %244 = vector.shape_cast %243 : vector<1x1x32x8xbf16> to vector<32x8xbf16>
    %cst_188 = arith.constant dense<0.000000e+00> : vector<8x8xf32>
    %245 = tpu.matmul %214, %244, %cst_188 {dimension_numbers = #tpu.dot_dimension_numbers<[1], [0], [0], [1], [0, 0, 1, 1], [], []>} : vector<8x32xbf16>, vector<32x8xbf16>, vector<8x8xf32> -> vector<8x8xf32>
    %246 = arith.mulf %242, %2 : vector<8x8xf32>
    %247 = arith.mulf %245, %3 : vector<8x8xf32>
    %248 = arith.addf %246, %247 : vector<8x8xf32>
    %cst_189 = arith.constant dense<0.000000e+00> : vector<8x8xf32>
    %249 = tpu.matmul %248, %223, %cst_189 {dimension_numbers = #tpu.dot_dimension_numbers<[1], [1], [0], [0], [0, 0, 1, 0], [], []>} : vector<8x8xf32>, vector<8x8xf32>, vector<8x8xf32> -> vector<8x8xf32>
    %cst_190 = arith.constant 0.353553385 : f32
    %250 = vector.broadcast %cst_190 : f32 to vector<8x8xf32>
    %251 = arith.mulf %249, %250 : vector<8x8xf32>
    %cst_191 = arith.constant -1.000000e+30 : f32
    %252 = vector.broadcast %cst_191 : f32 to vector<8x8xf32>
    %253 = arith.select %6, %251, %252 : vector<8x8xi1>, vector<8x8xf32>
    %cst_192 = arith.constant dense<0xFF800000> : vector<8xf32>
    %254 = vector.multi_reduction <maximumf>, %253, %cst_192 [1] : vector<8x8xf32> to vector<8xf32>
    %255 = vector.shape_cast %254 : vector<8xf32> to vector<8x1xf32>
    %256 = vector.broadcast %255 : vector<8x1xf32> to vector<8x8xf32>
    %257 = arith.subf %253, %256 : vector<8x8xf32>
    %258 = math.exp %257 : vector<8x8xf32>
    %cst_193 = arith.constant dense<0.000000e+00> : vector<8xf32>
    %259 = vector.multi_reduction <add>, %258, %cst_193 [1] : vector<8x8xf32> to vector<8xf32>
    %260 = vector.shape_cast %259 : vector<8xf32> to vector<8x1xf32>
    %261 = tpu.reciprocal %260 {approx = true} : vector<8x1xf32> -> vector<8x1xf32>
    %262 = vector.broadcast %261 : vector<8x1xf32> to vector<8x8xf32>
    %263 = arith.mulf %258, %262 : vector<8x8xf32>
    %cst_194 = arith.constant dense<0.000000e+00> : vector<8x8xf32>
    %264 = tpu.matmul %263, %226, %cst_194 {dimension_numbers = #tpu.dot_dimension_numbers<[1], [0], [0], [1], [0, 0, 1, 1], [], []>} : vector<8x8xf32>, vector<8x8xf32>, vector<8x8xf32> -> vector<8x8xf32>
    %265 = arith.truncf %264 : vector<8x8xf32> to vector<8x8xbf16>
    %c1_195 = arith.constant 1 : index
    %c0_196 = arith.constant 0 : index
    %c0_197 = arith.constant 0 : index
    %c0_198 = arith.constant 0 : index
    %266 = vector.load %arg7[%c1_195, %c0_196, %c0_197, %c0_198] : memref<2x4x8x32xbf16, #tpu.memory_space<vmem>>, vector<1x1x8x32xbf16>
    %267 = vector.shape_cast %266 : vector<1x1x8x32xbf16> to vector<8x32xbf16>
    %cst_199 = arith.constant dense<0.000000e+00> : vector<8x32xf32>
    %268 = tpu.matmul %265, %267, %cst_199 {dimension_numbers = #tpu.dot_dimension_numbers<[1], [0], [0], [1], [0, 0, 1, 1], [], []>} : vector<8x8xbf16>, vector<8x32xbf16>, vector<8x32xf32> -> vector<8x32xf32>
    %269 = arith.addf %239, %268 : vector<8x32xf32>
    %c1_200 = arith.constant 1 : index
    %c1_201 = arith.constant 1 : index
    %c0_202 = arith.constant 0 : index
    %c0_203 = arith.constant 0 : index
    %270 = vector.load %arg2[%c1_200, %c1_201, %c0_202, %c0_203] : memref<2x4x32x8xbf16, #tpu.memory_space<vmem>>, vector<1x1x32x8xbf16>
    %271 = vector.shape_cast %270 : vector<1x1x32x8xbf16> to vector<32x8xbf16>
    %cst_204 = arith.constant dense<0.000000e+00> : vector<8x8xf32>
    %272 = tpu.matmul %214, %271, %cst_204 {dimension_numbers = #tpu.dot_dimension_numbers<[1], [0], [0], [1], [0, 0, 1, 1], [], []>} : vector<8x32xbf16>, vector<32x8xbf16>, vector<8x8xf32> -> vector<8x8xf32>
    %c1_205 = arith.constant 1 : index
    %c1_206 = arith.constant 1 : index
    %c0_207 = arith.constant 0 : index
    %c0_208 = arith.constant 0 : index
    %273 = vector.load %arg3[%c1_205, %c1_206, %c0_207, %c0_208] : memref<2x4x32x8xbf16, #tpu.memory_space<vmem>>, vector<1x1x32x8xbf16>
    %274 = vector.shape_cast %273 : vector<1x1x32x8xbf16> to vector<32x8xbf16>
    %cst_209 = arith.constant dense<0.000000e+00> : vector<8x8xf32>
    %275 = tpu.matmul %214, %274, %cst_209 {dimension_numbers = #tpu.dot_dimension_numbers<[1], [0], [0], [1], [0, 0, 1, 1], [], []>} : vector<8x32xbf16>, vector<32x8xbf16>, vector<8x8xf32> -> vector<8x8xf32>
    %276 = arith.mulf %272, %2 : vector<8x8xf32>
    %277 = arith.mulf %275, %3 : vector<8x8xf32>
    %278 = arith.addf %276, %277 : vector<8x8xf32>
    %cst_210 = arith.constant dense<0.000000e+00> : vector<8x8xf32>
    %279 = tpu.matmul %278, %223, %cst_210 {dimension_numbers = #tpu.dot_dimension_numbers<[1], [1], [0], [0], [0, 0, 1, 0], [], []>} : vector<8x8xf32>, vector<8x8xf32>, vector<8x8xf32> -> vector<8x8xf32>
    %cst_211 = arith.constant 0.353553385 : f32
    %280 = vector.broadcast %cst_211 : f32 to vector<8x8xf32>
    %281 = arith.mulf %279, %280 : vector<8x8xf32>
    %cst_212 = arith.constant -1.000000e+30 : f32
    %282 = vector.broadcast %cst_212 : f32 to vector<8x8xf32>
    %283 = arith.select %6, %281, %282 : vector<8x8xi1>, vector<8x8xf32>
    %cst_213 = arith.constant dense<0xFF800000> : vector<8xf32>
    %284 = vector.multi_reduction <maximumf>, %283, %cst_213 [1] : vector<8x8xf32> to vector<8xf32>
    %285 = vector.shape_cast %284 : vector<8xf32> to vector<8x1xf32>
    %286 = vector.broadcast %285 : vector<8x1xf32> to vector<8x8xf32>
    %287 = arith.subf %283, %286 : vector<8x8xf32>
    %288 = math.exp %287 : vector<8x8xf32>
    %cst_214 = arith.constant dense<0.000000e+00> : vector<8xf32>
    %289 = vector.multi_reduction <add>, %288, %cst_214 [1] : vector<8x8xf32> to vector<8xf32>
    %290 = vector.shape_cast %289 : vector<8xf32> to vector<8x1xf32>
    %291 = tpu.reciprocal %290 {approx = true} : vector<8x1xf32> -> vector<8x1xf32>
    %292 = vector.broadcast %291 : vector<8x1xf32> to vector<8x8xf32>
    %293 = arith.mulf %288, %292 : vector<8x8xf32>
    %cst_215 = arith.constant dense<0.000000e+00> : vector<8x8xf32>
    %294 = tpu.matmul %293, %226, %cst_215 {dimension_numbers = #tpu.dot_dimension_numbers<[1], [0], [0], [1], [0, 0, 1, 1], [], []>} : vector<8x8xf32>, vector<8x8xf32>, vector<8x8xf32> -> vector<8x8xf32>
    %295 = arith.truncf %294 : vector<8x8xf32> to vector<8x8xbf16>
    %c1_216 = arith.constant 1 : index
    %c1_217 = arith.constant 1 : index
    %c0_218 = arith.constant 0 : index
    %c0_219 = arith.constant 0 : index
    %296 = vector.load %arg7[%c1_216, %c1_217, %c0_218, %c0_219] : memref<2x4x8x32xbf16, #tpu.memory_space<vmem>>, vector<1x1x8x32xbf16>
    %297 = vector.shape_cast %296 : vector<1x1x8x32xbf16> to vector<8x32xbf16>
    %cst_220 = arith.constant dense<0.000000e+00> : vector<8x32xf32>
    %298 = tpu.matmul %295, %297, %cst_220 {dimension_numbers = #tpu.dot_dimension_numbers<[1], [0], [0], [1], [0, 0, 1, 1], [], []>} : vector<8x8xbf16>, vector<8x32xbf16>, vector<8x32xf32> -> vector<8x32xf32>
    %299 = arith.addf %269, %298 : vector<8x32xf32>
    %c1_221 = arith.constant 1 : index
    %c2_222 = arith.constant 2 : index
    %c0_223 = arith.constant 0 : index
    %c0_224 = arith.constant 0 : index
    %300 = vector.load %arg2[%c1_221, %c2_222, %c0_223, %c0_224] : memref<2x4x32x8xbf16, #tpu.memory_space<vmem>>, vector<1x1x32x8xbf16>
    %301 = vector.shape_cast %300 : vector<1x1x32x8xbf16> to vector<32x8xbf16>
    %cst_225 = arith.constant dense<0.000000e+00> : vector<8x8xf32>
    %302 = tpu.matmul %214, %301, %cst_225 {dimension_numbers = #tpu.dot_dimension_numbers<[1], [0], [0], [1], [0, 0, 1, 1], [], []>} : vector<8x32xbf16>, vector<32x8xbf16>, vector<8x8xf32> -> vector<8x8xf32>
    %c1_226 = arith.constant 1 : index
    %c2_227 = arith.constant 2 : index
    %c0_228 = arith.constant 0 : index
    %c0_229 = arith.constant 0 : index
    %303 = vector.load %arg3[%c1_226, %c2_227, %c0_228, %c0_229] : memref<2x4x32x8xbf16, #tpu.memory_space<vmem>>, vector<1x1x32x8xbf16>
    %304 = vector.shape_cast %303 : vector<1x1x32x8xbf16> to vector<32x8xbf16>
    %cst_230 = arith.constant dense<0.000000e+00> : vector<8x8xf32>
    %305 = tpu.matmul %214, %304, %cst_230 {dimension_numbers = #tpu.dot_dimension_numbers<[1], [0], [0], [1], [0, 0, 1, 1], [], []>} : vector<8x32xbf16>, vector<32x8xbf16>, vector<8x8xf32> -> vector<8x8xf32>
    %306 = arith.mulf %302, %2 : vector<8x8xf32>
    %307 = arith.mulf %305, %3 : vector<8x8xf32>
    %308 = arith.addf %306, %307 : vector<8x8xf32>
    %cst_231 = arith.constant dense<0.000000e+00> : vector<8x8xf32>
    %309 = tpu.matmul %308, %235, %cst_231 {dimension_numbers = #tpu.dot_dimension_numbers<[1], [1], [0], [0], [0, 0, 1, 0], [], []>} : vector<8x8xf32>, vector<8x8xf32>, vector<8x8xf32> -> vector<8x8xf32>
    %cst_232 = arith.constant 0.353553385 : f32
    %310 = vector.broadcast %cst_232 : f32 to vector<8x8xf32>
    %311 = arith.mulf %309, %310 : vector<8x8xf32>
    %cst_233 = arith.constant -1.000000e+30 : f32
    %312 = vector.broadcast %cst_233 : f32 to vector<8x8xf32>
    %313 = arith.select %6, %311, %312 : vector<8x8xi1>, vector<8x8xf32>
    %cst_234 = arith.constant dense<0xFF800000> : vector<8xf32>
    %314 = vector.multi_reduction <maximumf>, %313, %cst_234 [1] : vector<8x8xf32> to vector<8xf32>
    %315 = vector.shape_cast %314 : vector<8xf32> to vector<8x1xf32>
    %316 = vector.broadcast %315 : vector<8x1xf32> to vector<8x8xf32>
    %317 = arith.subf %313, %316 : vector<8x8xf32>
    %318 = math.exp %317 : vector<8x8xf32>
    %cst_235 = arith.constant dense<0.000000e+00> : vector<8xf32>
    %319 = vector.multi_reduction <add>, %318, %cst_235 [1] : vector<8x8xf32> to vector<8xf32>
    %320 = vector.shape_cast %319 : vector<8xf32> to vector<8x1xf32>
    %321 = tpu.reciprocal %320 {approx = true} : vector<8x1xf32> -> vector<8x1xf32>
    %322 = vector.broadcast %321 : vector<8x1xf32> to vector<8x8xf32>
    %323 = arith.mulf %318, %322 : vector<8x8xf32>
    %cst_236 = arith.constant dense<0.000000e+00> : vector<8x8xf32>
    %324 = tpu.matmul %323, %238, %cst_236 {dimension_numbers = #tpu.dot_dimension_numbers<[1], [0], [0], [1], [0, 0, 1, 1], [], []>} : vector<8x8xf32>, vector<8x8xf32>, vector<8x8xf32> -> vector<8x8xf32>
    %325 = arith.truncf %324 : vector<8x8xf32> to vector<8x8xbf16>
    %c1_237 = arith.constant 1 : index
    %c2_238 = arith.constant 2 : index
    %c0_239 = arith.constant 0 : index
    %c0_240 = arith.constant 0 : index
    %326 = vector.load %arg7[%c1_237, %c2_238, %c0_239, %c0_240] : memref<2x4x8x32xbf16, #tpu.memory_space<vmem>>, vector<1x1x8x32xbf16>
    %327 = vector.shape_cast %326 : vector<1x1x8x32xbf16> to vector<8x32xbf16>
    %cst_241 = arith.constant dense<0.000000e+00> : vector<8x32xf32>
    %328 = tpu.matmul %325, %327, %cst_241 {dimension_numbers = #tpu.dot_dimension_numbers<[1], [0], [0], [1], [0, 0, 1, 1], [], []>} : vector<8x8xbf16>, vector<8x32xbf16>, vector<8x32xf32> -> vector<8x32xf32>
    %329 = arith.addf %299, %328 : vector<8x32xf32>
    %c1_242 = arith.constant 1 : index
    %c3_243 = arith.constant 3 : index
    %c0_244 = arith.constant 0 : index
    %c0_245 = arith.constant 0 : index
    %330 = vector.load %arg2[%c1_242, %c3_243, %c0_244, %c0_245] : memref<2x4x32x8xbf16, #tpu.memory_space<vmem>>, vector<1x1x32x8xbf16>
    %331 = vector.shape_cast %330 : vector<1x1x32x8xbf16> to vector<32x8xbf16>
    %cst_246 = arith.constant dense<0.000000e+00> : vector<8x8xf32>
    %332 = tpu.matmul %214, %331, %cst_246 {dimension_numbers = #tpu.dot_dimension_numbers<[1], [0], [0], [1], [0, 0, 1, 1], [], []>} : vector<8x32xbf16>, vector<32x8xbf16>, vector<8x8xf32> -> vector<8x8xf32>
    %c1_247 = arith.constant 1 : index
    %c3_248 = arith.constant 3 : index
    %c0_249 = arith.constant 0 : index
    %c0_250 = arith.constant 0 : index
    %333 = vector.load %arg3[%c1_247, %c3_248, %c0_249, %c0_250] : memref<2x4x32x8xbf16, #tpu.memory_space<vmem>>, vector<1x1x32x8xbf16>
    %334 = vector.shape_cast %333 : vector<1x1x32x8xbf16> to vector<32x8xbf16>
    %cst_251 = arith.constant dense<0.000000e+00> : vector<8x8xf32>
    %335 = tpu.matmul %214, %334, %cst_251 {dimension_numbers = #tpu.dot_dimension_numbers<[1], [0], [0], [1], [0, 0, 1, 1], [], []>} : vector<8x32xbf16>, vector<32x8xbf16>, vector<8x8xf32> -> vector<8x8xf32>
    %336 = arith.mulf %332, %2 : vector<8x8xf32>
    %337 = arith.mulf %335, %3 : vector<8x8xf32>
    %338 = arith.addf %336, %337 : vector<8x8xf32>
    %cst_252 = arith.constant dense<0.000000e+00> : vector<8x8xf32>
    %339 = tpu.matmul %338, %235, %cst_252 {dimension_numbers = #tpu.dot_dimension_numbers<[1], [1], [0], [0], [0, 0, 1, 0], [], []>} : vector<8x8xf32>, vector<8x8xf32>, vector<8x8xf32> -> vector<8x8xf32>
    %cst_253 = arith.constant 0.353553385 : f32
    %340 = vector.broadcast %cst_253 : f32 to vector<8x8xf32>
    %341 = arith.mulf %339, %340 : vector<8x8xf32>
    %cst_254 = arith.constant -1.000000e+30 : f32
    %342 = vector.broadcast %cst_254 : f32 to vector<8x8xf32>
    %343 = arith.select %6, %341, %342 : vector<8x8xi1>, vector<8x8xf32>
    %cst_255 = arith.constant dense<0xFF800000> : vector<8xf32>
    %344 = vector.multi_reduction <maximumf>, %343, %cst_255 [1] : vector<8x8xf32> to vector<8xf32>
    %345 = vector.shape_cast %344 : vector<8xf32> to vector<8x1xf32>
    %346 = vector.broadcast %345 : vector<8x1xf32> to vector<8x8xf32>
    %347 = arith.subf %343, %346 : vector<8x8xf32>
    %348 = math.exp %347 : vector<8x8xf32>
    %cst_256 = arith.constant dense<0.000000e+00> : vector<8xf32>
    %349 = vector.multi_reduction <add>, %348, %cst_256 [1] : vector<8x8xf32> to vector<8xf32>
    %350 = vector.shape_cast %349 : vector<8xf32> to vector<8x1xf32>
    %351 = tpu.reciprocal %350 {approx = true} : vector<8x1xf32> -> vector<8x1xf32>
    %352 = vector.broadcast %351 : vector<8x1xf32> to vector<8x8xf32>
    %353 = arith.mulf %348, %352 : vector<8x8xf32>
    %cst_257 = arith.constant dense<0.000000e+00> : vector<8x8xf32>
    %354 = tpu.matmul %353, %238, %cst_257 {dimension_numbers = #tpu.dot_dimension_numbers<[1], [0], [0], [1], [0, 0, 1, 1], [], []>} : vector<8x8xf32>, vector<8x8xf32>, vector<8x8xf32> -> vector<8x8xf32>
    %355 = arith.truncf %354 : vector<8x8xf32> to vector<8x8xbf16>
    %c1_258 = arith.constant 1 : index
    %c3_259 = arith.constant 3 : index
    %c0_260 = arith.constant 0 : index
    %c0_261 = arith.constant 0 : index
    %356 = vector.load %arg7[%c1_258, %c3_259, %c0_260, %c0_261] : memref<2x4x8x32xbf16, #tpu.memory_space<vmem>>, vector<1x1x8x32xbf16>
    %357 = vector.shape_cast %356 : vector<1x1x8x32xbf16> to vector<8x32xbf16>
    %cst_262 = arith.constant dense<0.000000e+00> : vector<8x32xf32>
    %358 = tpu.matmul %355, %357, %cst_262 {dimension_numbers = #tpu.dot_dimension_numbers<[1], [0], [0], [1], [0, 0, 1, 1], [], []>} : vector<8x8xbf16>, vector<8x32xbf16>, vector<8x32xf32> -> vector<8x32xf32>
    %359 = arith.addf %329, %358 : vector<8x32xf32>
    %360 = arith.addf %199, %359 : vector<8x32xf32>
    %c1_263 = arith.constant 1 : index
    %c0_264 = arith.constant 0 : index
    %c0_265 = arith.constant 0 : index
    %361 = vector.load %arg12[%c1_263, %c0_264, %c0_265] : memref<2x1x32xf32, #tpu.memory_space<vmem>>, vector<1x1x32xf32>
    %362 = vector.shape_cast %361 : vector<1x1x32xf32> to vector<1x32xf32>
    %363 = arith.mulf %360, %360 : vector<8x32xf32>
    %cst_266 = arith.constant dense<0.000000e+00> : vector<8xf32>
    %364 = vector.multi_reduction <add>, %363, %cst_266 [1] : vector<8x32xf32> to vector<8xf32>
    %365 = vector.shape_cast %364 : vector<8xf32> to vector<8x1xf32>
    %cst_267 = arith.constant 3.200000e+01 : f32
    %366 = vector.broadcast %cst_267 : f32 to vector<8x1xf32>
    %367 = arith.divf %365, %366 : vector<8x1xf32>
    %cst_268 = arith.constant 9.99999974E-6 : f32
    %368 = vector.broadcast %cst_268 : f32 to vector<8x1xf32>
    %369 = arith.addf %367, %368 : vector<8x1xf32>
    %370 = math.rsqrt %369 : vector<8x1xf32>
    %371 = vector.broadcast %370 : vector<8x1xf32> to vector<8x32xf32>
    %372 = arith.mulf %360, %371 : vector<8x32xf32>
    %373 = vector.broadcast %362 : vector<1x32xf32> to vector<8x32xf32>
    %374 = arith.mulf %372, %373 : vector<8x32xf32>
    %375 = arith.truncf %374 : vector<8x32xf32> to vector<8x32xbf16>
    %c1_269 = arith.constant 1 : index
    %c0_270 = arith.constant 0 : index
    %c0_271 = arith.constant 0 : index
    %376 = vector.load %arg8[%c1_269, %c0_270, %c0_271] : memref<2x32x64xbf16, #tpu.memory_space<vmem>>, vector<1x32x64xbf16>
    %377 = vector.shape_cast %376 : vector<1x32x64xbf16> to vector<32x64xbf16>
    %cst_272 = arith.constant dense<0.000000e+00> : vector<8x64xf32>
    %378 = tpu.matmul %375, %377, %cst_272 {dimension_numbers = #tpu.dot_dimension_numbers<[1], [0], [0], [1], [0, 0, 1, 1], [], []>} : vector<8x32xbf16>, vector<32x64xbf16>, vector<8x64xf32> -> vector<8x64xf32>
    %379 = arith.negf %378 : vector<8x64xf32>
    %380 = math.exp %379 : vector<8x64xf32>
    %cst_273 = arith.constant 1.000000e+00 : f32
    %381 = vector.broadcast %cst_273 : f32 to vector<8x64xf32>
    %382 = arith.addf %381, %380 : vector<8x64xf32>
    %383 = arith.divf %381, %382 : vector<8x64xf32>
    %384 = arith.mulf %378, %383 : vector<8x64xf32>
    %c1_274 = arith.constant 1 : index
    %c0_275 = arith.constant 0 : index
    %c0_276 = arith.constant 0 : index
    %385 = vector.load %arg9[%c1_274, %c0_275, %c0_276] : memref<2x32x64xbf16, #tpu.memory_space<vmem>>, vector<1x32x64xbf16>
    %386 = vector.shape_cast %385 : vector<1x32x64xbf16> to vector<32x64xbf16>
    %cst_277 = arith.constant dense<0.000000e+00> : vector<8x64xf32>
    %387 = tpu.matmul %375, %386, %cst_277 {dimension_numbers = #tpu.dot_dimension_numbers<[1], [0], [0], [1], [0, 0, 1, 1], [], []>} : vector<8x32xbf16>, vector<32x64xbf16>, vector<8x64xf32> -> vector<8x64xf32>
    %388 = arith.mulf %384, %387 : vector<8x64xf32>
    %389 = arith.truncf %388 : vector<8x64xf32> to vector<8x64xbf16>
    %c1_278 = arith.constant 1 : index
    %c0_279 = arith.constant 0 : index
    %c0_280 = arith.constant 0 : index
    %390 = vector.load %arg10[%c1_278, %c0_279, %c0_280] : memref<2x64x32xbf16, #tpu.memory_space<vmem>>, vector<1x64x32xbf16>
    %391 = vector.shape_cast %390 : vector<1x64x32xbf16> to vector<64x32xbf16>
    %cst_281 = arith.constant dense<0.000000e+00> : vector<8x32xf32>
    %392 = tpu.matmul %389, %391, %cst_281 {dimension_numbers = #tpu.dot_dimension_numbers<[1], [0], [0], [1], [0, 0, 1, 1], [], []>} : vector<8x64xbf16>, vector<64x32xbf16>, vector<8x32xf32> -> vector<8x32xf32>
    %c0_282 = arith.constant 0 : index
    %c0_283 = arith.constant 0 : index
    %393 = vector.load %arg15[%c0_282, %c0_283] : memref<1x32xf32, #tpu.memory_space<vmem>>, vector<1x32xf32>
    %394 = arith.mulf %392, %392 : vector<8x32xf32>
    %cst_284 = arith.constant dense<0.000000e+00> : vector<8xf32>
    %395 = vector.multi_reduction <add>, %394, %cst_284 [1] : vector<8x32xf32> to vector<8xf32>
    %396 = vector.shape_cast %395 : vector<8xf32> to vector<8x1xf32>
    %cst_285 = arith.constant 3.200000e+01 : f32
    %397 = vector.broadcast %cst_285 : f32 to vector<8x1xf32>
    %398 = arith.divf %396, %397 : vector<8x1xf32>
    %cst_286 = arith.constant 9.99999974E-6 : f32
    %399 = vector.broadcast %cst_286 : f32 to vector<8x1xf32>
    %400 = arith.addf %398, %399 : vector<8x1xf32>
    %401 = math.rsqrt %400 : vector<8x1xf32>
    %402 = vector.broadcast %401 : vector<8x1xf32> to vector<8x32xf32>
    %403 = arith.mulf %392, %402 : vector<8x32xf32>
    %404 = vector.broadcast %393 : vector<1x32xf32> to vector<8x32xf32>
    %405 = arith.mulf %403, %404 : vector<8x32xf32>
    %406 = arith.truncf %405 : vector<8x32xf32> to vector<8x32xbf16>
    %c0_287 = arith.constant 0 : index
    %c0_288 = arith.constant 0 : index
    %407 = vector.load %arg16[%c0_287, %c0_288] : memref<32x64xbf16, #tpu.memory_space<vmem>>, vector<32x64xbf16>
    %cst_289 = arith.constant dense<0.000000e+00> : vector<8x64xf32>
    %408 = tpu.matmul %406, %407, %cst_289 {dimension_numbers = #tpu.dot_dimension_numbers<[1], [0], [0], [1], [0, 0, 1, 1], [], []>} : vector<8x32xbf16>, vector<32x64xbf16>, vector<8x64xf32> -> vector<8x64xf32>
    %c0_290 = arith.constant 0 : index
    %c0_291 = arith.constant 0 : index
    %c0_292 = arith.constant 0 : index
    %409 = vector.load %arg17[%c0_290, %c0_291, %c0_292] : memref<1x8x64xf32, #tpu.memory_space<vmem>>, vector<1x8x64xf32>
    %410 = vector.shape_cast %409 : vector<1x8x64xf32> to vector<8x64xf32>
    %411 = vector.shape_cast %408 : vector<8x64xf32> to vector<1x8x64xf32>
    tpu.vector_store %arg17[%c0_290, %c0_291, %c0_292], %411 {strides = array<i32>} : memref<1x8x64xf32, #tpu.memory_space<vmem>>, vector<1x8x64xf32>,
    return
  }
  func.func @transform_0(%arg0: i32) -> (i32, i32, i32) {
    %c0_i32 = arith.constant 0 : i32
    %c0_i32_0 = arith.constant 0 : i32
    %c0_i32_1 = arith.constant 0 : i32
    return %arg0, %c0_i32, %c0_i32_0 : i32, i32, i32
  }
  func.func @transform_1(%arg0: i32) -> (i32, i32, i32, i32) {
    %c0_i32 = arith.constant 0 : i32
    %c0_i32_0 = arith.constant 0 : i32
    %c0_i32_1 = arith.constant 0 : i32
    %c0_i32_2 = arith.constant 0 : i32
    %c0_i32_3 = arith.constant 0 : i32
    return %c0_i32, %c0_i32_0, %c0_i32_1, %c0_i32_2 : i32, i32, i32, i32
  }
  func.func @transform_2(%arg0: i32) -> (i32, i32, i32, i32) {
    %c0_i32 = arith.constant 0 : i32
    %c0_i32_0 = arith.constant 0 : i32
    %c0_i32_1 = arith.constant 0 : i32
    %c0_i32_2 = arith.constant 0 : i32
    %c0_i32_3 = arith.constant 0 : i32
    return %c0_i32, %c0_i32_0, %c0_i32_1, %c0_i32_2 : i32, i32, i32, i32
  }
  func.func @transform_3(%arg0: i32) -> (i32, i32, i32, i32) {
    %c0_i32 = arith.constant 0 : i32
    %c0_i32_0 = arith.constant 0 : i32
    %c0_i32_1 = arith.constant 0 : i32
    %c0_i32_2 = arith.constant 0 : i32
    %c0_i32_3 = arith.constant 0 : i32
    return %c0_i32, %c0_i32_0, %c0_i32_1, %c0_i32_2 : i32, i32, i32, i32
  }
  func.func @transform_4(%arg0: i32) -> (i32, i32, i32, i32) {
    %c0_i32 = arith.constant 0 : i32
    %c0_i32_0 = arith.constant 0 : i32
    %c0_i32_1 = arith.constant 0 : i32
    %c0_i32_2 = arith.constant 0 : i32
    %c0_i32_3 = arith.constant 0 : i32
    return %c0_i32, %c0_i32_0, %c0_i32_1, %c0_i32_2 : i32, i32, i32, i32
  }
  func.func @transform_5(%arg0: i32) -> (i32, i32, i32, i32) {
    %c0_i32 = arith.constant 0 : i32
    %c0_i32_0 = arith.constant 0 : i32
    %c0_i32_1 = arith.constant 0 : i32
    %c0_i32_2 = arith.constant 0 : i32
    %c0_i32_3 = arith.constant 0 : i32
    return %c0_i32, %c0_i32_0, %c0_i32_1, %c0_i32_2 : i32, i32, i32, i32
  }
  func.func @transform_6(%arg0: i32) -> (i32, i32, i32, i32) {
    %c0_i32 = arith.constant 0 : i32
    %c0_i32_0 = arith.constant 0 : i32
    %c0_i32_1 = arith.constant 0 : i32
    %c0_i32_2 = arith.constant 0 : i32
    %c0_i32_3 = arith.constant 0 : i32
    return %c0_i32, %c0_i32_0, %c0_i32_1, %c0_i32_2 : i32, i32, i32, i32
  }
  func.func @transform_7(%arg0: i32) -> (i32, i32, i32) {
    %c0_i32 = arith.constant 0 : i32
    %c0_i32_0 = arith.constant 0 : i32
    %c0_i32_1 = arith.constant 0 : i32
    %c0_i32_2 = arith.constant 0 : i32
    return %c0_i32, %c0_i32_0, %c0_i32_1 : i32, i32, i32
  }
  func.func @transform_8(%arg0: i32) -> (i32, i32, i32) {
    %c0_i32 = arith.constant 0 : i32
    %c0_i32_0 = arith.constant 0 : i32
    %c0_i32_1 = arith.constant 0 : i32
    %c0_i32_2 = arith.constant 0 : i32
    return %c0_i32, %c0_i32_0, %c0_i32_1 : i32, i32, i32
  }
  func.func @transform_9(%arg0: i32) -> (i32, i32, i32) {
    %c0_i32 = arith.constant 0 : i32
    %c0_i32_0 = arith.constant 0 : i32
    %c0_i32_1 = arith.constant 0 : i32
    %c0_i32_2 = arith.constant 0 : i32
    return %c0_i32, %c0_i32_0, %c0_i32_1 : i32, i32, i32
  }
  func.func @transform_10(%arg0: i32) -> (i32, i32, i32) {
    %c0_i32 = arith.constant 0 : i32
    %c0_i32_0 = arith.constant 0 : i32
    %c0_i32_1 = arith.constant 0 : i32
    %c0_i32_2 = arith.constant 0 : i32
    return %c0_i32, %c0_i32_0, %c0_i32_1 : i32, i32, i32
  }
  func.func @transform_11(%arg0: i32) -> (i32, i32, i32) {
    %c0_i32 = arith.constant 0 : i32
    %c0_i32_0 = arith.constant 0 : i32
    %c0_i32_1 = arith.constant 0 : i32
    %c0_i32_2 = arith.constant 0 : i32
    return %c0_i32, %c0_i32_0, %c0_i32_1 : i32, i32, i32
  }
  func.func @transform_12(%arg0: i32) -> (i32, i32) {
    %c0_i32 = arith.constant 0 : i32
    %c0_i32_0 = arith.constant 0 : i32
    %c0_i32_1 = arith.constant 0 : i32
    return %c0_i32, %c0_i32_0 : i32, i32
  }
  func.func @transform_13(%arg0: i32) -> (i32, i32) {
    %c0_i32 = arith.constant 0 : i32
    %c0_i32_0 = arith.constant 0 : i32
    %c0_i32_1 = arith.constant 0 : i32
    return %c0_i32, %c0_i32_0 : i32, i32
  }
  func.func @transform_14(%arg0: i32) -> (i32, i32) {
    %c0_i32 = arith.constant 0 : i32
    %c0_i32_0 = arith.constant 0 : i32
    %c0_i32_1 = arith.constant 0 : i32
    return %c0_i32, %c0_i32_0 : i32, i32
  }
  func.func @transform_15(%arg0: i32) -> (i32, i32) {
    %c0_i32 = arith.constant 0 : i32
    %c0_i32_0 = arith.constant 0 : i32
    %c0_i32_1 = arith.constant 0 : i32
    return %c0_i32, %c0_i32_0 : i32, i32
  }
  func.func @transform_16(%arg0: i32) -> (i32, i32, i32) {
    %c0_i32 = arith.constant 0 : i32
    %c0_i32_0 = arith.constant 0 : i32
    %c0_i32_1 = arith.constant 0 : i32
    return %arg0, %c0_i32, %c0_i32_0 : i32, i32, i32
  }
}

</mosaic_0001>

<llo_original>
// kernel: llama_forward.1
$region0: #{llama_forward.1}
  #allocation0 [shape = 'u32[]', space=smem, size = 0x4, offset = 0x4, fixed_abs, tag = 'smem constant byte address 0x4 - core index']
  #allocation1 [shape = 'u32[144,128]{1,0:T(1,128)}', space=vmem, size = 0x12000, scoped, tag = 'internal scratch']
  %s0 = inlined_call_operand.vmem [shape: f32[2,8,32], index: 0, kind: input, shape index: {}]
  %s1 = inlined_call_operand.vmem [shape: bf16[2,4,32,8], index: 1, kind: input, shape index: {}]
  %s2 = inlined_call_operand.vmem [shape: bf16[2,4,32,8], index: 2, kind: input, shape index: {}]
  %s3 = inlined_call_operand.vmem [shape: bf16[2,2,32,8], index: 3, kind: input, shape index: {}]
  %s4 = inlined_call_operand.vmem [shape: bf16[2,2,32,8], index: 4, kind: input, shape index: {}]
  %s5 = inlined_call_operand.vmem [shape: bf16[2,2,32,8], index: 5, kind: input, shape index: {}]
  %s6 = inlined_call_operand.vmem [shape: bf16[2,4,8,32], index: 6, kind: input, shape index: {}]
  %s7 = inlined_call_operand.vmem [shape: bf16[2,32,64], index: 7, kind: input, shape index: {}]
  %s8 = inlined_call_operand.vmem [shape: bf16[2,32,64], index: 8, kind: input, shape index: {}]
  %s9 = inlined_call_operand.vmem [shape: bf16[2,64,32], index: 9, kind: input, shape index: {}]
  %s10 = inlined_call_operand.vmem [shape: f32[2,1,32], index: 10, kind: input, shape index: {}]
  %s11 = inlined_call_operand.vmem [shape: f32[2,1,32], index: 11, kind: input, shape index: {}]
  %s12 = inlined_call_operand.vmem [shape: f32[8,8], index: 12, kind: input, shape index: {}]
  %s13 = inlined_call_operand.vmem [shape: f32[8,8], index: 13, kind: input, shape index: {}]
  %s14 = inlined_call_operand.vmem [shape: f32[1,32], index: 14, kind: input, shape index: {}]
  %s15 = inlined_call_operand.vmem [shape: bf16[32,64], index: 15, kind: input, shape index: {}]
  %s16 = inlined_call_operand.hbm [shape: f32[2,8,64], index: 16, kind: output, shape index: {}]
  %s17 = sld [smem:[#allocation0]]
  $region97: #{llama_forward.1} parent=0
    _
  %s19 = ssub.s32 1, %s17
  %s20 = scalar_select 0, %s19, %s17
  $region1: #{llama_forward.1} parent=0
    #allocation2 [shape = 'u8[8192]{0}', space=vmem, size = 0x2000, scoped, tag = 'output window, operand 0']
    #allocation3 [shape = 's32[2]{0}', space=sflag, size = 0x8, scoped, tag = 'scoped memory for llama_forward.1']
    %21 = vsyncpa [#allocation3], 0
    %s22 = scalar_lea.sflag [#allocation3], 1
    %23 = vsyncpa %s22, 0
    loop: start=0, step=1, limit=4
    $region2: #{llama_forward.1} parent=1 // loop_pre_header
      _
    $region3: #{llama_forward.1} parent=1 // loop_header
      %s25 = sphi 0, %s29
      %p26 = scmp.ge.s32.totalorder %s25, 4
      %s35 = sphi 0, %s37
      %s38 = sphi 0, %s35
      %s39 = sphi 0, %s38
      %s55 = sphi 0, %s39
      %s59 = sphi 0, %s59
      %s61 = sphi 0, %s59
      %s62 = sphi 0, %s61
      %s76 = sphi 0, %s62
      %s80 = sphi 0, %s80
      %s82 = sphi 0, %s80
      %s83 = sphi 0, %s82
      %s97 = sphi 0, %s83
      %s101 = sphi 0, %s101
      %s103 = sphi 0, %s101
      %s104 = sphi 0, %s103
      %s118 = sphi 0, %s104
      %s122 = sphi 0, %s122
      %s124 = sphi 0, %s122
      %s125 = sphi 0, %s124
      %s139 = sphi 0, %s125
      %s143 = sphi 0, %s143
      %s145 = sphi 0, %s143
      %s146 = sphi 0, %s145
      %s160 = sphi 0, %s146
      %s164 = sphi 0, %s164
      %s166 = sphi 0, %s164
      %s167 = sphi 0, %s166
      %s181 = sphi 0, %s167
      %s185 = sphi 0, %s185
      %s187 = sphi 0, %s185
      %s188 = sphi 0, %s187
      %s202 = sphi 0, %s188
      %s206 = sphi 0, %s206
      %s208 = sphi 0, %s206
      %s209 = sphi 0, %s208
      %s223 = sphi 0, %s209
      %s227 = sphi 0, %s227
      %s229 = sphi 0, %s227
      %s230 = sphi 0, %s229
      %s244 = sphi 0, %s230
      %s248 = sphi 0, %s248
      %s250 = sphi 0, %s248
      %s251 = sphi 0, %s250
      %s265 = sphi 0, %s251
      %s269 = sphi 0, %s269
      %s271 = sphi 0, %s269
      %s272 = sphi 0, %s271
      %s286 = sphi 0, %s272
      %s290 = sphi 0, %s290
      %s292 = sphi 0, %s290
      %s293 = sphi 0, %s292
      %s307 = sphi 0, %s293
      %s311 = sphi 0, %s311
      %s313 = sphi 0, %s311
      %s314 = sphi 0, %s313
      %s328 = sphi 0, %s314
      %s332 = sphi 0, %s332
      %s334 = sphi 0, %s332
      %s335 = sphi 0, %s334
      %s349 = sphi 0, %s335
      %s353 = sphi 0, %s353
      %s355 = sphi 0, %s353
      %s356 = sphi 0, %s355
      %s370 = sphi 0, %s356
      %s376 = sphi 0, %s378
      %s379 = sphi 0, %s376
      %s380 = sphi 0, %s379
      %s396 = sphi 0, %s380
    $region4: #{llama_forward.1} parent=1 // loop_header_branch
      %28 = sbr.rel (%p26) target = $region8
    $region5: #{llama_forward.1} parent=1 // loop_body
      %s30 = ssub.s32 %s25, 1
      %s31 = ssub.s32 %s25, 2
      %s32 = sadd.s32 %s25, 1
      %s33 = ssub.s32 %s25, %s32
      %p34 = scmp.eq.s32.totalorder %s33, 0
      %s36 = sadd.s32 %s35, 1
      %s37 = scalar_select %p34, %s35, %s36
      %p40 = pneg %p34
      %p41 = scmp.eq.s32.totalorder %s25, 1
      %p42 = por %p40, %p41
      %p43 = scmp.ne.s32.totalorder %s35, %s38
      %p44 = scmp.eq.s32.totalorder %s25, 0
      %p45 = por %p43, %p44
      %p46 = scmp.ne.s32.totalorder %s35, %s38
      %p47 = scmp.eq.s32.totalorder %s30, 1
      %p48 = por %p46, %p47
      %p49 = scmp.ne.s32.totalorder %s38, %s39
      %p50 = scmp.eq.s32.totalorder %s30, 0
      %p51 = por %p49, %p50
      %p52 = scmp.ne.s32.totalorder %s38, %s39
      %p53 = scmp.eq.s32.totalorder %s31, 1
      %p54 = por %p52, %p53
      %p56 = scmp.ne.s32.totalorder %s39, %s55
      %p57 = scmp.eq.s32.totalorder %s31, 0
      %p58 = por %p56, %p57
      %s60 = sadd.s32 %s59, 1
      %p63 = scmp.eq.s32.totalorder %s25, 1
      %p64 = scmp.ne.s32.totalorder %s59, %s61
      %p65 = scmp.eq.s32.totalorder %s25, 0
      %p66 = por %p64, %p65
      %p67 = scmp.ne.s32.totalorder %s59, %s61
      %p68 = scmp.eq.s32.totalorder %s30, 1
      %p69 = por %p67, %p68
      %p70 = scmp.ne.s32.totalorder %s61, %s62
      %p71 = scmp.eq.s32.totalorder %s30, 0
      %p72 = por %p70, %p71
      %p73 = scmp.ne.s32.totalorder %s61, %s62
      %p74 = scmp.eq.s32.totalorder %s31, 1
      %p75 = por %p73, %p74
      %p77 = scmp.ne.s32.totalorder %s62, %s76
      %p78 = scmp.eq.s32.totalorder %s31, 0
      %p79 = por %p77, %p78
      %s81 = sadd.s32 %s80, 1
      %p84 = scmp.eq.s32.totalorder %s25, 1
      %p85 = scmp.ne.s32.totalorder %s80, %s82
      %p86 = scmp.eq.s32.totalorder %s25, 0
      %p87 = por %p85, %p86
      %p88 = scmp.ne.s32.totalorder %s80, %s82
      %p89 = scmp.eq.s32.totalorder %s30, 1
      %p90 = por %p88, %p89
      %p91 = scmp.ne.s32.totalorder %s82, %s83
      %p92 = scmp.eq.s32.totalorder %s30, 0
      %p93 = por %p91, %p92
      %p94 = scmp.ne.s32.totalorder %s82, %s83
      %p95 = scmp.eq.s32.totalorder %s31, 1
      %p96 = por %p94, %p95
      %p98 = scmp.ne.s32.totalorder %s83, %s97
      %p99 = scmp.eq.s32.totalorder %s31, 0
      %p100 = por %p98, %p99
      %s102 = sadd.s32 %s101, 1
      %p105 = scmp.eq.s32.totalorder %s25, 1
      %p106 = scmp.ne.s32.totalorder %s101, %s103
      %p107 = scmp.eq.s32.totalorder %s25, 0
      %p108 = por %p106, %p107
      %p109 = scmp.ne.s32.totalorder %s101, %s103
      %p110 = scmp.eq.s32.totalorder %s30, 1
      %p111 = por %p109, %p110
      %p112 = scmp.ne.s32.totalorder %s103, %s104
      %p113 = scmp.eq.s32.totalorder %s30, 0
      %p114 = por %p112, %p113
      %p115 = scmp.ne.s32.totalorder %s103, %s104
      %p116 = scmp.eq.s32.totalorder %s31, 1
      %p117 = por %p115, %p116
      %p119 = scmp.ne.s32.totalorder %s104, %s118
      %p120 = scmp.eq.s32.totalorder %s31, 0
      %p121 = por %p119, %p120
      %s123 = sadd.s32 %s122, 1
      %p126 = scmp.eq.s32.totalorder %s25, 1
      %p127 = scmp.ne.s32.totalorder %s122, %s124
      %p128 = scmp.eq.s32.totalorder %s25, 0
      %p129 = por %p127, %p128
      %p130 = scmp.ne.s32.totalorder %s122, %s124
      %p131 = scmp.eq.s32.totalorder %s30, 1
      %p132 = por %p130, %p131
      %p133 = scmp.ne.s32.totalorder %s124, %s125
      %p134 = scmp.eq.s32.totalorder %s30, 0
      %p135 = por %p133, %p134
      %p136 = scmp.ne.s32.totalorder %s124, %s125
      %p137 = scmp.eq.s32.totalorder %s31, 1
      %p138 = por %p136, %p137
      %p140 = scmp.ne.s32.totalorder %s125, %s139
      %p141 = scmp.eq.s32.totalorder %s31, 0
      %p142 = por %p140, %p141
      %s144 = sadd.s32 %s143, 1
      %p147 = scmp.eq.s32.totalorder %s25, 1
      %p148 = scmp.ne.s32.totalorder %s143, %s145
      %p149 = scmp.eq.s32.totalorder %s25, 0
      %p150 = por %p148, %p149
      %p151 = scmp.ne.s32.totalorder %s143, %s145
      %p152 = scmp.eq.s32.totalorder %s30, 1
      %p153 = por %p151, %p152
      %p154 = scmp.ne.s32.totalorder %s145, %s146
      %p155 = scmp.eq.s32.totalorder %s30, 0
      %p156 = por %p154, %p155
      %p157 = scmp.ne.s32.totalorder %s145, %s146
      %p158 = scmp.eq.s32.totalorder %s31, 1
      %p159 = por %p157, %p158
      %p161 = scmp.ne.s32.totalorder %s146, %s160
      %p162 = scmp.eq.s32.totalorder %s31, 0
      %p163 = por %p161, %p162
      %s165 = sadd.s32 %s164, 1
      %p168 = scmp.eq.s32.totalorder %s25, 1
      %p169 = scmp.ne.s32.totalorder %s164, %s166
      %p170 = scmp.eq.s32.totalorder %s25, 0
      %p171 = por %p169, %p170
      %p172 = scmp.ne.s32.totalorder %s164, %s166
      %p173 = scmp.eq.s32.totalorder %s30, 1
      %p174 = por %p172, %p173
      %p175 = scmp.ne.s32.totalorder %s166, %s167
      %p176 = scmp.eq.s32.totalorder %s30, 0
      %p177 = por %p175, %p176
      %p178 = scmp.ne.s32.totalorder %s166, %s167
      %p179 = scmp.eq.s32.totalorder %s31, 1
      %p180 = por %p178, %p179
      %p182 = scmp.ne.s32.totalorder %s167, %s181
      %p183 = scmp.eq.s32.totalorder %s31, 0
      %p184 = por %p182, %p183
      %s186 = sadd.s32 %s185, 1
      %p189 = scmp.eq.s32.totalorder %s25, 1
      %p190 = scmp.ne.s32.totalorder %s185, %s187
      %p191 = scmp.eq.s32.totalorder %s25, 0
      %p192 = por %p190, %p191
      %p193 = scmp.ne.s32.totalorder %s185, %s187
      %p194 = scmp.eq.s32.totalorder %s30, 1
      %p195 = por %p193, %p194
      %p196 = scmp.ne.s32.totalorder %s187, %s188
      %p197 = scmp.eq.s32.totalorder %s30, 0
      %p198 = por %p196, %p197
      %p199 = scmp.ne.s32.totalorder %s187, %s188
      %p200 = scmp.eq.s32.totalorder %s31, 1
      %p201 = por %p199, %p200
      %p203 = scmp.ne.s32.totalorder %s188, %s202
      %p204 = scmp.eq.s32.totalorder %s31, 0
      %p205 = por %p203, %p204
      %s207 = sadd.s32 %s206, 1
      %p210 = scmp.eq.s32.totalorder %s25, 1
      %p211 = scmp.ne.s32.totalorder %s206, %s208
      %p212 = scmp.eq.s32.totalorder %s25, 0
      %p213 = por %p211, %p212
      %p214 = scmp.ne.s32.totalorder %s206, %s208
      %p215 = scmp.eq.s32.totalorder %s30, 1
      %p216 = por %p214, %p215
      %p217 = scmp.ne.s32.totalorder %s208, %s209
      %p218 = scmp.eq.s32.totalorder %s30, 0
      %p219 = por %p217, %p218
      %p220 = scmp.ne.s32.totalorder %s208, %s209
      %p221 = scmp.eq.s32.totalorder %s31, 1
      %p222 = por %p220, %p221
      %p224 = scmp.ne.s32.totalorder %s209, %s223
      %p225 = scmp.eq.s32.totalorder %s31, 0
      %p226 = por %p224, %p225
      %s228 = sadd.s32 %s227, 1
      %p231 = scmp.eq.s32.totalorder %s25, 1
      %p232 = scmp.ne.s32.totalorder %s227, %s229
      %p233 = scmp.eq.s32.totalorder %s25, 0
      %p234 = por %p232, %p233
      %p235 = scmp.ne.s32.totalorder %s227, %s229
      %p236 = scmp.eq.s32.totalorder %s30, 1
      %p237 = por %p235, %p236
      %p238 = scmp.ne.s32.totalorder %s229, %s230
      %p239 = scmp.eq.s32.totalorder %s30, 0
      %p240 = por %p238, %p239
      %p241 = scmp.ne.s32.totalorder %s229, %s230
      %p242 = scmp.eq.s32.totalorder %s31, 1
      %p243 = por %p241, %p242
      %p245 = scmp.ne.s32.totalorder %s230, %s244
      %p246 = scmp.eq.s32.totalorder %s31, 0
      %p247 = por %p245, %p246
      %s249 = sadd.s32 %s248, 1
      %p252 = scmp.eq.s32.totalorder %s25, 1
      %p253 = scmp.ne.s32.totalorder %s248, %s250
      %p254 = scmp.eq.s32.totalorder %s25, 0
      %p255 = por %p253, %p254
      %p256 = scmp.ne.s32.totalorder %s248, %s250
      %p257 = scmp.eq.s32.totalorder %s30, 1
      %p258 = por %p256, %p257
      %p259 = scmp.ne.s32.totalorder %s250, %s251
      %p260 = scmp.eq.s32.totalorder %s30, 0
      %p261 = por %p259, %p260
      %p262 = scmp.ne.s32.totalorder %s250, %s251
      %p263 = scmp.eq.s32.totalorder %s31, 1
      %p264 = por %p262, %p263
      %p266 = scmp.ne.s32.totalorder %s251, %s265
      %p267 = scmp.eq.s32.totalorder %s31, 0
      %p268 = por %p266, %p267
      %s270 = sadd.s32 %s269, 1
      %p273 = scmp.eq.s32.totalorder %s25, 1
      %p274 = scmp.ne.s32.totalorder %s269, %s271
      %p275 = scmp.eq.s32.totalorder %s25, 0
      %p276 = por %p274, %p275
      %p277 = scmp.ne.s32.totalorder %s269, %s271
      %p278 = scmp.eq.s32.totalorder %s30, 1
      %p279 = por %p277, %p278
      %p280 = scmp.ne.s32.totalorder %s271, %s272
      %p281 = scmp.eq.s32.totalorder %s30, 0
      %p282 = por %p280, %p281
      %p283 = scmp.ne.s32.totalorder %s271, %s272
      %p284 = scmp.eq.s32.totalorder %s31, 1
      %p285 = por %p283, %p284
      %p287 = scmp.ne.s32.totalorder %s272, %s286
      %p288 = scmp.eq.s32.totalorder %s31, 0
      %p289 = por %p287, %p288
      %s291 = sadd.s32 %s290, 1
      %p294 = scmp.eq.s32.totalorder %s25, 1
      %p295 = scmp.ne.s32.totalorder %s290, %s292
      %p296 = scmp.eq.s32.totalorder %s25, 0
      %p297 = por %p295, %p296
      %p298 = scmp.ne.s32.totalorder %s290, %s292
      %p299 = scmp.eq.s32.totalorder %s30, 1
      %p300 = por %p298, %p299
      %p301 = scmp.ne.s32.totalorder %s292, %s293
      %p302 = scmp.eq.s32.totalorder %s30, 0
      %p303 = por %p301, %p302
      %p304 = scmp.ne.s32.totalorder %s292, %s293
      %p305 = scmp.eq.s32.totalorder %s31, 1
      %p306 = por %p304, %p305
      %p308 = scmp.ne.s32.totalorder %s293, %s307
      %p309 = scmp.eq.s32.totalorder %s31, 0
      %p310 = por %p308, %p309
      %s312 = sadd.s32 %s311, 1
      %p315 = scmp.eq.s32.totalorder %s25, 1
      %p316 = scmp.ne.s32.totalorder %s311, %s313
      %p317 = scmp.eq.s32.totalorder %s25, 0
      %p318 = por %p316, %p317
      %p319 = scmp.ne.s32.totalorder %s311, %s313
      %p320 = scmp.eq.s32.totalorder %s30, 1
      %p321 = por %p319, %p320
      %p322 = scmp.ne.s32.totalorder %s313, %s314
      %p323 = scmp.eq.s32.totalorder %s30, 0
      %p324 = por %p322, %p323
      %p325 = scmp.ne.s32.totalorder %s313, %s314
      %p326 = scmp.eq.s32.totalorder %s31, 1
      %p327 = por %p325, %p326
      %p329 = scmp.ne.s32.totalorder %s314, %s328
      %p330 = scmp.eq.s32.totalorder %s31, 0
      %p331 = por %p329, %p330
      %s333 = sadd.s32 %s332, 1
      %p336 = scmp.eq.s32.totalorder %s25, 1
      %p337 = scmp.ne.s32.totalorder %s332, %s334
      %p338 = scmp.eq.s32.totalorder %s25, 0
      %p339 = por %p337, %p338
      %p340 = scmp.ne.s32.totalorder %s332, %s334
      %p341 = scmp.eq.s32.totalorder %s30, 1
      %p342 = por %p340, %p341
      %p343 = scmp.ne.s32.totalorder %s334, %s335
      %p344 = scmp.eq.s32.totalorder %s30, 0
      %p345 = por %p343, %p344
      %p346 = scmp.ne.s32.totalorder %s334, %s335
      %p347 = scmp.eq.s32.totalorder %s31, 1
      %p348 = por %p346, %p347
      %p350 = scmp.ne.s32.totalorder %s335, %s349
      %p351 = scmp.eq.s32.totalorder %s31, 0
      %p352 = por %p350, %p351
      %s354 = sadd.s32 %s353, 1
      %p357 = scmp.eq.s32.totalorder %s25, 1
      %p358 = scmp.ne.s32.totalorder %s353, %s355
      %p359 = scmp.eq.s32.totalorder %s25, 0
      %p360 = por %p358, %p359
      %p361 = scmp.ne.s32.totalorder %s353, %s355
      %p362 = scmp.eq.s32.totalorder %s30, 1
      %p363 = por %p361, %p362
      %p364 = scmp.ne.s32.totalorder %s355, %s356
      %p365 = scmp.eq.s32.totalorder %s30, 0
      %p366 = por %p364, %p365
      %p367 = scmp.ne.s32.totalorder %s355, %s356
      %p368 = scmp.eq.s32.totalorder %s31, 1
      %p369 = por %p367, %p368
      %p371 = scmp.ne.s32.totalorder %s356, %s370
      %p372 = scmp.eq.s32.totalorder %s31, 0
      %p373 = por %p371, %p372
      %s374 = ssub.s32 %s25, %s32
      %p375 = scmp.eq.s32.totalorder %s374, 0
      %s377 = sadd.s32 %s376, 1
      %s378 = scalar_select %p375, %s376, %s377
      %p381 = pneg %p375
      %p382 = scmp.eq.s32.totalorder %s25, 1
      %p383 = por %p381, %p382
      %p384 = scmp.ne.s32.totalorder %s376, %s379
      %p385 = scmp.eq.s32.totalorder %s25, 0
      %p386 = por %p384, %p385
      %p387 = scmp.ne.s32.totalorder %s376, %s379
      %p388 = scmp.eq.s32.totalorder %s30, 1
      %p389 = por %p387, %p388
      %p390 = scmp.ne.s32.totalorder %s379, %s380
      %p391 = scmp.eq.s32.totalorder %s30, 0
      %p392 = por %p390, %p391
      %p393 = scmp.ne.s32.totalorder %s379, %s380
      %p394 = scmp.eq.s32.totalorder %s31, 1
      %p395 = por %p393, %p394
      %p397 = scmp.ne.s32.totalorder %s380, %s396
      %p398 = scmp.eq.s32.totalorder %s31, 0
      %p399 = por %p397, %p398
      %p400 = scmp.le.s32.totalorder 1, %s25
      %p401 = scmp.lt.s32.totalorder %s25, 3
      %p402 = pnand %p400, %p401
      %p403 = pneg %p402
      // Predicated region
      $region9: #{llama_forward.1} parent=5 // pred_check
        _
      $region10: #{llama_forward.1} parent=5 // pred_check_branch
        %405 = sbr.rel (%p402) target = $region12
      $region11: #{llama_forward.1} parent=5 // pred_region
        %s406 = ssub.s32 %s25, 1
        // Predicated region
        $region13: #{llama_forward.1} parent=11 // pred_check
          %p407 = pneg %p72
        $region14: #{llama_forward.1} parent=11 // pred_check_branch
          %409 = sbr.rel (%p407) target = $region16
        $region15: #{llama_forward.1} parent=11 // pred_region
          _
        $region16: #{llama_forward.1} parent=11 // pred_fallthru
          _
        // Predicated region
        $region17: #{llama_forward.1} parent=11 // pred_check
          %p410 = pneg %p93
        $region18: #{llama_forward.1} parent=11 // pred_check_branch
          %412 = sbr.rel (%p410) target = $region20
        $region19: #{llama_forward.1} parent=11 // pred_region
          _
        $region20: #{llama_forward.1} parent=11 // pred_fallthru
          _
        // Predicated region
        $region21: #{llama_forward.1} parent=11 // pred_check
          %p413 = pneg %p114
        $region22: #{llama_forward.1} parent=11 // pred_check_branch
          %415 = sbr.rel (%p413) target = $region24
        $region23: #{llama_forward.1} parent=11 // pred_region
          _
        $region24: #{llama_forward.1} parent=11 // pred_fallthru
          _
        // Predicated region
        $region25: #{llama_forward.1} parent=11 // pred_check
          %p416 = pneg %p135
        $region26: #{llama_forward.1} parent=11 // pred_check_branch
          %418 = sbr.rel (%p416) target = $region28
        $region27: #{llama_forward.1} parent=11 // pred_region
          _
        $region28: #{llama_forward.1} parent=11 // pred_fallthru
          _
        // Predicated region
        $region29: #{llama_forward.1} parent=11 // pred_check
          %p419 = pneg %p156
        $region30: #{llama_forward.1} parent=11 // pred_check_branch
          %421 = sbr.rel (%p419) target = $region32
        $region31: #{llama_forward.1} parent=11 // pred_region
          _
        $region32: #{llama_forward.1} parent=11 // pred_fallthru
          _
        // Predicated region
        $region33: #{llama_forward.1} parent=11 // pred_check
          %p422 = pneg %p177
        $region34: #{llama_forward.1} parent=11 // pred_check_branch
          %424 = sbr.rel (%p422) target = $region36
        $region35: #{llama_forward.1} parent=11 // pred_region
          _
        $region36: #{llama_forward.1} parent=11 // pred_fallthru
          _
        // Predicated region
        $region37: #{llama_forward.1} parent=11 // pred_check
          %p425 = pneg %p198
        $region38: #{llama_forward.1} parent=11 // pred_check_branch
          %427 = sbr.rel (%p425) target = $region40
        $region39: #{llama_forward.1} parent=11 // pred_region
          _
        $region40: #{llama_forward.1} parent=11 // pred_fallthru
          _
        // Predicated region
        $region41: #{llama_forward.1} parent=11 // pred_check
          %p428 = pneg %p219
        $region42: #{llama_forward.1} parent=11 // pred_check_branch
          %430 = sbr.rel (%p428) target = $region44
        $region43: #{llama_forward.1} parent=11 // pred_region
          _
        $region44: #{llama_forward.1} parent=11 // pred_fallthru
          _
        // Predicated region
        $region45: #{llama_forward.1} parent=11 // pred_check
          %p431 = pneg %p240
        $region46: #{llama_forward.1} parent=11 // pred_check_branch
          %433 = sbr.rel (%p431) target = $region48
        $region47: #{llama_forward.1} parent=11 // pred_region
          _
        $region48: #{llama_forward.1} parent=11 // pred_fallthru
          _
        // Predicated region
        $region49: #{llama_forward.1} parent=11 // pred_check
          %p434 = pneg %p261
        $region50: #{llama_forward.1} parent=11 // pred_check_branch
          %436 = sbr.rel (%p434) target = $region52
        $region51: #{llama_forward.1} parent=11 // pred_region
          _
        $region52: #{llama_forward.1} parent=11 // pred_fallthru
          _
        // Predicated region
        $region53: #{llama_forward.1} parent=11 // pred_check
          %p437 = pneg %p282
        $region54: #{llama_forward.1} parent=11 // pred_check_branch
          %439 = sbr.rel (%p437) target = $region56
        $region55: #{llama_forward.1} parent=11 // pred_region
          _
        $region56: #{llama_forward.1} parent=11 // pred_fallthru
          _
        // Predicated region
        $region57: #{llama_forward.1} parent=11 // pred_check
          %p440 = pneg %p303
        $region58: #{llama_forward.1} parent=11 // pred_check_branch
          %442 = sbr.rel (%p440) target = $region60
        $region59: #{llama_forward.1} parent=11 // pred_region
          _
        $region60: #{llama_forward.1} parent=11 // pred_fallthru
          _
        // Predicated region
        $region61: #{llama_forward.1} parent=11 // pred_check
          %p443 = pneg %p324
        $region62: #{llama_forward.1} parent=11 // pred_check_branch
          %445 = sbr.rel (%p443) target = $region64
        $region63: #{llama_forward.1} parent=11 // pred_region
          _
        $region64: #{llama_forward.1} parent=11 // pred_fallthru
          _
        // Predicated region
        $region65: #{llama_forward.1} parent=11 // pred_check
          %p446 = pneg %p345
        $region66: #{llama_forward.1} parent=11 // pred_check_branch
          %448 = sbr.rel (%p446) target = $region68
        $region67: #{llama_forward.1} parent=11 // pred_region
          _
        $region68: #{llama_forward.1} parent=11 // pred_fallthru
          _
        // Predicated region
        $region69: #{llama_forward.1} parent=11 // pred_check
          %p449 = pneg %p366
        $region70: #{llama_forward.1} parent=11 // pred_check_branch
          %451 = sbr.rel (%p449) target = $region72
        $region71: #{llama_forward.1} parent=11 // pred_region
          _
        $region72: #{llama_forward.1} parent=11 // pred_fallthru
          _
      $region12: #{llama_forward.1} parent=5 // pred_fallthru
        _
      %p452 = scmp.lt.s32.totalorder %s25, 2
      // Predicated region
      $region73: #{llama_forward.1} parent=5 // pred_check
        %p453 = pneg %p452
      $region74: #{llama_forward.1} parent=5 // pred_check_branch
        %455 = sbr.rel (%p453) target = $region76
      $region75: #{llama_forward.1} parent=5 // pred_region
        // Predicated region
        $region77: #{llama_forward.1} parent=75 // pred_check
          %p456 = pneg %p45
        $region78: #{llama_forward.1} parent=75 // pred_check_branch
          %458 = sbr.rel (%p456) target = $region80
        $region79: #{llama_forward.1} parent=75 // pred_region
          %p459 = scmp.lt.s32.totalorder %s25, 1
          %s460 = scalar_select %p459, %s25, 1
          %s461 = smul.addr %s460, 8
          %s462 = scalar_lea.vmem %s0, %s461
        $region80: #{llama_forward.1} parent=75 // pred_fallthru
          _
      $region76: #{llama_forward.1} parent=5 // pred_fallthru
        _
      %p463 = scmp.le.s32.totalorder 1, %s25
      %p464 = scmp.lt.s32.totalorder %s25, 3
      %p465 = pnand %p463, %p464
      %p466 = pneg %p465
      // Predicated region
      $region81: #{llama_forward.1} parent=5 // pred_check
        _
      $region82: #{llama_forward.1} parent=5 // pred_check_branch
        %468 = sbr.rel (%p465) target = $region84
      $region83: #{llama_forward.1} parent=5 // pred_region
        %s469 = ssub.s32 %s25, 1
        %p470 = scmp.lt.s32.totalorder %s30, 1
        %s471 = scalar_select %p470, %s30, 1
        %s472 = smul.addr %s471, 8
        %s473 = scalar_lea.vmem %s0, %s472
        %p474 = pneg %p51
        %p475 = pneg %p48
        %p476 = pneg %p72
        %p477 = pneg %p69
        %p478 = pneg %p93
        %p479 = pneg %p90
        %p480 = pneg %p114
        %p481 = pneg %p111
        %p482 = pneg %p135
        %p483 = pneg %p132
        %p484 = pneg %p156
        %p485 = pneg %p153
        %p486 = pneg %p177
        %p487 = pneg %p174
        %p488 = pneg %p198
        %p489 = pneg %p195
        %p490 = pneg %p219
        %p491 = pneg %p216
        %p492 = pneg %p240
        %p493 = pneg %p237
        %p494 = pneg %p261
        %p495 = pneg %p258
        %p496 = pneg %p282
        %p497 = pneg %p279
        %p498 = pneg %p303
        %p499 = pneg %p300
        %p500 = pneg %p324
        %p501 = pneg %p321
        %p502 = pneg %p345
        %p503 = pneg %p342
        %p504 = pneg %p366
        %p505 = pneg %p363
        %p506 = pneg %p392
        %p507 = pneg %p389
        %s508 = sand.u32 %s379, 1
        %s509 = scalar_lea.sflag [#allocation3], %s508
        %s510 = sand.u32 %s379, 1
        %s511 = smul.addr %s510, 8
        %s512 = scalar_lea.vmem [#allocation2], %s511
        %p513 = scmp.lt.s32.totalorder %s30, 1
        %s514 = scalar_select %p513, %s30, 1
        %s515 = smul.addr %s514, 8
        %s516 = scalar_lea.vmem %s0, %s515
        %v518 = vld [vmem:[%s516] sm:$0xff]
        %v519 = vld [vmem:[%s12] sm:$0xff]
        %v520 = vld [vmem:[%s13] sm:$0xff]
        %v521 = vlaneseq
        %v522 = vshrl.u32 %v521, 7
        %v523 = vlaneseq
        %v524 = vand.u32 %v523, 127
        %vm525 = vcmp.le.s32.totalorder %v524, %v522
        %v526 = vld [vmem:[%s10] sm:$0x1]
        %v527 = vmul.f32 %v518, %v518
        %vm528 = vcmask 261120
        %v529 = vsel %vm528, %v527, 0.0
        %530 = vadd.xlane.f32.xlu0 %v529
        %v531 = vpop.xlane.xlu0 %530
        %v532 = vrcp.pop 32.0
        %v533 = vmul.f32 %v531, %v532
        %v534 = vadd.f32 %v533, 1e-05
        %v535 = vrsqrt.pop %v534
        %v536 = vmul.f32 %v518, %v535
        %v538 = vlaneseq
        %v539 = vshrl.u32 %v538, 7
        %v540 = vsub.s32 0, %v539
        %v541 = vrot.slane %v526, %v540
        %v543 = vmul.f32 %v536, %v541
        %v544 = vpack.c.bf16 %v543, %v543
        %v545 = vld [vmem:[%s3] sm:$0xf]
        %v546 = vld [vmem:[%s3 + $0x4] sm:$0xf]
        %v547 = vld [vmem:[%s3 + $0x8] sm:$0xf]
        %v548 = vld [vmem:[%s3 + $0xc] sm:$0xf]
        %v553 = vunpack.c.l.b16 %v545
        %v554 = vunpack.c.l.b16 %v546
        %v555 = vunpack.c.l.b16 %v547
        %v556 = vunpack.c.l.b16 %v548
        %v557 = vpack.c.b16 %v554, %v553
        %v558 = vpack.c.b16 %v556, %v555
        %v562 = vsel %vm528, %v544, 0
        %564 = vmatprep.subr.bf16.mxu0 0
        %565 = vmatpush1.bf16.msra.mxu0 0
        %566 = vmatprep.subr.bf16.mxu0 0
        %567 = vmatpush1.bf16.msra.mxu0 0
        %568 = vmatprep.subr.bf16.mxu0 0
        %569 = vmatpush1.bf16.msra.mxu0 0
        %570 = vmatprep.subr.bf16.mxu0 0
        %571 = vmatpush1.bf16.msra.mxu0 0
        %572 = vmatprep.subr.bf16.mxu0 0
        %573 = vmatpush1.bf16.msra.mxu0 0
        %574 = vmatprep.subr.bf16.mxu0 0
        %575 = vmatpush1.bf16.msra.mxu0 0
        %576 = vmatprep.subr.bf16.mxu0 0
        %577 = vmatpush1.bf16.msra.mxu0 %v558
        %578 = vmatprep.subr.bf16.mxu0 0
        %579 = vmatpush1.bf16.msra.mxu0 %v557
        %580 = vmatprep.subr.bf16.mxu0 0
        %581 = vmatpush2.bf16.msra.mxu0 0
        %582 = vmatprep.subr.bf16.mxu0 0
        %583 = vmatpush2.bf16.msra.mxu0 0
        %584 = vmatprep.subr.bf16.mxu0 0
        %585 = vmatpush2.bf16.msra.mxu0 0
        %586 = vmatprep.subr.bf16.mxu0 0
        %587 = vmatpush2.bf16.msra.mxu0 0
        %588 = vmatprep.subr.bf16.mxu0 0
        %589 = vmatpush2.bf16.msra.mxu0 0
        %590 = vmatprep.subr.bf16.mxu0 0
        %591 = vmatpush2.bf16.msra.mxu0 0
        %592 = vmatprep.subr.bf16.mxu0 0
        %593 = vmatpush2.bf16.msra.mxu0 0
        %594 = vmatprep.subr.bf16.mxu0 0
        %595 = vmatpush2.bf16.msra.mxu0 0
        %596 = vmatprep.mubr.bf16.mxu0 0
        %597 = vmatmul.mubr.bf16.gmra.mxu0 %v562
        %v598 = vpop.f32.mrf.mxu0
        %v599 = vadd.f32 0.0, %v598
        %v600 = vpop.f32.mrf.mxu0
        %v601 = vpop.f32.mrf.mxu0
        %v602 = vpop.f32.mrf.mxu0
        %603 = vdwg.mxu0
        %v604 = vld [vmem:[%s4] sm:$0xf]
        %v605 = vld [vmem:[%s4 + $0x4] sm:$0xf]
        %v606 = vld [vmem:[%s4 + $0x8] sm:$0xf]
        %v607 = vld [vmem:[%s4 + $0xc] sm:$0xf]
        %v612 = vunpack.c.l.b16 %v604
        %v613 = vunpack.c.l.b16 %v605
        %v614 = vunpack.c.l.b16 %v606
        %v615 = vunpack.c.l.b16 %v607
        %v616 = vpack.c.b16 %v613, %v612
        %v617 = vpack.c.b16 %v615, %v614
        %620 = vmatprep.subr.bf16.mxu0 0
        %621 = vmatpush1.bf16.msra.mxu0 0
        %622 = vmatprep.subr.bf16.mxu0 0
        %623 = vmatpush1.bf16.msra.mxu0 0
        %624 = vmatprep.subr.bf16.mxu0 0
        %625 = vmatpush1.bf16.msra.mxu0 0
        %626 = vmatprep.subr.bf16.mxu0 0
        %627 = vmatpush1.bf16.msra.mxu0 0
        %628 = vmatprep.subr.bf16.mxu0 0
        %629 = vmatpush1.bf16.msra.mxu0 0
        %630 = vmatprep.subr.bf16.mxu0 0
        %631 = vmatpush1.bf16.msra.mxu0 0
        %632 = vmatprep.subr.bf16.mxu0 0
        %633 = vmatpush1.bf16.msra.mxu0 %v617
        %634 = vmatprep.subr.bf16.mxu0 0
        %635 = vmatpush1.bf16.msra.mxu0 %v616
        %636 = vmatprep.subr.bf16.mxu0 0
        %637 = vmatpush2.bf16.msra.mxu0 0
        %638 = vmatprep.subr.bf16.mxu0 0
        %639 = vmatpush2.bf16.msra.mxu0 0
        %640 = vmatprep.subr.bf16.mxu0 0
        %641 = vmatpush2.bf16.msra.mxu0 0
        %642 = vmatprep.subr.bf16.mxu0 0
        %643 = vmatpush2.bf16.msra.mxu0 0
        %644 = vmatprep.subr.bf16.mxu0 0
        %645 = vmatpush2.bf16.msra.mxu0 0
        %646 = vmatprep.subr.bf16.mxu0 0
        %647 = vmatpush2.bf16.msra.mxu0 0
        %648 = vmatprep.subr.bf16.mxu0 0
        %649 = vmatpush2.bf16.msra.mxu0 0
        %650 = vmatprep.subr.bf16.mxu0 0
        %651 = vmatpush2.bf16.msra.mxu0 0
        %652 = vmatprep.mubr.bf16.mxu0 0
        %653 = vmatmul.mubr.bf16.gmra.mxu0 %v562
        %v654 = vpop.f32.mrf.mxu0
        %v655 = vadd.f32 0.0, %v654
        %v656 = vpop.f32.mrf.mxu0
        %v657 = vpop.f32.mrf.mxu0
        %v658 = vpop.f32.mrf.mxu0
        %659 = vdwg.mxu0
        %v660 = vmul.f32 %v599, %v519
        %v661 = vmul.f32 %v655, %v520
        %v662 = vadd.f32 %v660, %v661
        %v663 = vld [vmem:[%s5] sm:$0xf]
        %v664 = vld [vmem:[%s5 + $0x4] sm:$0xf]
        %v665 = vld [vmem:[%s5 + $0x8] sm:$0xf]
        %v666 = vld [vmem:[%s5 + $0xc] sm:$0xf]
        %v671 = vunpack.c.l.b16 %v663
        %v672 = vunpack.c.l.b16 %v664
        %v673 = vunpack.c.l.b16 %v665
        %v674 = vunpack.c.l.b16 %v666
        %v675 = vpack.c.b16 %v672, %v671
        %v676 = vpack.c.b16 %v674, %v673
        %679 = vmatprep.subr.bf16.mxu0 0
        %680 = vmatpush1.bf16.msra.mxu0 0
        %681 = vmatprep.subr.bf16.mxu0 0
        %682 = vmatpush1.bf16.msra.mxu0 0
        %683 = vmatprep.subr.bf16.mxu0 0
        %684 = vmatpush1.bf16.msra.mxu0 0
        %685 = vmatprep.subr.bf16.mxu0 0
        %686 = vmatpush1.bf16.msra.mxu0 0
        %687 = vmatprep.subr.bf16.mxu0 0
        %688 = vmatpush1.bf16.msra.mxu0 0
        %689 = vmatprep.subr.bf16.mxu0 0
        %690 = vmatpush1.bf16.msra.mxu0 0
        %691 = vmatprep.subr.bf16.mxu0 0
        %692 = vmatpush1.bf16.msra.mxu0 %v676
        %693 = vmatprep.subr.bf16.mxu0 0
        %694 = vmatpush1.bf16.msra.mxu0 %v675
        %695 = vmatprep.subr.bf16.mxu0 0
        %696 = vmatpush2.bf16.msra.mxu0 0
        %697 = vmatprep.subr.bf16.mxu0 0
        %698 = vmatpush2.bf16.msra.mxu0 0
        %699 = vmatprep.subr.bf16.mxu0 0
        %700 = vmatpush2.bf16.msra.mxu0 0
        %701 = vmatprep.subr.bf16.mxu0 0
        %702 = vmatpush2.bf16.msra.mxu0 0
        %703 = vmatprep.subr.bf16.mxu0 0
        %704 = vmatpush2.bf16.msra.mxu0 0
        %705 = vmatprep.subr.bf16.mxu0 0
        %706 = vmatpush2.bf16.msra.mxu0 0
        %707 = vmatprep.subr.bf16.mxu0 0
        %708 = vmatpush2.bf16.msra.mxu0 0
        %709 = vmatprep.subr.bf16.mxu0 0
        %710 = vmatpush2.bf16.msra.mxu0 0
        %711 = vmatprep.mubr.bf16.mxu0 0
        %712 = vmatmul.mubr.bf16.gmra.mxu0 %v562
        %v713 = vpop.f32.mrf.mxu0
        %v714 = vadd.f32 0.0, %v713
        %v715 = vpop.f32.mrf.mxu0
        %v716 = vpop.f32.mrf.mxu0
        %v717 = vpop.f32.mrf.mxu0
        %718 = vdwg.mxu0
        %s719 = scalar_lea.vmem %s3, 16
        %v720 = vld [vmem:[%s719] sm:$0xf]
        %v721 = vld [vmem:[%s719 + $0x4] sm:$0xf]
        %v722 = vld [vmem:[%s719 + $0x8] sm:$0xf]
        %v723 = vld [vmem:[%s719 + $0xc] sm:$0xf]
        %v728 = vunpack.c.l.b16 %v720
        %v729 = vunpack.c.l.b16 %v721
        %v730 = vunpack.c.l.b16 %v722
        %v731 = vunpack.c.l.b16 %v723
        %v732 = vpack.c.b16 %v729, %v728
        %v733 = vpack.c.b16 %v731, %v730
        %736 = vmatprep.subr.bf16.mxu0 0
        %737 = vmatpush1.bf16.msra.mxu0 0
        %738 = vmatprep.subr.bf16.mxu0 0
        %739 = vmatpush1.bf16.msra.mxu0 0
        %740 = vmatprep.subr.bf16.mxu0 0
        %741 = vmatpush1.bf16.msra.mxu0 0
        %742 = vmatprep.subr.bf16.mxu0 0
        %743 = vmatpush1.bf16.msra.mxu0 0
        %744 = vmatprep.subr.bf16.mxu0 0
        %745 = vmatpush1.bf16.msra.mxu0 0
        %746 = vmatprep.subr.bf16.mxu0 0
        %747 = vmatpush1.bf16.msra.mxu0 0
        %748 = vmatprep.subr.bf16.mxu0 0
        %749 = vmatpush1.bf16.msra.mxu0 %v733
        %750 = vmatprep.subr.bf16.mxu0 0
        %751 = vmatpush1.bf16.msra.mxu0 %v732
        %752 = vmatprep.subr.bf16.mxu0 0
        %753 = vmatpush2.bf16.msra.mxu0 0
        %754 = vmatprep.subr.bf16.mxu0 0
        %755 = vmatpush2.bf16.msra.mxu0 0
        %756 = vmatprep.subr.bf16.mxu0 0
        %757 = vmatpush2.bf16.msra.mxu0 0
        %758 = vmatprep.subr.bf16.mxu0 0
        %759 = vmatpush2.bf16.msra.mxu0 0
        %760 = vmatprep.subr.bf16.mxu0 0
        %761 = vmatpush2.bf16.msra.mxu0 0
        %762 = vmatprep.subr.bf16.mxu0 0
        %763 = vmatpush2.bf16.msra.mxu0 0
        %764 = vmatprep.subr.bf16.mxu0 0
        %765 = vmatpush2.bf16.msra.mxu0 0
        %766 = vmatprep.subr.bf16.mxu0 0
        %767 = vmatpush2.bf16.msra.mxu0 0
        %768 = vmatprep.mubr.bf16.mxu0 0
        %769 = vmatmul.mubr.bf16.gmra.mxu0 %v562
        %v770 = vpop.f32.mrf.mxu0
        %v771 = vadd.f32 0.0, %v770
        %v772 = vpop.f32.mrf.mxu0
        %v773 = vpop.f32.mrf.mxu0
        %v774 = vpop.f32.mrf.mxu0
        %775 = vdwg.mxu0
        %s776 = scalar_lea.vmem %s4, 16
        %v777 = vld [vmem:[%s776] sm:$0xf]
        %v778 = vld [vmem:[%s776 + $0x4] sm:$0xf]
        %v779 = vld [vmem:[%s776 + $0x8] sm:$0xf]
        %v780 = vld [vmem:[%s776 + $0xc] sm:$0xf]
        %v785 = vunpack.c.l.b16 %v777
        %v786 = vunpack.c.l.b16 %v778
        %v787 = vunpack.c.l.b16 %v779
        %v788 = vunpack.c.l.b16 %v780
        %v789 = vpack.c.b16 %v786, %v785
        %v790 = vpack.c.b16 %v788, %v787
        %793 = vmatprep.subr.bf16.mxu0 0
        %794 = vmatpush1.bf16.msra.mxu0 0
        %795 = vmatprep.subr.bf16.mxu0 0
        %796 = vmatpush1.bf16.msra.mxu0 0
        %797 = vmatprep.subr.bf16.mxu0 0
        %798 = vmatpush1.bf16.msra.mxu0 0
        %799 = vmatprep.subr.bf16.mxu0 0
        %800 = vmatpush1.bf16.msra.mxu0 0
        %801 = vmatprep.subr.bf16.mxu0 0
        %802 = vmatpush1.bf16.msra.mxu0 0
        %803 = vmatprep.subr.bf16.mxu0 0
        %804 = vmatpush1.bf16.msra.mxu0 0
        %805 = vmatprep.subr.bf16.mxu0 0
        %806 = vmatpush1.bf16.msra.mxu0 %v790
        %807 = vmatprep.subr.bf16.mxu0 0
        %808 = vmatpush1.bf16.msra.mxu0 %v789
        %809 = vmatprep.subr.bf16.mxu0 0
        %810 = vmatpush2.bf16.msra.mxu0 0
        %811 = vmatprep.subr.bf16.mxu0 0
        %812 = vmatpush2.bf16.msra.mxu0 0
        %813 = vmatprep.subr.bf16.mxu0 0
        %814 = vmatpush2.bf16.msra.mxu0 0
        %815 = vmatprep.subr.bf16.mxu0 0
        %816 = vmatpush2.bf16.msra.mxu0 0
        %817 = vmatprep.subr.bf16.mxu0 0
        %818 = vmatpush2.bf16.msra.mxu0 0
        %819 = vmatprep.subr.bf16.mxu0 0
        %820 = vmatpush2.bf16.msra.mxu0 0
        %821 = vmatprep.subr.bf16.mxu0 0
        %822 = vmatpush2.bf16.msra.mxu0 0
        %823 = vmatprep.subr.bf16.mxu0 0
        %824 = vmatpush2.bf16.msra.mxu0 0
        %825 = vmatprep.mubr.bf16.mxu0 0
        %826 = vmatmul.mubr.bf16.gmra.mxu0 %v562
        %v827 = vpop.f32.mrf.mxu0
        %v828 = vadd.f32 0.0, %v827
        %v829 = vpop.f32.mrf.mxu0
        %v830 = vpop.f32.mrf.mxu0
        %v831 = vpop.f32.mrf.mxu0
        %832 = vdwg.mxu0
        %v833 = vmul.f32 %v771, %v519
        %v834 = vmul.f32 %v828, %v520
        %v835 = vadd.f32 %v833, %v834
        %s836 = scalar_lea.vmem %s5, 16
        %v837 = vld [vmem:[%s836] sm:$0xf]
        %v838 = vld [vmem:[%s836 + $0x4] sm:$0xf]
        %v839 = vld [vmem:[%s836 + $0x8] sm:$0xf]
        %v840 = vld [vmem:[%s836 + $0xc] sm:$0xf]
        %v845 = vunpack.c.l.b16 %v837
        %v846 = vunpack.c.l.b16 %v838
        %v847 = vunpack.c.l.b16 %v839
        %v848 = vunpack.c.l.b16 %v840
        %v849 = vpack.c.b16 %v846, %v845
        %v850 = vpack.c.b16 %v848, %v847
        %853 = vmatprep.subr.bf16.mxu0 0
        %854 = vmatpush1.bf16.msra.mxu0 0
        %855 = vmatprep.subr.bf16.mxu0 0
        %856 = vmatpush1.bf16.msra.mxu0 0
        %857 = vmatprep.subr.bf16.mxu0 0
        %858 = vmatpush1.bf16.msra.mxu0 0
        %859 = vmatprep.subr.bf16.mxu0 0
        %860 = vmatpush1.bf16.msra.mxu0 0
        %861 = vmatprep.subr.bf16.mxu0 0
        %862 = vmatpush1.bf16.msra.mxu0 0
        %863 = vmatprep.subr.bf16.mxu0 0
        %864 = vmatpush1.bf16.msra.mxu0 0
        %865 = vmatprep.subr.bf16.mxu0 0
        %866 = vmatpush1.bf16.msra.mxu0 %v850
        %867 = vmatprep.subr.bf16.mxu0 0
        %868 = vmatpush1.bf16.msra.mxu0 %v849
        %869 = vmatprep.subr.bf16.mxu0 0
        %870 = vmatpush2.bf16.msra.mxu0 0
        %871 = vmatprep.subr.bf16.mxu0 0
        %872 = vmatpush2.bf16.msra.mxu0 0
        %873 = vmatprep.subr.bf16.mxu0 0
        %874 = vmatpush2.bf16.msra.mxu0 0
        %875 = vmatprep.subr.bf16.mxu0 0
        %876 = vmatpush2.bf16.msra.mxu0 0
        %877 = vmatprep.subr.bf16.mxu0 0
        %878 = vmatpush2.bf16.msra.mxu0 0
        %879 = vmatprep.subr.bf16.mxu0 0
        %880 = vmatpush2.bf16.msra.mxu0 0
        %881 = vmatprep.subr.bf16.mxu0 0
        %882 = vmatpush2.bf16.msra.mxu0 0
        %883 = vmatprep.subr.bf16.mxu0 0
        %884 = vmatpush2.bf16.msra.mxu0 0
        %885 = vmatprep.mubr.bf16.mxu0 0
        %886 = vmatmul.mubr.bf16.gmra.mxu0 %v562
        %v887 = vpop.f32.mrf.mxu0
        %v888 = vadd.f32 0.0, %v887
        %v889 = vpop.f32.mrf.mxu0
        %v890 = vpop.f32.mrf.mxu0
        %v891 = vpop.f32.mrf.mxu0
        %892 = vdwg.mxu0
        %v893 = vld [vmem:[%s1] sm:$0xf]
        %v894 = vld [vmem:[%s1 + $0x4] sm:$0xf]
        %v895 = vld [vmem:[%s1 + $0x8] sm:$0xf]
        %v896 = vld [vmem:[%s1 + $0xc] sm:$0xf]
        %v901 = vunpack.c.l.b16 %v893
        %v902 = vunpack.c.l.b16 %v894
        %v903 = vunpack.c.l.b16 %v895
        %v904 = vunpack.c.l.b16 %v896
        %v905 = vpack.c.b16 %v902, %v901
        %v906 = vpack.c.b16 %v904, %v903
        %909 = vmatprep.subr.bf16.mxu0 0
        %910 = vmatpush1.bf16.msra.mxu0 0
        %911 = vmatprep.subr.bf16.mxu0 0
        %912 = vmatpush1.bf16.msra.mxu0 0
        %913 = vmatprep.subr.bf16.mxu0 0
        %914 = vmatpush1.bf16.msra.mxu0 0
        %915 = vmatprep.subr.bf16.mxu0 0
        %916 = vmatpush1.bf16.msra.mxu0 0
        %917 = vmatprep.subr.bf16.mxu0 0
        %918 = vmatpush1.bf16.msra.mxu0 0
        %919 = vmatprep.subr.bf16.mxu0 0
        %920 = vmatpush1.bf16.msra.mxu0 0
        %921 = vmatprep.subr.bf16.mxu0 0
        %922 = vmatpush1.bf16.msra.mxu0 %v906
        %923 = vmatprep.subr.bf16.mxu0 0
        %924 = vmatpush1.bf16.msra.mxu0 %v905
        %925 = vmatprep.subr.bf16.mxu0 0
        %926 = vmatpush2.bf16.msra.mxu0 0
        %927 = vmatprep.subr.bf16.mxu0 0
        %928 = vmatpush2.bf16.msra.mxu0 0
        %929 = vmatprep.subr.bf16.mxu0 0
        %930 = vmatpush2.bf16.msra.mxu0 0
        %931 = vmatprep.subr.bf16.mxu0 0
        %932 = vmatpush2.bf16.msra.mxu0 0
        %933 = vmatprep.subr.bf16.mxu0 0
        %934 = vmatpush2.bf16.msra.mxu0 0
        %935 = vmatprep.subr.bf16.mxu0 0
        %936 = vmatpush2.bf16.msra.mxu0 0
        %937 = vmatprep.subr.bf16.mxu0 0
        %938 = vmatpush2.bf16.msra.mxu0 0
        %939 = vmatprep.subr.bf16.mxu0 0
        %940 = vmatpush2.bf16.msra.mxu0 0
        %941 = vmatprep.mubr.bf16.mxu0 0
        %942 = vmatmul.mubr.bf16.gmra.mxu0 %v562
        %v943 = vpop.f32.mrf.mxu0
        %v944 = vadd.f32 0.0, %v943
        %v945 = vpop.f32.mrf.mxu0
        %v946 = vpop.f32.mrf.mxu0
        %v947 = vpop.f32.mrf.mxu0
        %948 = vdwg.mxu0
        %v949 = vld [vmem:[%s2] sm:$0xf]
        %v950 = vld [vmem:[%s2 + $0x4] sm:$0xf]
        %v951 = vld [vmem:[%s2 + $0x8] sm:$0xf]
        %v952 = vld [vmem:[%s2 + $0xc] sm:$0xf]
        %v957 = vunpack.c.l.b16 %v949
        %v958 = vunpack.c.l.b16 %v950
        %v959 = vunpack.c.l.b16 %v951
        %v960 = vunpack.c.l.b16 %v952
        %v961 = vpack.c.b16 %v958, %v957
        %v962 = vpack.c.b16 %v960, %v959
        %965 = vmatprep.subr.bf16.mxu0 0
        %966 = vmatpush1.bf16.msra.mxu0 0
        %967 = vmatprep.subr.bf16.mxu0 0
        %968 = vmatpush1.bf16.msra.mxu0 0
        %969 = vmatprep.subr.bf16.mxu0 0
        %970 = vmatpush1.bf16.msra.mxu0 0
        %971 = vmatprep.subr.bf16.mxu0 0
        %972 = vmatpush1.bf16.msra.mxu0 0
        %973 = vmatprep.subr.bf16.mxu0 0
        %974 = vmatpush1.bf16.msra.mxu0 0
        %975 = vmatprep.subr.bf16.mxu0 0
        %976 = vmatpush1.bf16.msra.mxu0 0
        %977 = vmatprep.subr.bf16.mxu0 0
        %978 = vmatpush1.bf16.msra.mxu0 %v962
        %979 = vmatprep.subr.bf16.mxu0 0
        %980 = vmatpush1.bf16.msra.mxu0 %v961
        %981 = vmatprep.subr.bf16.mxu0 0
        %982 = vmatpush2.bf16.msra.mxu0 0
        %983 = vmatprep.subr.bf16.mxu0 0
        %984 = vmatpush2.bf16.msra.mxu0 0
        %985 = vmatprep.subr.bf16.mxu0 0
        %986 = vmatpush2.bf16.msra.mxu0 0
        %987 = vmatprep.subr.bf16.mxu0 0
        %988 = vmatpush2.bf16.msra.mxu0 0
        %989 = vmatprep.subr.bf16.mxu0 0
        %990 = vmatpush2.bf16.msra.mxu0 0
        %991 = vmatprep.subr.bf16.mxu0 0
        %992 = vmatpush2.bf16.msra.mxu0 0
        %993 = vmatprep.subr.bf16.mxu0 0
        %994 = vmatpush2.bf16.msra.mxu0 0
        %995 = vmatprep.subr.bf16.mxu0 0
        %996 = vmatpush2.bf16.msra.mxu0 0
        %997 = vmatprep.mubr.bf16.mxu0 0
        %998 = vmatmul.mubr.bf16.gmra.mxu0 %v562
        %v999 = vpop.f32.mrf.mxu0
        %v1000 = vadd.f32 0.0, %v999
        %v1001 = vpop.f32.mrf.mxu0
        %v1002 = vpop.f32.mrf.mxu0
        %v1003 = vpop.f32.mrf.mxu0
        %1004 = vdwg.mxu0
        %v1005 = vmul.f32 %v944, %v519
        %v1006 = vmul.f32 %v1000, %v520
        %v1007 = vadd.f32 %v1005, %v1006
        %vm1008 = vcmask 64512
        %v1010 = vsel %vm1008, %v1007, 0
        %v1013 = vsel %vm1008, %v662, 0
        %1015 = vmatprep.subr.mxu0 0.0
        %1016 = vmatpush1.xpose.msra.mxu0 0.0
        %1017 = vmatprep.subr.mxu0 0.0
        %1018 = vmatpush1.xpose.msra.mxu0 0.0
        %1019 = vmatprep.subr.mxu0 0.0
        %1020 = vmatpush1.xpose.msra.mxu0 0.0
        %1021 = vmatprep.subr.mxu0 0.0
        %1022 = vmatpush1.xpose.msra.mxu0 0.0
        %1023 = vmatprep.subr.mxu0 0.0
        %1024 = vmatpush1.xpose.msra.mxu0 0.0
        %1025 = vmatprep.subr.mxu0 0.0
        %1026 = vmatpush1.xpose.msra.mxu0 0.0
        %1027 = vmatprep.subr.mxu0 0.0
        %1028 = vmatpush1.xpose.msra.mxu0 0.0
        %1029 = vmatprep.subr.mxu0 0.0
        %1030 = vmatpush1.xpose.msra.mxu0 0.0
        %1031 = vmatprep.subr.mxu0 0.0
        %1032 = vmatpush1.xpose.msra.mxu0 0.0
        %1033 = vmatprep.subr.mxu0 0.0
        %1034 = vmatpush1.xpose.msra.mxu0 0.0
        %1035 = vmatprep.subr.mxu0 0.0
        %1036 = vmatpush1.xpose.msra.mxu0 0.0
        %1037 = vmatprep.subr.mxu0 0.0
        %1038 = vmatpush1.xpose.msra.mxu0 0.0
        %1039 = vmatprep.subr.mxu0 0.0
        %1040 = vmatpush1.xpose.msra.mxu0 0.0
        %1041 = vmatprep.subr.mxu0 0.0
        %1042 = vmatpush1.xpose.msra.mxu0 0.0
        %1043 = vmatprep.subr.mxu0 0.0
        %1044 = vmatpush1.xpose.msra.mxu0 0.0
        %1045 = vmatprep.subr.mxu0 0.0
        %1046 = vmatpush1.xpose.msra.mxu0 %v1013
        %1047 = vmatprep.subr.mxu0 0.0
        %1048 = vmatpush2.xpose.msra.mxu0 0.0
        %1049 = vmatprep.subr.mxu0 0.0
        %1050 = vmatpush2.xpose.msra.mxu0 0.0
        %1051 = vmatprep.subr.mxu0 0.0
        %1052 = vmatpush2.xpose.msra.mxu0 0.0
        %1053 = vmatprep.subr.mxu0 0.0
        %1054 = vmatpush2.xpose.msra.mxu0 0.0
        %1055 = vmatprep.subr.mxu0 0.0
        %1056 = vmatpush2.xpose.msra.mxu0 0.0
        %1057 = vmatprep.subr.mxu0 0.0
        %1058 = vmatpush2.xpose.msra.mxu0 0.0
        %1059 = vmatprep.subr.mxu0 0.0
        %1060 = vmatpush2.xpose.msra.mxu0 0.0
        %1061 = vmatprep.subr.mxu0 0.0
        %1062 = vmatpush2.xpose.msra.mxu0 0.0
        %1063 = vmatprep.subr.mxu0 0.0
        %1064 = vmatpush2.xpose.msra.mxu0 0.0
        %1065 = vmatprep.subr.mxu0 0.0
        %1066 = vmatpush2.xpose.msra.mxu0 0.0
        %1067 = vmatprep.subr.mxu0 0.0
        %1068 = vmatpush2.xpose.msra.mxu0 0.0
        %1069 = vmatprep.subr.mxu0 0.0
        %1070 = vmatpush2.xpose.msra.mxu0 0.0
        %1071 = vmatprep.subr.mxu0 0.0
        %1072 = vmatpush2.xpose.msra.mxu0 0.0
        %1073 = vmatprep.subr.mxu0 0.0
        %1074 = vmatpush2.xpose.msra.mxu0 0.0
        %1075 = vmatprep.subr.mxu0 0.0
        %1076 = vmatpush2.xpose.msra.mxu0 0.0
        %1077 = vmatprep.subr.mxu0 0.0
        %1078 = vmatpush2.xpose.msra.mxu0 0.0
        %1079 = vmatprep.mubr.f32.mxu0 0.0
        %1080 = vmatmul.mubr.f32.gmra.mxu0 %v1010
        %v1081 = vpop.f32.mrf.mxu0
        %v1082 = vadd.f32 0.0, %v1081
        %v1083 = vpop.f32.mrf.mxu0
        %1084 = vdwg.mxu0
        %v1085 = vmul.f32 %v1082, 0.35355338
        %v1086 = vsel %vm525, %v1085, -1e+30
        %v1087 = vsel %vm1008, %v1086, -inf
        %1088 = vmax.xlane.f32.xlu0 %v1087
        %v1089 = vpop.xlane.xlu0 %1088
        %v1090 = vsub.f32 %v1086, %v1089
        %v1091 = vmul.f32 %v1090, 1.442695
        %v1092 = vpow.pop %v1091
        %v1093 = vsel %vm1008, %v1092, 0.0
        %1094 = vadd.xlane.f32.xlu0 %v1093
        %v1095 = vpop.xlane.xlu0 %1094
        %v1096 = vrcp.pop %v1095
        %v1097 = vmul.f32 %v1092, %v1096
        %v1099 = vsel %vm1008, %v1097, 0
        %1101 = vmatprep.subr.mxu0 0.0
        %1102 = vmatpush1.msra.mxu0 0.0
        %1103 = vmatprep.subr.mxu0 0.0
        %1104 = vmatpush1.msra.mxu0 0.0
        %1105 = vmatprep.subr.mxu0 0.0
        %1106 = vmatpush1.msra.mxu0 0.0
        %1107 = vmatprep.subr.mxu0 0.0
        %1108 = vmatpush1.msra.mxu0 0.0
        %1109 = vmatprep.subr.mxu0 0.0
        %1110 = vmatpush1.msra.mxu0 0.0
        %1111 = vmatprep.subr.mxu0 0.0
        %1112 = vmatpush1.msra.mxu0 0.0
        %1113 = vmatprep.subr.mxu0 0.0
        %1114 = vmatpush1.msra.mxu0 0.0
        %1115 = vmatprep.subr.mxu0 0.0
        %1116 = vmatpush1.msra.mxu0 0.0
        %1117 = vmatprep.subr.mxu0 0.0
        %1118 = vmatpush1.msra.mxu0 0.0
        %1119 = vmatprep.subr.mxu0 0.0
        %1120 = vmatpush1.msra.mxu0 0.0
        %1121 = vmatprep.subr.mxu0 0.0
        %1122 = vmatpush1.msra.mxu0 0.0
        %1123 = vmatprep.subr.mxu0 0.0
        %1124 = vmatpush1.msra.mxu0 0.0
        %1125 = vmatprep.subr.mxu0 0.0
        %1126 = vmatpush1.msra.mxu0 0.0
        %1127 = vmatprep.subr.mxu0 0.0
        %1128 = vmatpush1.msra.mxu0 0.0
        %1129 = vmatprep.subr.mxu0 0.0
        %1130 = vmatpush1.msra.mxu0 0.0
        %1131 = vmatprep.subr.mxu0 0.0
        %1132 = vmatpush1.msra.mxu0 %v714
        %1133 = vmatprep.subr.mxu0 0.0
        %1134 = vmatpush2.msra.mxu0 0.0
        %1135 = vmatprep.subr.mxu0 0.0
        %1136 = vmatpush2.msra.mxu0 0.0
        %1137 = vmatprep.subr.mxu0 0.0
        %1138 = vmatpush2.msra.mxu0 0.0
        %1139 = vmatprep.subr.mxu0 0.0
        %1140 = vmatpush2.msra.mxu0 0.0
        %1141 = vmatprep.subr.mxu0 0.0
        %1142 = vmatpush2.msra.mxu0 0.0
        %1143 = vmatprep.subr.mxu0 0.0
        %1144 = vmatpush2.msra.mxu0 0.0
        %1145 = vmatprep.subr.mxu0 0.0
        %1146 = vmatpush2.msra.mxu0 0.0
        %1147 = vmatprep.subr.mxu0 0.0
        %1148 = vmatpush2.msra.mxu0 0.0
        %1149 = vmatprep.subr.mxu0 0.0
        %1150 = vmatpush2.msra.mxu0 0.0
        %1151 = vmatprep.subr.mxu0 0.0
        %1152 = vmatpush2.msra.mxu0 0.0
        %1153 = vmatprep.subr.mxu0 0.0
        %1154 = vmatpush2.msra.mxu0 0.0
        %1155 = vmatprep.subr.mxu0 0.0
        %1156 = vmatpush2.msra.mxu0 0.0
        %1157 = vmatprep.subr.mxu0 0.0
        %1158 = vmatpush2.msra.mxu0 0.0
        %1159 = vmatprep.subr.mxu0 0.0
        %1160 = vmatpush2.msra.mxu0 0.0
        %1161 = vmatprep.subr.mxu0 0.0
        %1162 = vmatpush2.msra.mxu0 0.0
        %1163 = vmatprep.subr.mxu0 0.0
        %1164 = vmatpush2.msra.mxu0 0.0
        %1165 = vmatprep.mubr.f32.mxu0 0.0
        %1166 = vmatmul.mubr.f32.gmra.mxu0 %v1099
        %v1167 = vpop.f32.mrf.mxu0
        %v1168 = vadd.f32 0.0, %v1167
        %v1169 = vpop.f32.mrf.mxu0
        %1170 = vdwg.mxu0
        %v1171 = vpack.c.bf16 %v1168, %v1168
        %v1172 = vld [vmem:[%s6] sm:$0xf]
        %s1173 = scalar_lea.vmem %s1, 16
        %v1174 = vld [vmem:[%s1173] sm:$0xf]
        %v1175 = vld [vmem:[%s1173 + $0x4] sm:$0xf]
        %v1176 = vld [vmem:[%s1173 + $0x8] sm:$0xf]
        %v1177 = vld [vmem:[%s1173 + $0xc] sm:$0xf]
        %v1182 = vunpack.c.l.b16 %v1174
        %v1183 = vunpack.c.l.b16 %v1175
        %v1184 = vunpack.c.l.b16 %v1176
        %v1185 = vunpack.c.l.b16 %v1177
        %v1186 = vpack.c.b16 %v1183, %v1182
        %v1187 = vpack.c.b16 %v1185, %v1184
        %1190 = vmatprep.subr.bf16.mxu0 0
        %1191 = vmatpush1.bf16.msra.mxu0 0
        %1192 = vmatprep.subr.bf16.mxu0 0
        %1193 = vmatpush1.bf16.msra.mxu0 0
        %1194 = vmatprep.subr.bf16.mxu0 0
        %1195 = vmatpush1.bf16.msra.mxu0 0
        %1196 = vmatprep.subr.bf16.mxu0 0
        %1197 = vmatpush1.bf16.msra.mxu0 0
        %1198 = vmatprep.subr.bf16.mxu0 0
        %1199 = vmatpush1.bf16.msra.mxu0 0
        %1200 = vmatprep.subr.bf16.mxu0 0
        %1201 = vmatpush1.bf16.msra.mxu0 0
        %1202 = vmatprep.subr.bf16.mxu0 0
        %1203 = vmatpush1.bf16.msra.mxu0 %v1187
        %1204 = vmatprep.subr.bf16.mxu0 0
        %1205 = vmatpush1.bf16.msra.mxu0 %v1186
        %1206 = vmatprep.subr.bf16.mxu0 0
        %1207 = vmatpush2.bf16.msra.mxu0 0
        %1208 = vmatprep.subr.bf16.mxu0 0
        %1209 = vmatpush2.bf16.msra.mxu0 0
        %1210 = vmatprep.subr.bf16.mxu0 0
        %1211 = vmatpush2.bf16.msra.mxu0 0
        %1212 = vmatprep.subr.bf16.mxu0 0
        %1213 = vmatpush2.bf16.msra.mxu0 0
        %1214 = vmatprep.subr.bf16.mxu0 0
        %1215 = vmatpush2.bf16.msra.mxu0 0
        %1216 = vmatprep.subr.bf16.mxu0 0
        %1217 = vmatpush2.bf16.msra.mxu0 0
        %1218 = vmatprep.subr.bf16.mxu0 0
        %1219 = vmatpush2.bf16.msra.mxu0 0
        %1220 = vmatprep.subr.bf16.mxu0 0
        %1221 = vmatpush2.bf16.msra.mxu0 0
        %1222 = vmatprep.mubr.bf16.mxu0 0
        %1223 = vmatmul.mubr.bf16.gmra.mxu0 %v562
        %v1224 = vpop.f32.mrf.mxu0
        %v1225 = vadd.f32 0.0, %v1224
        %v1226 = vpop.f32.mrf.mxu0
        %v1227 = vpop.f32.mrf.mxu0
        %v1228 = vpop.f32.mrf.mxu0
        %1229 = vdwg.mxu0
        %s1230 = scalar_lea.vmem %s2, 16
        %v1231 = vld [vmem:[%s1230] sm:$0xf]
        %v1232 = vld [vmem:[%s1230 + $0x4] sm:$0xf]
        %v1233 = vld [vmem:[%s1230 + $0x8] sm:$0xf]
        %v1234 = vld [vmem:[%s1230 + $0xc] sm:$0xf]
        %v1239 = vunpack.c.l.b16 %v1231
        %v1240 = vunpack.c.l.b16 %v1232
        %v1241 = vunpack.c.l.b16 %v1233
        %v1242 = vunpack.c.l.b16 %v1234
        %v1243 = vpack.c.b16 %v1240, %v1239
        %v1244 = vpack.c.b16 %v1242, %v1241
        %1247 = vmatprep.subr.bf16.mxu0 0
        %1248 = vmatpush1.bf16.msra.mxu0 0
        %1249 = vmatprep.subr.bf16.mxu0 0
        %1250 = vmatpush1.bf16.msra.mxu0 0
        %1251 = vmatprep.subr.bf16.mxu0 0
        %1252 = vmatpush1.bf16.msra.mxu0 0
        %1253 = vmatprep.subr.bf16.mxu0 0
        %1254 = vmatpush1.bf16.msra.mxu0 0
        %1255 = vmatprep.subr.bf16.mxu0 0
        %1256 = vmatpush1.bf16.msra.mxu0 0
        %1257 = vmatprep.subr.bf16.mxu0 0
        %1258 = vmatpush1.bf16.msra.mxu0 0
        %1259 = vmatprep.subr.bf16.mxu0 0
        %1260 = vmatpush1.bf16.msra.mxu0 %v1244
        %1261 = vmatprep.subr.bf16.mxu0 0
        %1262 = vmatpush1.bf16.msra.mxu0 %v1243
        %1263 = vmatprep.subr.bf16.mxu0 0
        %1264 = vmatpush2.bf16.msra.mxu0 0
        %1265 = vmatprep.subr.bf16.mxu0 0
        %1266 = vmatpush2.bf16.msra.mxu0 0
        %1267 = vmatprep.subr.bf16.mxu0 0
        %1268 = vmatpush2.bf16.msra.mxu0 0
        %1269 = vmatprep.subr.bf16.mxu0 0
        %1270 = vmatpush2.bf16.msra.mxu0 0
        %1271 = vmatprep.subr.bf16.mxu0 0
        %1272 = vmatpush2.bf16.msra.mxu0 0
        %1273 = vmatprep.subr.bf16.mxu0 0
        %1274 = vmatpush2.bf16.msra.mxu0 0
        %1275 = vmatprep.subr.bf16.mxu0 0
        %1276 = vmatpush2.bf16.msra.mxu0 0
        %1277 = vmatprep.subr.bf16.mxu0 0
        %1278 = vmatpush2.bf16.msra.mxu0 0
        %1279 = vmatprep.mubr.bf16.mxu0 0
        %1280 = vmatmul.mubr.bf16.gmra.mxu0 %v562
        %v1281 = vpop.f32.mrf.mxu0
        %v1282 = vadd.f32 0.0, %v1281
        %v1283 = vpop.f32.mrf.mxu0
        %v1284 = vpop.f32.mrf.mxu0
        %v1285 = vpop.f32.mrf.mxu0
        %1286 = vdwg.mxu0
        %v1287 = vmul.f32 %v1225, %v519
        %v1288 = vmul.f32 %v1282, %v520
        %v1289 = vadd.f32 %v1287, %v1288
        %v1291 = vsel %vm1008, %v1289, 0
        %1293 = vmatprep.subr.mxu0 0.0
        %1294 = vmatpush1.xpose.msra.mxu0 0.0
        %1295 = vmatprep.subr.mxu0 0.0
        %1296 = vmatpush1.xpose.msra.mxu0 0.0
        %1297 = vmatprep.subr.mxu0 0.0
        %1298 = vmatpush1.xpose.msra.mxu0 0.0
        %1299 = vmatprep.subr.mxu0 0.0
        %1300 = vmatpush1.xpose.msra.mxu0 0.0
        %1301 = vmatprep.subr.mxu0 0.0
        %1302 = vmatpush1.xpose.msra.mxu0 0.0
        %1303 = vmatprep.subr.mxu0 0.0
        %1304 = vmatpush1.xpose.msra.mxu0 0.0
        %1305 = vmatprep.subr.mxu0 0.0
        %1306 = vmatpush1.xpose.msra.mxu0 0.0
        %1307 = vmatprep.subr.mxu0 0.0
        %1308 = vmatpush1.xpose.msra.mxu0 0.0
        %1309 = vmatprep.subr.mxu0 0.0
        %1310 = vmatpush1.xpose.msra.mxu0 0.0
        %1311 = vmatprep.subr.mxu0 0.0
        %1312 = vmatpush1.xpose.msra.mxu0 0.0
        %1313 = vmatprep.subr.mxu0 0.0
        %1314 = vmatpush1.xpose.msra.mxu0 0.0
        %1315 = vmatprep.subr.mxu0 0.0
        %1316 = vmatpush1.xpose.msra.mxu0 0.0
        %1317 = vmatprep.subr.mxu0 0.0
        %1318 = vmatpush1.xpose.msra.mxu0 0.0
        %1319 = vmatprep.subr.mxu0 0.0
        %1320 = vmatpush1.xpose.msra.mxu0 0.0
        %1321 = vmatprep.subr.mxu0 0.0
        %1322 = vmatpush1.xpose.msra.mxu0 0.0
        %1323 = vmatprep.subr.mxu0 0.0
        %1324 = vmatpush1.xpose.msra.mxu0 %v1013
        %1325 = vmatprep.subr.mxu0 0.0
        %1326 = vmatpush2.xpose.msra.mxu0 0.0
        %1327 = vmatprep.subr.mxu0 0.0
        %1328 = vmatpush2.xpose.msra.mxu0 0.0
        %1329 = vmatprep.subr.mxu0 0.0
        %1330 = vmatpush2.xpose.msra.mxu0 0.0
        %1331 = vmatprep.subr.mxu0 0.0
        %1332 = vmatpush2.xpose.msra.mxu0 0.0
        %1333 = vmatprep.subr.mxu0 0.0
        %1334 = vmatpush2.xpose.msra.mxu0 0.0
        %1335 = vmatprep.subr.mxu0 0.0
        %1336 = vmatpush2.xpose.msra.mxu0 0.0
        %1337 = vmatprep.subr.mxu0 0.0
        %1338 = vmatpush2.xpose.msra.mxu0 0.0
        %1339 = vmatprep.subr.mxu0 0.0
        %1340 = vmatpush2.xpose.msra.mxu0 0.0
        %1341 = vmatprep.subr.mxu0 0.0
        %1342 = vmatpush2.xpose.msra.mxu0 0.0
        %1343 = vmatprep.subr.mxu0 0.0
        %1344 = vmatpush2.xpose.msra.mxu0 0.0
        %1345 = vmatprep.subr.mxu0 0.0
        %1346 = vmatpush2.xpose.msra.mxu0 0.0
        %1347 = vmatprep.subr.mxu0 0.0
        %1348 = vmatpush2.xpose.msra.mxu0 0.0
        %1349 = vmatprep.subr.mxu0 0.0
        %1350 = vmatpush2.xpose.msra.mxu0 0.0
        %1351 = vmatprep.subr.mxu0 0.0
        %1352 = vmatpush2.xpose.msra.mxu0 0.0
        %1353 = vmatprep.subr.mxu0 0.0
        %1354 = vmatpush2.xpose.msra.mxu0 0.0
        %1355 = vmatprep.subr.mxu0 0.0
        %1356 = vmatpush2.xpose.msra.mxu0 0.0
        %1357 = vmatprep.mubr.f32.mxu0 0.0
        %1358 = vmatmul.mubr.f32.gmra.mxu0 %v1291
        %v1359 = vpop.f32.mrf.mxu0
        %v1360 = vadd.f32 0.0, %v1359
        %v1361 = vpop.f32.mrf.mxu0
        %1362 = vdwg.mxu0
        %v1363 = vmul.f32 %v1360, 0.35355338
        %v1364 = vsel %vm525, %v1363, -1e+30
        %v1365 = vsel %vm1008, %v1364, -inf
        %1366 = vmax.xlane.f32.xlu0 %v1365
        %v1367 = vpop.xlane.xlu0 %1366
        %v1368 = vsub.f32 %v1364, %v1367
        %v1369 = vmul.f32 %v1368, 1.442695
        %v1370 = vpow.pop %v1369
        %v1371 = vsel %vm1008, %v1370, 0.0
        %1372 = vadd.xlane.f32.xlu0 %v1371
        %v1373 = vpop.xlane.xlu0 %1372
        %v1374 = vrcp.pop %v1373
        %v1375 = vmul.f32 %v1370, %v1374
        %v1377 = vsel %vm1008, %v1375, 0
        %1379 = vmatprep.subr.mxu0 0.0
        %1380 = vmatpush1.msra.mxu0 0.0
        %1381 = vmatprep.subr.mxu0 0.0
        %1382 = vmatpush1.msra.mxu0 0.0
        %1383 = vmatprep.subr.mxu0 0.0
        %1384 = vmatpush1.msra.mxu0 0.0
        %1385 = vmatprep.subr.mxu0 0.0
        %1386 = vmatpush1.msra.mxu0 0.0
        %1387 = vmatprep.subr.mxu0 0.0
        %1388 = vmatpush1.msra.mxu0 0.0
        %1389 = vmatprep.subr.mxu0 0.0
        %1390 = vmatpush1.msra.mxu0 0.0
        %1391 = vmatprep.subr.mxu0 0.0
        %1392 = vmatpush1.msra.mxu0 0.0
        %1393 = vmatprep.subr.mxu0 0.0
        %1394 = vmatpush1.msra.mxu0 0.0
        %1395 = vmatprep.subr.mxu0 0.0
        %1396 = vmatpush1.msra.mxu0 0.0
        %1397 = vmatprep.subr.mxu0 0.0
        %1398 = vmatpush1.msra.mxu0 0.0
        %1399 = vmatprep.subr.mxu0 0.0
        %1400 = vmatpush1.msra.mxu0 0.0
        %1401 = vmatprep.subr.mxu0 0.0
        %1402 = vmatpush1.msra.mxu0 0.0
        %1403 = vmatprep.subr.mxu0 0.0
        %1404 = vmatpush1.msra.mxu0 0.0
        %1405 = vmatprep.subr.mxu0 0.0
        %1406 = vmatpush1.msra.mxu0 0.0
        %1407 = vmatprep.subr.mxu0 0.0
        %1408 = vmatpush1.msra.mxu0 0.0
        %1409 = vmatprep.subr.mxu0 0.0
        %1410 = vmatpush1.msra.mxu0 %v714
        %1411 = vmatprep.subr.mxu0 0.0
        %1412 = vmatpush2.msra.mxu0 0.0
        %1413 = vmatprep.subr.mxu0 0.0
        %1414 = vmatpush2.msra.mxu0 0.0
        %1415 = vmatprep.subr.mxu0 0.0
        %1416 = vmatpush2.msra.mxu0 0.0
        %1417 = vmatprep.subr.mxu0 0.0
        %1418 = vmatpush2.msra.mxu0 0.0
        %1419 = vmatprep.subr.mxu0 0.0
        %1420 = vmatpush2.msra.mxu0 0.0
        %1421 = vmatprep.subr.mxu0 0.0
        %1422 = vmatpush2.msra.mxu0 0.0
        %1423 = vmatprep.subr.mxu0 0.0
        %1424 = vmatpush2.msra.mxu0 0.0
        %1425 = vmatprep.subr.mxu0 0.0
        %1426 = vmatpush2.msra.mxu0 0.0
        %1427 = vmatprep.subr.mxu0 0.0
        %1428 = vmatpush2.msra.mxu0 0.0
        %1429 = vmatprep.subr.mxu0 0.0
        %1430 = vmatpush2.msra.mxu0 0.0
        %1431 = vmatprep.subr.mxu0 0.0
        %1432 = vmatpush2.msra.mxu0 0.0
        %1433 = vmatprep.subr.mxu0 0.0
        %1434 = vmatpush2.msra.mxu0 0.0
        %1435 = vmatprep.subr.mxu0 0.0
        %1436 = vmatpush2.msra.mxu0 0.0
        %1437 = vmatprep.subr.mxu0 0.0
        %1438 = vmatpush2.msra.mxu0 0.0
        %1439 = vmatprep.subr.mxu0 0.0
        %1440 = vmatpush2.msra.mxu0 0.0
        %1441 = vmatprep.subr.mxu0 0.0
        %1442 = vmatpush2.msra.mxu0 0.0
        %1443 = vmatprep.mubr.f32.mxu0 0.0
        %1444 = vmatmul.mubr.f32.gmra.mxu0 %v1377
        %v1445 = vpop.f32.mrf.mxu0
        %v1446 = vadd.f32 0.0, %v1445
        %v1447 = vpop.f32.mrf.mxu0
        %1448 = vdwg.mxu0
        %v1449 = vpack.c.bf16 %v1446, %v1446
        %s1450 = scalar_lea.vmem %s6, 4
        %v1451 = vld [vmem:[%s1450] sm:$0xf]
        %v1453 = vsel %vm1008, %v1449, 0
        %vm1455 = vcmask 1043456
        %v1457 = vsel %vm1455, %v1451, 0
        %1459 = vmatprep.subr.bf16.mxu0 0
        %1460 = vmatpush1.bf16.msra.mxu0 0
        %1461 = vmatprep.subr.bf16.mxu0 0
        %1462 = vmatpush1.bf16.msra.mxu0 0
        %1463 = vmatprep.subr.bf16.mxu0 0
        %1464 = vmatpush1.bf16.msra.mxu0 0
        %1465 = vmatprep.subr.bf16.mxu0 0
        %1466 = vmatpush1.bf16.msra.mxu0 0
        %1467 = vmatprep.subr.bf16.mxu0 0
        %1468 = vmatpush1.bf16.msra.mxu0 0
        %1469 = vmatprep.subr.bf16.mxu0 0
        %1470 = vmatpush1.bf16.msra.mxu0 0
        %1471 = vmatprep.subr.bf16.mxu0 0
        %1472 = vmatpush1.bf16.msra.mxu0 0
        %1473 = vmatprep.subr.bf16.mxu0 0
        %1474 = vmatpush1.bf16.msra.mxu0 %v1457
        %1475 = vmatprep.subr.bf16.mxu0 0
        %1476 = vmatpush2.bf16.msra.mxu0 0
        %1477 = vmatprep.subr.bf16.mxu0 0
        %1478 = vmatpush2.bf16.msra.mxu0 0
        %1479 = vmatprep.subr.bf16.mxu0 0
        %1480 = vmatpush2.bf16.msra.mxu0 0
        %1481 = vmatprep.subr.bf16.mxu0 0
        %1482 = vmatpush2.bf16.msra.mxu0 0
        %1483 = vmatprep.subr.bf16.mxu0 0
        %1484 = vmatpush2.bf16.msra.mxu0 0
        %1485 = vmatprep.subr.bf16.mxu0 0
        %1486 = vmatpush2.bf16.msra.mxu0 0
        %1487 = vmatprep.subr.bf16.mxu0 0
        %1488 = vmatpush2.bf16.msra.mxu0 0
        %1489 = vmatprep.subr.bf16.mxu0 0
        %1490 = vmatpush2.bf16.msra.mxu0 0
        %1491 = vmatprep.mubr.bf16.mxu0 0
        %1492 = vmatmul.mubr.bf16.gmra.mxu0 %v1453
        %v1493 = vpop.f32.mrf.mxu0
        %v1494 = vadd.f32 0.0, %v1493
        %v1495 = vpop.f32.mrf.mxu0
        %v1496 = vpop.f32.mrf.mxu0
        %v1497 = vpop.f32.mrf.mxu0
        %1498 = vdwg.mxu0
        %v1500 = vsel %vm1008, %v1171, 0
        %v1503 = vsel %vm1455, %v1172, 0
        %1505 = vmatprep.subr.bf16.mxu0 0
        %1506 = vmatpush1.bf16.msra.mxu0 0
        %1507 = vmatprep.subr.bf16.mxu0 0
        %1508 = vmatpush1.bf16.msra.mxu0 0
        %1509 = vmatprep.subr.bf16.mxu0 0
        %1510 = vmatpush1.bf16.msra.mxu0 0
        %1511 = vmatprep.subr.bf16.mxu0 0
        %1512 = vmatpush1.bf16.msra.mxu0 0
        %1513 = vmatprep.subr.bf16.mxu0 0
        %1514 = vmatpush1.bf16.msra.mxu0 0
        %1515 = vmatprep.subr.bf16.mxu0 0
        %1516 = vmatpush1.bf16.msra.mxu0 0
        %1517 = vmatprep.subr.bf16.mxu0 0
        %1518 = vmatpush1.bf16.msra.mxu0 0
        %1519 = vmatprep.subr.bf16.mxu0 0
        %1520 = vmatpush1.bf16.msra.mxu0 %v1503
        %1521 = vmatprep.subr.bf16.mxu0 0
        %1522 = vmatpush2.bf16.msra.mxu0 0
        %1523 = vmatprep.subr.bf16.mxu0 0
        %1524 = vmatpush2.bf16.msra.mxu0 0
        %1525 = vmatprep.subr.bf16.mxu0 0
        %1526 = vmatpush2.bf16.msra.mxu0 0
        %1527 = vmatprep.subr.bf16.mxu0 0
        %1528 = vmatpush2.bf16.msra.mxu0 0
        %1529 = vmatprep.subr.bf16.mxu0 0
        %1530 = vmatpush2.bf16.msra.mxu0 0
        %1531 = vmatprep.subr.bf16.mxu0 0
        %1532 = vmatpush2.bf16.msra.mxu0 0
        %1533 = vmatprep.subr.bf16.mxu0 0
        %1534 = vmatpush2.bf16.msra.mxu0 0
        %1535 = vmatprep.subr.bf16.mxu0 0
        %1536 = vmatpush2.bf16.msra.mxu0 0
        %1537 = vmatprep.mubr.bf16.mxu0 0
        %1538 = vmatmul.mubr.bf16.gmra.mxu0 %v1500
        %v1539 = vpop.f32.mrf.mxu0
        %v1540 = vadd.f32 %v1494, %v1539
        %v1541 = vpop.f32.mrf.mxu0
        %v1542 = vpop.f32.mrf.mxu0
        %v1543 = vpop.f32.mrf.mxu0
        %1544 = vdwg.mxu0
        %s1545 = scalar_lea.vmem %s1, 32
        %v1546 = vld [vmem:[%s1545] sm:$0xf]
        %v1547 = vld [vmem:[%s1545 + $0x4] sm:$0xf]
        %v1548 = vld [vmem:[%s1545 + $0x8] sm:$0xf]
        %v1549 = vld [vmem:[%s1545 + $0xc] sm:$0xf]
        %v1554 = vunpack.c.l.b16 %v1546
        %v1555 = vunpack.c.l.b16 %v1547
        %v1556 = vunpack.c.l.b16 %v1548
        %v1557 = vunpack.c.l.b16 %v1549
        %v1558 = vpack.c.b16 %v1555, %v1554
        %v1559 = vpack.c.b16 %v1557, %v1556
        %1562 = vmatprep.subr.bf16.mxu0 0
        %1563 = vmatpush1.bf16.msra.mxu0 0
        %1564 = vmatprep.subr.bf16.mxu0 0
        %1565 = vmatpush1.bf16.msra.mxu0 0
        %1566 = vmatprep.subr.bf16.mxu0 0
        %1567 = vmatpush1.bf16.msra.mxu0 0
        %1568 = vmatprep.subr.bf16.mxu0 0
        %1569 = vmatpush1.bf16.msra.mxu0 0
        %1570 = vmatprep.subr.bf16.mxu0 0
        %1571 = vmatpush1.bf16.msra.mxu0 0
        %1572 = vmatprep.subr.bf16.mxu0 0
        %1573 = vmatpush1.bf16.msra.mxu0 0
        %1574 = vmatprep.subr.bf16.mxu0 0
        %1575 = vmatpush1.bf16.msra.mxu0 %v1559
        %1576 = vmatprep.subr.bf16.mxu0 0
        %1577 = vmatpush1.bf16.msra.mxu0 %v1558
        %1578 = vmatprep.subr.bf16.mxu0 0
        %1579 = vmatpush2.bf16.msra.mxu0 0
        %1580 = vmatprep.subr.bf16.mxu0 0
        %1581 = vmatpush2.bf16.msra.mxu0 0
        %1582 = vmatprep.subr.bf16.mxu0 0
        %1583 = vmatpush2.bf16.msra.mxu0 0
        %1584 = vmatprep.subr.bf16.mxu0 0
        %1585 = vmatpush2.bf16.msra.mxu0 0
        %1586 = vmatprep.subr.bf16.mxu0 0
        %1587 = vmatpush2.bf16.msra.mxu0 0
        %1588 = vmatprep.subr.bf16.mxu0 0
        %1589 = vmatpush2.bf16.msra.mxu0 0
        %1590 = vmatprep.subr.bf16.mxu0 0
        %1591 = vmatpush2.bf16.msra.mxu0 0
        %1592 = vmatprep.subr.bf16.mxu0 0
        %1593 = vmatpush2.bf16.msra.mxu0 0
        %1594 = vmatprep.mubr.bf16.mxu0 0
        %1595 = vmatmul.mubr.bf16.gmra.mxu0 %v562
        %v1596 = vpop.f32.mrf.mxu0
        %v1597 = vadd.f32 0.0, %v1596
        %v1598 = vpop.f32.mrf.mxu0
        %v1599 = vpop.f32.mrf.mxu0
        %v1600 = vpop.f32.mrf.mxu0
        %1601 = vdwg.mxu0
        %s1602 = scalar_lea.vmem %s2, 32
        %v1603 = vld [vmem:[%s1602] sm:$0xf]
        %v1604 = vld [vmem:[%s1602 + $0x4] sm:$0xf]
        %v1605 = vld [vmem:[%s1602 + $0x8] sm:$0xf]
        %v1606 = vld [vmem:[%s1602 + $0xc] sm:$0xf]
        %v1611 = vunpack.c.l.b16 %v1603
        %v1612 = vunpack.c.l.b16 %v1604
        %v1613 = vunpack.c.l.b16 %v1605
        %v1614 = vunpack.c.l.b16 %v1606
        %v1615 = vpack.c.b16 %v1612, %v1611
        %v1616 = vpack.c.b16 %v1614, %v1613
        %1619 = vmatprep.subr.bf16.mxu0 0
        %1620 = vmatpush1.bf16.msra.mxu0 0
        %1621 = vmatprep.subr.bf16.mxu0 0
        %1622 = vmatpush1.bf16.msra.mxu0 0
        %1623 = vmatprep.subr.bf16.mxu0 0
        %1624 = vmatpush1.bf16.msra.mxu0 0
        %1625 = vmatprep.subr.bf16.mxu0 0
        %1626 = vmatpush1.bf16.msra.mxu0 0
        %1627 = vmatprep.subr.bf16.mxu0 0
        %1628 = vmatpush1.bf16.msra.mxu0 0
        %1629 = vmatprep.subr.bf16.mxu0 0
        %1630 = vmatpush1.bf16.msra.mxu0 0
        %1631 = vmatprep.subr.bf16.mxu0 0
        %1632 = vmatpush1.bf16.msra.mxu0 %v1616
        %1633 = vmatprep.subr.bf16.mxu0 0
        %1634 = vmatpush1.bf16.msra.mxu0 %v1615
        %1635 = vmatprep.subr.bf16.mxu0 0
        %1636 = vmatpush2.bf16.msra.mxu0 0
        %1637 = vmatprep.subr.bf16.mxu0 0
        %1638 = vmatpush2.bf16.msra.mxu0 0
        %1639 = vmatprep.subr.bf16.mxu0 0
        %1640 = vmatpush2.bf16.msra.mxu0 0
        %1641 = vmatprep.subr.bf16.mxu0 0
        %1642 = vmatpush2.bf16.msra.mxu0 0
        %1643 = vmatprep.subr.bf16.mxu0 0
        %1644 = vmatpush2.bf16.msra.mxu0 0
        %1645 = vmatprep.subr.bf16.mxu0 0
        %1646 = vmatpush2.bf16.msra.mxu0 0
        %1647 = vmatprep.subr.bf16.mxu0 0
        %1648 = vmatpush2.bf16.msra.mxu0 0
        %1649 = vmatprep.subr.bf16.mxu0 0
        %1650 = vmatpush2.bf16.msra.mxu0 0
        %1651 = vmatprep.mubr.bf16.mxu0 0
        %1652 = vmatmul.mubr.bf16.gmra.mxu0 %v562
        %v1653 = vpop.f32.mrf.mxu0
        %v1654 = vadd.f32 0.0, %v1653
        %v1655 = vpop.f32.mrf.mxu0
        %v1656 = vpop.f32.mrf.mxu0
        %v1657 = vpop.f32.mrf.mxu0
        %1658 = vdwg.mxu0
        %v1659 = vmul.f32 %v1597, %v519
        %v1660 = vmul.f32 %v1654, %v520
        %v1661 = vadd.f32 %v1659, %v1660
        %v1663 = vsel %vm1008, %v1661, 0
        %v1666 = vsel %vm1008, %v835, 0
        %1668 = vmatprep.subr.mxu0 0.0
        %1669 = vmatpush1.xpose.msra.mxu0 0.0
        %1670 = vmatprep.subr.mxu0 0.0
        %1671 = vmatpush1.xpose.msra.mxu0 0.0
        %1672 = vmatprep.subr.mxu0 0.0
        %1673 = vmatpush1.xpose.msra.mxu0 0.0
        %1674 = vmatprep.subr.mxu0 0.0
        %1675 = vmatpush1.xpose.msra.mxu0 0.0
        %1676 = vmatprep.subr.mxu0 0.0
        %1677 = vmatpush1.xpose.msra.mxu0 0.0
        %1678 = vmatprep.subr.mxu0 0.0
        %1679 = vmatpush1.xpose.msra.mxu0 0.0
        %1680 = vmatprep.subr.mxu0 0.0
        %1681 = vmatpush1.xpose.msra.mxu0 0.0
        %1682 = vmatprep.subr.mxu0 0.0
        %1683 = vmatpush1.xpose.msra.mxu0 0.0
        %1684 = vmatprep.subr.mxu0 0.0
        %1685 = vmatpush1.xpose.msra.mxu0 0.0
        %1686 = vmatprep.subr.mxu0 0.0
        %1687 = vmatpush1.xpose.msra.mxu0 0.0
        %1688 = vmatprep.subr.mxu0 0.0
        %1689 = vmatpush1.xpose.msra.mxu0 0.0
        %1690 = vmatprep.subr.mxu0 0.0
        %1691 = vmatpush1.xpose.msra.mxu0 0.0
        %1692 = vmatprep.subr.mxu0 0.0
        %1693 = vmatpush1.xpose.msra.mxu0 0.0
        %1694 = vmatprep.subr.mxu0 0.0
        %1695 = vmatpush1.xpose.msra.mxu0 0.0
        %1696 = vmatprep.subr.mxu0 0.0
        %1697 = vmatpush1.xpose.msra.mxu0 0.0
        %1698 = vmatprep.subr.mxu0 0.0
        %1699 = vmatpush1.xpose.msra.mxu0 %v1666
        %1700 = vmatprep.subr.mxu0 0.0
        %1701 = vmatpush2.xpose.msra.mxu0 0.0
        %1702 = vmatprep.subr.mxu0 0.0
        %1703 = vmatpush2.xpose.msra.mxu0 0.0
        %1704 = vmatprep.subr.mxu0 0.0
        %1705 = vmatpush2.xpose.msra.mxu0 0.0
        %1706 = vmatprep.subr.mxu0 0.0
        %1707 = vmatpush2.xpose.msra.mxu0 0.0
        %1708 = vmatprep.subr.mxu0 0.0
        %1709 = vmatpush2.xpose.msra.mxu0 0.0
        %1710 = vmatprep.subr.mxu0 0.0
        %1711 = vmatpush2.xpose.msra.mxu0 0.0
        %1712 = vmatprep.subr.mxu0 0.0
        %1713 = vmatpush2.xpose.msra.mxu0 0.0
        %1714 = vmatprep.subr.mxu0 0.0
        %1715 = vmatpush2.xpose.msra.mxu0 0.0
        %1716 = vmatprep.subr.mxu0 0.0
        %1717 = vmatpush2.xpose.msra.mxu0 0.0
        %1718 = vmatprep.subr.mxu0 0.0
        %1719 = vmatpush2.xpose.msra.mxu0 0.0
        %1720 = vmatprep.subr.mxu0 0.0
        %1721 = vmatpush2.xpose.msra.mxu0 0.0
        %1722 = vmatprep.subr.mxu0 0.0
        %1723 = vmatpush2.xpose.msra.mxu0 0.0
        %1724 = vmatprep.subr.mxu0 0.0
        %1725 = vmatpush2.xpose.msra.mxu0 0.0
        %1726 = vmatprep.subr.mxu0 0.0
        %1727 = vmatpush2.xpose.msra.mxu0 0.0
        %1728 = vmatprep.subr.mxu0 0.0
        %1729 = vmatpush2.xpose.msra.mxu0 0.0
        %1730 = vmatprep.subr.mxu0 0.0
        %1731 = vmatpush2.xpose.msra.mxu0 0.0
        %1732 = vmatprep.mubr.f32.mxu0 0.0
        %1733 = vmatmul.mubr.f32.gmra.mxu0 %v1663
        %v1734 = vpop.f32.mrf.mxu0
        %v1735 = vadd.f32 0.0, %v1734
        %v1736 = vpop.f32.mrf.mxu0
        %1737 = vdwg.mxu0
        %v1738 = vmul.f32 %v1735, 0.35355338
        %v1739 = vsel %vm525, %v1738, -1e+30
        %v1740 = vsel %vm1008, %v1739, -inf
        %1741 = vmax.xlane.f32.xlu0 %v1740
        %v1742 = vpop.xlane.xlu0 %1741
        %v1743 = vsub.f32 %v1739, %v1742
        %v1744 = vmul.f32 %v1743, 1.442695
        %v1745 = vpow.pop %v1744
        %v1746 = vsel %vm1008, %v1745, 0.0
        %1747 = vadd.xlane.f32.xlu0 %v1746
        %v1748 = vpop.xlane.xlu0 %1747
        %v1749 = vrcp.pop %v1748
        %v1750 = vmul.f32 %v1745, %v1749
        %v1752 = vsel %vm1008, %v1750, 0
        %1754 = vmatprep.subr.mxu0 0.0
        %1755 = vmatpush1.msra.mxu0 0.0
        %1756 = vmatprep.subr.mxu0 0.0
        %1757 = vmatpush1.msra.mxu0 0.0
        %1758 = vmatprep.subr.mxu0 0.0
        %1759 = vmatpush1.msra.mxu0 0.0
        %1760 = vmatprep.subr.mxu0 0.0
        %1761 = vmatpush1.msra.mxu0 0.0
        %1762 = vmatprep.subr.mxu0 0.0
        %1763 = vmatpush1.msra.mxu0 0.0
        %1764 = vmatprep.subr.mxu0 0.0
        %1765 = vmatpush1.msra.mxu0 0.0
        %1766 = vmatprep.subr.mxu0 0.0
        %1767 = vmatpush1.msra.mxu0 0.0
        %1768 = vmatprep.subr.mxu0 0.0
        %1769 = vmatpush1.msra.mxu0 0.0
        %1770 = vmatprep.subr.mxu0 0.0
        %1771 = vmatpush1.msra.mxu0 0.0
        %1772 = vmatprep.subr.mxu0 0.0
        %1773 = vmatpush1.msra.mxu0 0.0
        %1774 = vmatprep.subr.mxu0 0.0
        %1775 = vmatpush1.msra.mxu0 0.0
        %1776 = vmatprep.subr.mxu0 0.0
        %1777 = vmatpush1.msra.mxu0 0.0
        %1778 = vmatprep.subr.mxu0 0.0
        %1779 = vmatpush1.msra.mxu0 0.0
        %1780 = vmatprep.subr.mxu0 0.0
        %1781 = vmatpush1.msra.mxu0 0.0
        %1782 = vmatprep.subr.mxu0 0.0
        %1783 = vmatpush1.msra.mxu0 0.0
        %1784 = vmatprep.subr.mxu0 0.0
        %1785 = vmatpush1.msra.mxu0 %v888
        %1786 = vmatprep.subr.mxu0 0.0
        %1787 = vmatpush2.msra.mxu0 0.0
        %1788 = vmatprep.subr.mxu0 0.0
        %1789 = vmatpush2.msra.mxu0 0.0
        %1790 = vmatprep.subr.mxu0 0.0
        %1791 = vmatpush2.msra.mxu0 0.0
        %1792 = vmatprep.subr.mxu0 0.0
        %1793 = vmatpush2.msra.mxu0 0.0
        %1794 = vmatprep.subr.mxu0 0.0
        %1795 = vmatpush2.msra.mxu0 0.0
        %1796 = vmatprep.subr.mxu0 0.0
        %1797 = vmatpush2.msra.mxu0 0.0
        %1798 = vmatprep.subr.mxu0 0.0
        %1799 = vmatpush2.msra.mxu0 0.0
        %1800 = vmatprep.subr.mxu0 0.0
        %1801 = vmatpush2.msra.mxu0 0.0
        %1802 = vmatprep.subr.mxu0 0.0
        %1803 = vmatpush2.msra.mxu0 0.0
        %1804 = vmatprep.subr.mxu0 0.0
        %1805 = vmatpush2.msra.mxu0 0.0
        %1806 = vmatprep.subr.mxu0 0.0
        %1807 = vmatpush2.msra.mxu0 0.0
        %1808 = vmatprep.subr.mxu0 0.0
        %1809 = vmatpush2.msra.mxu0 0.0
        %1810 = vmatprep.subr.mxu0 0.0
        %1811 = vmatpush2.msra.mxu0 0.0
        %1812 = vmatprep.subr.mxu0 0.0
        %1813 = vmatpush2.msra.mxu0 0.0
        %1814 = vmatprep.subr.mxu0 0.0
        %1815 = vmatpush2.msra.mxu0 0.0
        %1816 = vmatprep.subr.mxu0 0.0
        %1817 = vmatpush2.msra.mxu0 0.0
        %1818 = vmatprep.mubr.f32.mxu0 0.0
        %1819 = vmatmul.mubr.f32.gmra.mxu0 %v1752
        %v1820 = vpop.f32.mrf.mxu0
        %v1821 = vadd.f32 0.0, %v1820
        %v1822 = vpop.f32.mrf.mxu0
        %1823 = vdwg.mxu0
        %v1824 = vpack.c.bf16 %v1821, %v1821
        %s1825 = scalar_lea.vmem %s6, 8
        %v1826 = vld [vmem:[%s1825] sm:$0xf]
        %v1828 = vsel %vm1008, %v1824, 0
        %v1831 = vsel %vm1455, %v1826, 0
        %1833 = vmatprep.subr.bf16.mxu0 0
        %1834 = vmatpush1.bf16.msra.mxu0 0
        %1835 = vmatprep.subr.bf16.mxu0 0
        %1836 = vmatpush1.bf16.msra.mxu0 0
        %1837 = vmatprep.subr.bf16.mxu0 0
        %1838 = vmatpush1.bf16.msra.mxu0 0
        %1839 = vmatprep.subr.bf16.mxu0 0
        %1840 = vmatpush1.bf16.msra.mxu0 0
        %1841 = vmatprep.subr.bf16.mxu0 0
        %1842 = vmatpush1.bf16.msra.mxu0 0
        %1843 = vmatprep.subr.bf16.mxu0 0
        %1844 = vmatpush1.bf16.msra.mxu0 0
        %1845 = vmatprep.subr.bf16.mxu0 0
        %1846 = vmatpush1.bf16.msra.mxu0 0
        %1847 = vmatprep.subr.bf16.mxu0 0
        %1848 = vmatpush1.bf16.msra.mxu0 %v1831
        %1849 = vmatprep.subr.bf16.mxu0 0
        %1850 = vmatpush2.bf16.msra.mxu0 0
        %1851 = vmatprep.subr.bf16.mxu0 0
        %1852 = vmatpush2.bf16.msra.mxu0 0
        %1853 = vmatprep.subr.bf16.mxu0 0
        %1854 = vmatpush2.bf16.msra.mxu0 0
        %1855 = vmatprep.subr.bf16.mxu0 0
        %1856 = vmatpush2.bf16.msra.mxu0 0
        %1857 = vmatprep.subr.bf16.mxu0 0
        %1858 = vmatpush2.bf16.msra.mxu0 0
        %1859 = vmatprep.subr.bf16.mxu0 0
        %1860 = vmatpush2.bf16.msra.mxu0 0
        %1861 = vmatprep.subr.bf16.mxu0 0
        %1862 = vmatpush2.bf16.msra.mxu0 0
        %1863 = vmatprep.subr.bf16.mxu0 0
        %1864 = vmatpush2.bf16.msra.mxu0 0
        %1865 = vmatprep.mubr.bf16.mxu0 0
        %1866 = vmatmul.mubr.bf16.gmra.mxu0 %v1828
        %v1867 = vpop.f32.mrf.mxu0
        %v1868 = vadd.f32 0.0, %v1867
        %v1869 = vpop.f32.mrf.mxu0
        %v1870 = vpop.f32.mrf.mxu0
        %v1871 = vpop.f32.mrf.mxu0
        %1872 = vdwg.mxu0
        %v1873 = vadd.f32 %v1540, %v1868
        %s1874 = scalar_lea.vmem %s1, 48
        %v1875 = vld [vmem:[%s1874] sm:$0xf]
        %v1876 = vld [vmem:[%s1874 + $0x4] sm:$0xf]
        %v1877 = vld [vmem:[%s1874 + $0x8] sm:$0xf]
        %v1878 = vld [vmem:[%s1874 + $0xc] sm:$0xf]
        %v1883 = vunpack.c.l.b16 %v1875
        %v1884 = vunpack.c.l.b16 %v1876
        %v1885 = vunpack.c.l.b16 %v1877
        %v1886 = vunpack.c.l.b16 %v1878
        %v1887 = vpack.c.b16 %v1884, %v1883
        %v1888 = vpack.c.b16 %v1886, %v1885
        %1891 = vmatprep.subr.bf16.mxu0 0
        %1892 = vmatpush1.bf16.msra.mxu0 0
        %1893 = vmatprep.subr.bf16.mxu0 0
        %1894 = vmatpush1.bf16.msra.mxu0 0
        %1895 = vmatprep.subr.bf16.mxu0 0
        %1896 = vmatpush1.bf16.msra.mxu0 0
        %1897 = vmatprep.subr.bf16.mxu0 0
        %1898 = vmatpush1.bf16.msra.mxu0 0
        %1899 = vmatprep.subr.bf16.mxu0 0
        %1900 = vmatpush1.bf16.msra.mxu0 0
        %1901 = vmatprep.subr.bf16.mxu0 0
        %1902 = vmatpush1.bf16.msra.mxu0 0
        %1903 = vmatprep.subr.bf16.mxu0 0
        %1904 = vmatpush1.bf16.msra.mxu0 %v1888
        %1905 = vmatprep.subr.bf16.mxu0 0
        %1906 = vmatpush1.bf16.msra.mxu0 %v1887
        %1907 = vmatprep.subr.bf16.mxu0 0
        %1908 = vmatpush2.bf16.msra.mxu0 0
        %1909 = vmatprep.subr.bf16.mxu0 0
        %1910 = vmatpush2.bf16.msra.mxu0 0
        %1911 = vmatprep.subr.bf16.mxu0 0
        %1912 = vmatpush2.bf16.msra.mxu0 0
        %1913 = vmatprep.subr.bf16.mxu0 0
        %1914 = vmatpush2.bf16.msra.mxu0 0
        %1915 = vmatprep.subr.bf16.mxu0 0
        %1916 = vmatpush2.bf16.msra.mxu0 0
        %1917 = vmatprep.subr.bf16.mxu0 0
        %1918 = vmatpush2.bf16.msra.mxu0 0
        %1919 = vmatprep.subr.bf16.mxu0 0
        %1920 = vmatpush2.bf16.msra.mxu0 0
        %1921 = vmatprep.subr.bf16.mxu0 0
        %1922 = vmatpush2.bf16.msra.mxu0 0
        %1923 = vmatprep.mubr.bf16.mxu0 0
        %1924 = vmatmul.mubr.bf16.gmra.mxu0 %v562
        %v1925 = vpop.f32.mrf.mxu0
        %v1926 = vadd.f32 0.0, %v1925
        %v1927 = vpop.f32.mrf.mxu0
        %v1928 = vpop.f32.mrf.mxu0
        %v1929 = vpop.f32.mrf.mxu0
        %1930 = vdwg.mxu0
        %s1931 = scalar_lea.vmem %s2, 48
        %v1932 = vld [vmem:[%s1931] sm:$0xf]
        %v1933 = vld [vmem:[%s1931 + $0x4] sm:$0xf]
        %v1934 = vld [vmem:[%s1931 + $0x8] sm:$0xf]
        %v1935 = vld [vmem:[%s1931 + $0xc] sm:$0xf]
        %v1940 = vunpack.c.l.b16 %v1932
        %v1941 = vunpack.c.l.b16 %v1933
        %v1942 = vunpack.c.l.b16 %v1934
        %v1943 = vunpack.c.l.b16 %v1935
        %v1944 = vpack.c.b16 %v1941, %v1940
        %v1945 = vpack.c.b16 %v1943, %v1942
        %1948 = vmatprep.subr.bf16.mxu0 0
        %1949 = vmatpush1.bf16.msra.mxu0 0
        %1950 = vmatprep.subr.bf16.mxu0 0
        %1951 = vmatpush1.bf16.msra.mxu0 0
        %1952 = vmatprep.subr.bf16.mxu0 0
        %1953 = vmatpush1.bf16.msra.mxu0 0
        %1954 = vmatprep.subr.bf16.mxu0 0
        %1955 = vmatpush1.bf16.msra.mxu0 0
        %1956 = vmatprep.subr.bf16.mxu0 0
        %1957 = vmatpush1.bf16.msra.mxu0 0
        %1958 = vmatprep.subr.bf16.mxu0 0
        %1959 = vmatpush1.bf16.msra.mxu0 0
        %1960 = vmatprep.subr.bf16.mxu0 0
        %1961 = vmatpush1.bf16.msra.mxu0 %v1945
        %1962 = vmatprep.subr.bf16.mxu0 0
        %1963 = vmatpush1.bf16.msra.mxu0 %v1944
        %1964 = vmatprep.subr.bf16.mxu0 0
        %1965 = vmatpush2.bf16.msra.mxu0 0
        %1966 = vmatprep.subr.bf16.mxu0 0
        %1967 = vmatpush2.bf16.msra.mxu0 0
        %1968 = vmatprep.subr.bf16.mxu0 0
        %1969 = vmatpush2.bf16.msra.mxu0 0
        %1970 = vmatprep.subr.bf16.mxu0 0
        %1971 = vmatpush2.bf16.msra.mxu0 0
        %1972 = vmatprep.subr.bf16.mxu0 0
        %1973 = vmatpush2.bf16.msra.mxu0 0
        %1974 = vmatprep.subr.bf16.mxu0 0
        %1975 = vmatpush2.bf16.msra.mxu0 0
        %1976 = vmatprep.subr.bf16.mxu0 0
        %1977 = vmatpush2.bf16.msra.mxu0 0
        %1978 = vmatprep.subr.bf16.mxu0 0
        %1979 = vmatpush2.bf16.msra.mxu0 0
        %1980 = vmatprep.mubr.bf16.mxu0 0
        %1981 = vmatmul.mubr.bf16.gmra.mxu0 %v562
        %v1982 = vpop.f32.mrf.mxu0
        %v1983 = vadd.f32 0.0, %v1982
        %v1984 = vpop.f32.mrf.mxu0
        %v1985 = vpop.f32.mrf.mxu0
        %v1986 = vpop.f32.mrf.mxu0
        %1987 = vdwg.mxu0
        %v1988 = vmul.f32 %v1926, %v519
        %v1989 = vmul.f32 %v1983, %v520
        %v1990 = vadd.f32 %v1988, %v1989
        %v1992 = vsel %vm1008, %v1990, 0
        %1994 = vmatprep.subr.mxu0 0.0
        %1995 = vmatpush1.xpose.msra.mxu0 0.0
        %1996 = vmatprep.subr.mxu0 0.0
        %1997 = vmatpush1.xpose.msra.mxu0 0.0
        %1998 = vmatprep.subr.mxu0 0.0
        %1999 = vmatpush1.xpose.msra.mxu0 0.0
        %2000 = vmatprep.subr.mxu0 0.0
        %2001 = vmatpush1.xpose.msra.mxu0 0.0
        %2002 = vmatprep.subr.mxu0 0.0
        %2003 = vmatpush1.xpose.msra.mxu0 0.0
        %2004 = vmatprep.subr.mxu0 0.0
        %2005 = vmatpush1.xpose.msra.mxu0 0.0
        %2006 = vmatprep.subr.mxu0 0.0
        %2007 = vmatpush1.xpose.msra.mxu0 0.0
        %2008 = vmatprep.subr.mxu0 0.0
        %2009 = vmatpush1.xpose.msra.mxu0 0.0
        %2010 = vmatprep.subr.mxu0 0.0
        %2011 = vmatpush1.xpose.msra.mxu0 0.0
        %2012 = vmatprep.subr.mxu0 0.0
        %2013 = vmatpush1.xpose.msra.mxu0 0.0
        %2014 = vmatprep.subr.mxu0 0.0
        %2015 = vmatpush1.xpose.msra.mxu0 0.0
        %2016 = vmatprep.subr.mxu0 0.0
        %2017 = vmatpush1.xpose.msra.mxu0 0.0
        %2018 = vmatprep.subr.mxu0 0.0
        %2019 = vmatpush1.xpose.msra.mxu0 0.0
        %2020 = vmatprep.subr.mxu0 0.0
        %2021 = vmatpush1.xpose.msra.mxu0 0.0
        %2022 = vmatprep.subr.mxu0 0.0
        %2023 = vmatpush1.xpose.msra.mxu0 0.0
        %2024 = vmatprep.subr.mxu0 0.0
        %2025 = vmatpush1.xpose.msra.mxu0 %v1666
        %2026 = vmatprep.subr.mxu0 0.0
        %2027 = vmatpush2.xpose.msra.mxu0 0.0
        %2028 = vmatprep.subr.mxu0 0.0
        %2029 = vmatpush2.xpose.msra.mxu0 0.0
        %2030 = vmatprep.subr.mxu0 0.0
        %2031 = vmatpush2.xpose.msra.mxu0 0.0
        %2032 = vmatprep.subr.mxu0 0.0
        %2033 = vmatpush2.xpose.msra.mxu0 0.0
        %2034 = vmatprep.subr.mxu0 0.0
        %2035 = vmatpush2.xpose.msra.mxu0 0.0
        %2036 = vmatprep.subr.mxu0 0.0
        %2037 = vmatpush2.xpose.msra.mxu0 0.0
        %2038 = vmatprep.subr.mxu0 0.0
        %2039 = vmatpush2.xpose.msra.mxu0 0.0
        %2040 = vmatprep.subr.mxu0 0.0
        %2041 = vmatpush2.xpose.msra.mxu0 0.0
        %2042 = vmatprep.subr.mxu0 0.0
        %2043 = vmatpush2.xpose.msra.mxu0 0.0
        %2044 = vmatprep.subr.mxu0 0.0
        %2045 = vmatpush2.xpose.msra.mxu0 0.0
        %2046 = vmatprep.subr.mxu0 0.0
        %2047 = vmatpush2.xpose.msra.mxu0 0.0
        %2048 = vmatprep.subr.mxu0 0.0
        %2049 = vmatpush2.xpose.msra.mxu0 0.0
        %2050 = vmatprep.subr.mxu0 0.0
        %2051 = vmatpush2.xpose.msra.mxu0 0.0
        %2052 = vmatprep.subr.mxu0 0.0
        %2053 = vmatpush2.xpose.msra.mxu0 0.0
        %2054 = vmatprep.subr.mxu0 0.0
        %2055 = vmatpush2.xpose.msra.mxu0 0.0
        %2056 = vmatprep.subr.mxu0 0.0
        %2057 = vmatpush2.xpose.msra.mxu0 0.0
        %2058 = vmatprep.mubr.f32.mxu0 0.0
        %2059 = vmatmul.mubr.f32.gmra.mxu0 %v1992
        %v2060 = vpop.f32.mrf.mxu0
        %v2061 = vadd.f32 0.0, %v2060
        %v2062 = vpop.f32.mrf.mxu0
        %2063 = vdwg.mxu0
        %v2064 = vmul.f32 %v2061, 0.35355338
        %v2065 = vsel %vm525, %v2064, -1e+30
        %v2066 = vsel %vm1008, %v2065, -inf
        %2067 = vmax.xlane.f32.xlu0 %v2066
        %v2068 = vpop.xlane.xlu0 %2067
        %v2069 = vsub.f32 %v2065, %v2068
        %v2070 = vmul.f32 %v2069, 1.442695
        %v2071 = vpow.pop %v2070
        %v2072 = vsel %vm1008, %v2071, 0.0
        %2073 = vadd.xlane.f32.xlu0 %v2072
        %v2074 = vpop.xlane.xlu0 %2073
        %v2075 = vrcp.pop %v2074
        %v2076 = vmul.f32 %v2071, %v2075
        %v2078 = vsel %vm1008, %v2076, 0
        %2080 = vmatprep.subr.mxu0 0.0
        %2081 = vmatpush1.msra.mxu0 0.0
        %2082 = vmatprep.subr.mxu0 0.0
        %2083 = vmatpush1.msra.mxu0 0.0
        %2084 = vmatprep.subr.mxu0 0.0
        %2085 = vmatpush1.msra.mxu0 0.0
        %2086 = vmatprep.subr.mxu0 0.0
        %2087 = vmatpush1.msra.mxu0 0.0
        %2088 = vmatprep.subr.mxu0 0.0
        %2089 = vmatpush1.msra.mxu0 0.0
        %2090 = vmatprep.subr.mxu0 0.0
        %2091 = vmatpush1.msra.mxu0 0.0
        %2092 = vmatprep.subr.mxu0 0.0
        %2093 = vmatpush1.msra.mxu0 0.0
        %2094 = vmatprep.subr.mxu0 0.0
        %2095 = vmatpush1.msra.mxu0 0.0
        %2096 = vmatprep.subr.mxu0 0.0
        %2097 = vmatpush1.msra.mxu0 0.0
        %2098 = vmatprep.subr.mxu0 0.0
        %2099 = vmatpush1.msra.mxu0 0.0
        %2100 = vmatprep.subr.mxu0 0.0
        %2101 = vmatpush1.msra.mxu0 0.0
        %2102 = vmatprep.subr.mxu0 0.0
        %2103 = vmatpush1.msra.mxu0 0.0
        %2104 = vmatprep.subr.mxu0 0.0
        %2105 = vmatpush1.msra.mxu0 0.0
        %2106 = vmatprep.subr.mxu0 0.0
        %2107 = vmatpush1.msra.mxu0 0.0
        %2108 = vmatprep.subr.mxu0 0.0
        %2109 = vmatpush1.msra.mxu0 0.0
        %2110 = vmatprep.subr.mxu0 0.0
        %2111 = vmatpush1.msra.mxu0 %v888
        %2112 = vmatprep.subr.mxu0 0.0
        %2113 = vmatpush2.msra.mxu0 0.0
        %2114 = vmatprep.subr.mxu0 0.0
        %2115 = vmatpush2.msra.mxu0 0.0
        %2116 = vmatprep.subr.mxu0 0.0
        %2117 = vmatpush2.msra.mxu0 0.0
        %2118 = vmatprep.subr.mxu0 0.0
        %2119 = vmatpush2.msra.mxu0 0.0
        %2120 = vmatprep.subr.mxu0 0.0
        %2121 = vmatpush2.msra.mxu0 0.0
        %2122 = vmatprep.subr.mxu0 0.0
        %2123 = vmatpush2.msra.mxu0 0.0
        %2124 = vmatprep.subr.mxu0 0.0
        %2125 = vmatpush2.msra.mxu0 0.0
        %2126 = vmatprep.subr.mxu0 0.0
        %2127 = vmatpush2.msra.mxu0 0.0
        %2128 = vmatprep.subr.mxu0 0.0
        %2129 = vmatpush2.msra.mxu0 0.0
        %2130 = vmatprep.subr.mxu0 0.0
        %2131 = vmatpush2.msra.mxu0 0.0
        %2132 = vmatprep.subr.mxu0 0.0
        %2133 = vmatpush2.msra.mxu0 0.0
        %2134 = vmatprep.subr.mxu0 0.0
        %2135 = vmatpush2.msra.mxu0 0.0
        %2136 = vmatprep.subr.mxu0 0.0
        %2137 = vmatpush2.msra.mxu0 0.0
        %2138 = vmatprep.subr.mxu0 0.0
        %2139 = vmatpush2.msra.mxu0 0.0
        %2140 = vmatprep.subr.mxu0 0.0
        %2141 = vmatpush2.msra.mxu0 0.0
        %2142 = vmatprep.subr.mxu0 0.0
        %2143 = vmatpush2.msra.mxu0 0.0
        %2144 = vmatprep.mubr.f32.mxu0 0.0
        %2145 = vmatmul.mubr.f32.gmra.mxu0 %v2078
        %v2146 = vpop.f32.mrf.mxu0
        %v2147 = vadd.f32 0.0, %v2146
        %v2148 = vpop.f32.mrf.mxu0
        %2149 = vdwg.mxu0
        %v2150 = vpack.c.bf16 %v2147, %v2147
        %s2151 = scalar_lea.vmem %s6, 12
        %v2152 = vld [vmem:[%s2151] sm:$0xf]
        %v2154 = vsel %vm1008, %v2150, 0
        %v2157 = vsel %vm1455, %v2152, 0
        %2159 = vmatprep.subr.bf16.mxu0 0
        %2160 = vmatpush1.bf16.msra.mxu0 0
        %2161 = vmatprep.subr.bf16.mxu0 0
        %2162 = vmatpush1.bf16.msra.mxu0 0
        %2163 = vmatprep.subr.bf16.mxu0 0
        %2164 = vmatpush1.bf16.msra.mxu0 0
        %2165 = vmatprep.subr.bf16.mxu0 0
        %2166 = vmatpush1.bf16.msra.mxu0 0
        %2167 = vmatprep.subr.bf16.mxu0 0
        %2168 = vmatpush1.bf16.msra.mxu0 0
        %2169 = vmatprep.subr.bf16.mxu0 0
        %2170 = vmatpush1.bf16.msra.mxu0 0
        %2171 = vmatprep.subr.bf16.mxu0 0
        %2172 = vmatpush1.bf16.msra.mxu0 0
        %2173 = vmatprep.subr.bf16.mxu0 0
        %2174 = vmatpush1.bf16.msra.mxu0 %v2157
        %2175 = vmatprep.subr.bf16.mxu0 0
        %2176 = vmatpush2.bf16.msra.mxu0 0
        %2177 = vmatprep.subr.bf16.mxu0 0
        %2178 = vmatpush2.bf16.msra.mxu0 0
        %2179 = vmatprep.subr.bf16.mxu0 0
        %2180 = vmatpush2.bf16.msra.mxu0 0
        %2181 = vmatprep.subr.bf16.mxu0 0
        %2182 = vmatpush2.bf16.msra.mxu0 0
        %2183 = vmatprep.subr.bf16.mxu0 0
        %2184 = vmatpush2.bf16.msra.mxu0 0
        %2185 = vmatprep.subr.bf16.mxu0 0
        %2186 = vmatpush2.bf16.msra.mxu0 0
        %2187 = vmatprep.subr.bf16.mxu0 0
        %2188 = vmatpush2.bf16.msra.mxu0 0
        %2189 = vmatprep.subr.bf16.mxu0 0
        %2190 = vmatpush2.bf16.msra.mxu0 0
        %2191 = vmatprep.mubr.bf16.mxu0 0
        %2192 = vmatmul.mubr.bf16.gmra.mxu0 %v2154
        %v2193 = vpop.f32.mrf.mxu0
        %v2194 = vadd.f32 0.0, %v2193
        %v2195 = vpop.f32.mrf.mxu0
        %v2196 = vpop.f32.mrf.mxu0
        %v2197 = vpop.f32.mrf.mxu0
        %2198 = vdwg.mxu0
        %v2199 = vadd.f32 %v1873, %v2194
        %v2200 = vadd.f32 %v518, %v2199
        %v2201 = vld [vmem:[%s11] sm:$0x1]
        %v2202 = vmul.f32 %v2200, %v2200
        %v2203 = vsel %vm528, %v2202, 0.0
        %2204 = vadd.xlane.f32.xlu0 %v2203
        %v2205 = vpop.xlane.xlu0 %2204
        %v2206 = vmul.f32 %v2205, %v532
        %v2207 = vadd.f32 %v2206, 1e-05
        %v2208 = vrsqrt.pop %v2207
        %v2209 = vmul.f32 %v2200, %v2208
        %v2211 = vlaneseq
        %v2212 = vshrl.u32 %v2211, 7
        %v2213 = vsub.s32 0, %v2212
        %v2214 = vrot.slane %v2201, %v2213
        %v2216 = vmul.f32 %v2209, %v2214
        %v2217 = vpack.c.bf16 %v2216, %v2216
        %v2218 = vld [vmem:[%s7] sm:$0xf]
        %v2219 = vld [vmem:[%s7 + $0x4] sm:$0xf]
        %v2220 = vld [vmem:[%s7 + $0x8] sm:$0xf]
        %v2221 = vld [vmem:[%s7 + $0xc] sm:$0xf]
        %v2226 = vunpack.c.l.b16 %v2218
        %v2227 = vunpack.c.l.b16 %v2219
        %v2228 = vunpack.c.l.b16 %v2220
        %v2229 = vunpack.c.l.b16 %v2221
        %v2230 = vpack.c.b16 %v2227, %v2226
        %v2231 = vpack.c.b16 %v2229, %v2228
        %v2235 = vsel %vm528, %v2217, 0
        %2237 = vmatprep.subr.bf16.mxu0 0
        %2238 = vmatpush1.bf16.msra.mxu0 0
        %2239 = vmatprep.subr.bf16.mxu0 0
        %2240 = vmatpush1.bf16.msra.mxu0 0
        %2241 = vmatprep.subr.bf16.mxu0 0
        %2242 = vmatpush1.bf16.msra.mxu0 0
        %2243 = vmatprep.subr.bf16.mxu0 0
        %2244 = vmatpush1.bf16.msra.mxu0 0
        %2245 = vmatprep.subr.bf16.mxu0 0
        %2246 = vmatpush1.bf16.msra.mxu0 0
        %2247 = vmatprep.subr.bf16.mxu0 0
        %2248 = vmatpush1.bf16.msra.mxu0 0
        %2249 = vmatprep.subr.bf16.mxu0 0
        %2250 = vmatpush1.bf16.msra.mxu0 %v2231
        %2251 = vmatprep.subr.bf16.mxu0 0
        %2252 = vmatpush1.bf16.msra.mxu0 %v2230
        %2253 = vmatprep.subr.bf16.mxu0 0
        %2254 = vmatpush2.bf16.msra.mxu0 0
        %2255 = vmatprep.subr.bf16.mxu0 0
        %2256 = vmatpush2.bf16.msra.mxu0 0
        %2257 = vmatprep.subr.bf16.mxu0 0
        %2258 = vmatpush2.bf16.msra.mxu0 0
        %2259 = vmatprep.subr.bf16.mxu0 0
        %2260 = vmatpush2.bf16.msra.mxu0 0
        %2261 = vmatprep.subr.bf16.mxu0 0
        %2262 = vmatpush2.bf16.msra.mxu0 0
        %2263 = vmatprep.subr.bf16.mxu0 0
        %2264 = vmatpush2.bf16.msra.mxu0 0
        %2265 = vmatprep.subr.bf16.mxu0 0
        %2266 = vmatpush2.bf16.msra.mxu0 0
        %2267 = vmatprep.subr.bf16.mxu0 0
        %2268 = vmatpush2.bf16.msra.mxu0 0
        %2269 = vmatprep.mubr.bf16.mxu0 0
        %2270 = vmatmul.mubr.bf16.gmra.mxu0 %v2235
        %v2271 = vpop.f32.mrf.mxu0
        %v2272 = vadd.f32 0.0, %v2271
        %v2273 = vpop.f32.mrf.mxu0
        %v2274 = vpop.f32.mrf.mxu0
        %v2275 = vpop.f32.mrf.mxu0
        %2276 = vdwg.mxu0
        %v2277 = vxor.u32 %v2272, 2147483648
        %v2278 = vmul.f32 %v2277, 1.442695
        %v2279 = vpow.pop %v2278
        %v2280 = vadd.f32 %v2279, 1.0
        %v2281 = vrcp.pop %v2280
        %v2282 = vmul.f32 1.0, %v2281
        %v2283 = vmul.f32 %v2272, %v2282
        %v2284 = vld [vmem:[%s8] sm:$0xf]
        %v2285 = vld [vmem:[%s8 + $0x4] sm:$0xf]
        %v2286 = vld [vmem:[%s8 + $0x8] sm:$0xf]
        %v2287 = vld [vmem:[%s8 + $0xc] sm:$0xf]
        %v2292 = vunpack.c.l.b16 %v2284
        %v2293 = vunpack.c.l.b16 %v2285
        %v2294 = vunpack.c.l.b16 %v2286
        %v2295 = vunpack.c.l.b16 %v2287
        %v2296 = vpack.c.b16 %v2293, %v2292
        %v2297 = vpack.c.b16 %v2295, %v2294
        %2300 = vmatprep.subr.bf16.mxu0 0
        %2301 = vmatpush1.bf16.msra.mxu0 0
        %2302 = vmatprep.subr.bf16.mxu0 0
        %2303 = vmatpush1.bf16.msra.mxu0 0
        %2304 = vmatprep.subr.bf16.mxu0 0
        %2305 = vmatpush1.bf16.msra.mxu0 0
        %2306 = vmatprep.subr.bf16.mxu0 0
        %2307 = vmatpush1.bf16.msra.mxu0 0
        %2308 = vmatprep.subr.bf16.mxu0 0
        %2309 = vmatpush1.bf16.msra.mxu0 0
        %2310 = vmatprep.subr.bf16.mxu0 0
        %2311 = vmatpush1.bf16.msra.mxu0 0
        %2312 = vmatprep.subr.bf16.mxu0 0
        %2313 = vmatpush1.bf16.msra.mxu0 %v2297
        %2314 = vmatprep.subr.bf16.mxu0 0
        %2315 = vmatpush1.bf16.msra.mxu0 %v2296
        %2316 = vmatprep.subr.bf16.mxu0 0
        %2317 = vmatpush2.bf16.msra.mxu0 0
        %2318 = vmatprep.subr.bf16.mxu0 0
        %2319 = vmatpush2.bf16.msra.mxu0 0
        %2320 = vmatprep.subr.bf16.mxu0 0
        %2321 = vmatpush2.bf16.msra.mxu0 0
        %2322 = vmatprep.subr.bf16.mxu0 0
        %2323 = vmatpush2.bf16.msra.mxu0 0
        %2324 = vmatprep.subr.bf16.mxu0 0
        %2325 = vmatpush2.bf16.msra.mxu0 0
        %2326 = vmatprep.subr.bf16.mxu0 0
        %2327 = vmatpush2.bf16.msra.mxu0 0
        %2328 = vmatprep.subr.bf16.mxu0 0
        %2329 = vmatpush2.bf16.msra.mxu0 0
        %2330 = vmatprep.subr.bf16.mxu0 0
        %2331 = vmatpush2.bf16.msra.mxu0 0
        %2332 = vmatprep.mubr.bf16.mxu0 0
        %2333 = vmatmul.mubr.bf16.gmra.mxu0 %v2235
        %v2334 = vpop.f32.mrf.mxu0
        %v2335 = vadd.f32 0.0, %v2334
        %v2336 = vpop.f32.mrf.mxu0
        %v2337 = vpop.f32.mrf.mxu0
        %v2338 = vpop.f32.mrf.mxu0
        %2339 = vdwg.mxu0
        %v2340 = vmul.f32 %v2283, %v2335
        %v2341 = vpack.c.bf16 %v2340, %v2340
        %v2342 = vld [vmem:[%s9] sm:$0xf]
        %v2343 = vld [vmem:[%s9 + $0x4] sm:$0xf]
        %v2344 = vld [vmem:[%s9 + $0x8] sm:$0xf]
        %v2345 = vld [vmem:[%s9 + $0xc] sm:$0xf]
        %v2346 = vld [vmem:[%s9 + $0x10] sm:$0xf]
        %v2347 = vld [vmem:[%s9 + $0x14] sm:$0xf]
        %v2348 = vld [vmem:[%s9 + $0x18] sm:$0xf]
        %v2349 = vld [vmem:[%s9 + $0x1c] sm:$0xf]
        %v2358 = vunpack.c.l.b16 %v2342
        %v2359 = vunpack.c.l.b16 %v2343
        %v2360 = vunpack.c.l.b16 %v2344
        %v2361 = vunpack.c.l.b16 %v2345
        %v2362 = vunpack.c.l.b16 %v2346
        %v2363 = vunpack.c.l.b16 %v2347
        %v2364 = vunpack.c.l.b16 %v2348
        %v2365 = vunpack.c.l.b16 %v2349
        %v2366 = vpack.c.b16 %v2359, %v2358
        %v2367 = vpack.c.b16 %v2361, %v2360
        %v2368 = vpack.c.b16 %v2363, %v2362
        %v2369 = vpack.c.b16 %v2365, %v2364
        %vm2374 = vcmask 523264
        %v2376 = vsel %vm2374, %v2341, 0
        %2378 = vmatprep.subr.bf16.mxu0 0
        %2379 = vmatpush1.bf16.msra.mxu0 0
        %2380 = vmatprep.subr.bf16.mxu0 0
        %2381 = vmatpush1.bf16.msra.mxu0 0
        %2382 = vmatprep.subr.bf16.mxu0 0
        %2383 = vmatpush1.bf16.msra.mxu0 0
        %2384 = vmatprep.subr.bf16.mxu0 0
        %2385 = vmatpush1.bf16.msra.mxu0 0
        %2386 = vmatprep.subr.bf16.mxu0 0
        %2387 = vmatpush1.bf16.msra.mxu0 %v2369
        %2388 = vmatprep.subr.bf16.mxu0 0
        %2389 = vmatpush1.bf16.msra.mxu0 %v2368
        %2390 = vmatprep.subr.bf16.mxu0 0
        %2391 = vmatpush1.bf16.msra.mxu0 %v2367
        %2392 = vmatprep.subr.bf16.mxu0 0
        %2393 = vmatpush1.bf16.msra.mxu0 %v2366
        %2394 = vmatprep.subr.bf16.mxu0 0
        %2395 = vmatpush2.bf16.msra.mxu0 0
        %2396 = vmatprep.subr.bf16.mxu0 0
        %2397 = vmatpush2.bf16.msra.mxu0 0
        %2398 = vmatprep.subr.bf16.mxu0 0
        %2399 = vmatpush2.bf16.msra.mxu0 0
        %2400 = vmatprep.subr.bf16.mxu0 0
        %2401 = vmatpush2.bf16.msra.mxu0 0
        %2402 = vmatprep.subr.bf16.mxu0 0
        %2403 = vmatpush2.bf16.msra.mxu0 0
        %2404 = vmatprep.subr.bf16.mxu0 0
        %2405 = vmatpush2.bf16.msra.mxu0 0
        %2406 = vmatprep.subr.bf16.mxu0 0
        %2407 = vmatpush2.bf16.msra.mxu0 0
        %2408 = vmatprep.subr.bf16.mxu0 0
        %2409 = vmatpush2.bf16.msra.mxu0 0
        %2410 = vmatprep.mubr.bf16.mxu0 0
        %2411 = vmatmul.mubr.bf16.gmra.mxu0 %v2376
        %v2412 = vpop.f32.mrf.mxu0
        %v2413 = vadd.f32 0.0, %v2412
        %v2414 = vpop.f32.mrf.mxu0
        %v2415 = vpop.f32.mrf.mxu0
        %v2416 = vpop.f32.mrf.mxu0
        %2417 = vdwg.mxu0
        %s2418 = scalar_lea.vmem %s10, 1
        %v2419 = vld [vmem:[%s2418] sm:$0x1]
        %v2420 = vmul.f32 %v2413, %v2413
        %v2421 = vsel %vm528, %v2420, 0.0
        %2422 = vadd.xlane.f32.xlu0 %v2421
        %v2423 = vpop.xlane.xlu0 %2422
        %v2424 = vmul.f32 %v2423, %v532
        %v2425 = vadd.f32 %v2424, 1e-05
        %v2426 = vrsqrt.pop %v2425
        %v2427 = vmul.f32 %v2413, %v2426
        %v2429 = vlaneseq
        %v2430 = vshrl.u32 %v2429, 7
        %v2431 = vsub.s32 0, %v2430
        %v2432 = vrot.slane %v2419, %v2431
        %v2434 = vmul.f32 %v2427, %v2432
        %v2435 = vpack.c.bf16 %v2434, %v2434
        %s2436 = scalar_lea.vmem %s3, 32
        %v2437 = vld [vmem:[%s2436] sm:$0xf]
        %v2438 = vld [vmem:[%s2436 + $0x4] sm:$0xf]
        %v2439 = vld [vmem:[%s2436 + $0x8] sm:$0xf]
        %v2440 = vld [vmem:[%s2436 + $0xc] sm:$0xf]
        %v2445 = vunpack.c.l.b16 %v2437
        %v2446 = vunpack.c.l.b16 %v2438
        %v2447 = vunpack.c.l.b16 %v2439
        %v2448 = vunpack.c.l.b16 %v2440
        %v2449 = vpack.c.b16 %v2446, %v2445
        %v2450 = vpack.c.b16 %v2448, %v2447
        %v2454 = vsel %vm528, %v2435, 0
        %2456 = vmatprep.subr.bf16.mxu0 0
        %2457 = vmatpush1.bf16.msra.mxu0 0
        %2458 = vmatprep.subr.bf16.mxu0 0
        %2459 = vmatpush1.bf16.msra.mxu0 0
        %2460 = vmatprep.subr.bf16.mxu0 0
        %2461 = vmatpush1.bf16.msra.mxu0 0
        %2462 = vmatprep.subr.bf16.mxu0 0
        %2463 = vmatpush1.bf16.msra.mxu0 0
        %2464 = vmatprep.subr.bf16.mxu0 0
        %2465 = vmatpush1.bf16.msra.mxu0 0
        %2466 = vmatprep.subr.bf16.mxu0 0
        %2467 = vmatpush1.bf16.msra.mxu0 0
        %2468 = vmatprep.subr.bf16.mxu0 0
        %2469 = vmatpush1.bf16.msra.mxu0 %v2450
        %2470 = vmatprep.subr.bf16.mxu0 0
        %2471 = vmatpush1.bf16.msra.mxu0 %v2449
        %2472 = vmatprep.subr.bf16.mxu0 0
        %2473 = vmatpush2.bf16.msra.mxu0 0
        %2474 = vmatprep.subr.bf16.mxu0 0
        %2475 = vmatpush2.bf16.msra.mxu0 0
        %2476 = vmatprep.subr.bf16.mxu0 0
        %2477 = vmatpush2.bf16.msra.mxu0 0
        %2478 = vmatprep.subr.bf16.mxu0 0
        %2479 = vmatpush2.bf16.msra.mxu0 0
        %2480 = vmatprep.subr.bf16.mxu0 0
        %2481 = vmatpush2.bf16.msra.mxu0 0
        %2482 = vmatprep.subr.bf16.mxu0 0
        %2483 = vmatpush2.bf16.msra.mxu0 0
        %2484 = vmatprep.subr.bf16.mxu0 0
        %2485 = vmatpush2.bf16.msra.mxu0 0
        %2486 = vmatprep.subr.bf16.mxu0 0
        %2487 = vmatpush2.bf16.msra.mxu0 0
        %2488 = vmatprep.mubr.bf16.mxu0 0
        %2489 = vmatmul.mubr.bf16.gmra.mxu0 %v2454
        %v2490 = vpop.f32.mrf.mxu0
        %v2491 = vadd.f32 0.0, %v2490
        %v2492 = vpop.f32.mrf.mxu0
        %v2493 = vpop.f32.mrf.mxu0
        %v2494 = vpop.f32.mrf.mxu0
        %2495 = vdwg.mxu0
        %s2496 = scalar_lea.vmem %s4, 32
        %v2497 = vld [vmem:[%s2496] sm:$0xf]
        %v2498 = vld [vmem:[%s2496 + $0x4] sm:$0xf]
        %v2499 = vld [vmem:[%s2496 + $0x8] sm:$0xf]
        %v2500 = vld [vmem:[%s2496 + $0xc] sm:$0xf]
        %v2505 = vunpack.c.l.b16 %v2497
        %v2506 = vunpack.c.l.b16 %v2498
        %v2507 = vunpack.c.l.b16 %v2499
        %v2508 = vunpack.c.l.b16 %v2500
        %v2509 = vpack.c.b16 %v2506, %v2505
        %v2510 = vpack.c.b16 %v2508, %v2507
        %2513 = vmatprep.subr.bf16.mxu0 0
        %2514 = vmatpush1.bf16.msra.mxu0 0
        %2515 = vmatprep.subr.bf16.mxu0 0
        %2516 = vmatpush1.bf16.msra.mxu0 0
        %2517 = vmatprep.subr.bf16.mxu0 0
        %2518 = vmatpush1.bf16.msra.mxu0 0
        %2519 = vmatprep.subr.bf16.mxu0 0
        %2520 = vmatpush1.bf16.msra.mxu0 0
        %2521 = vmatprep.subr.bf16.mxu0 0
        %2522 = vmatpush1.bf16.msra.mxu0 0
        %2523 = vmatprep.subr.bf16.mxu0 0
        %2524 = vmatpush1.bf16.msra.mxu0 0
        %2525 = vmatprep.subr.bf16.mxu0 0
        %2526 = vmatpush1.bf16.msra.mxu0 %v2510
        %2527 = vmatprep.subr.bf16.mxu0 0
        %2528 = vmatpush1.bf16.msra.mxu0 %v2509
        %2529 = vmatprep.subr.bf16.mxu0 0
        %2530 = vmatpush2.bf16.msra.mxu0 0
        %2531 = vmatprep.subr.bf16.mxu0 0
        %2532 = vmatpush2.bf16.msra.mxu0 0
        %2533 = vmatprep.subr.bf16.mxu0 0
        %2534 = vmatpush2.bf16.msra.mxu0 0
        %2535 = vmatprep.subr.bf16.mxu0 0
        %2536 = vmatpush2.bf16.msra.mxu0 0
        %2537 = vmatprep.subr.bf16.mxu0 0
        %2538 = vmatpush2.bf16.msra.mxu0 0
        %2539 = vmatprep.subr.bf16.mxu0 0
        %2540 = vmatpush2.bf16.msra.mxu0 0
        %2541 = vmatprep.subr.bf16.mxu0 0
        %2542 = vmatpush2.bf16.msra.mxu0 0
        %2543 = vmatprep.subr.bf16.mxu0 0
        %2544 = vmatpush2.bf16.msra.mxu0 0
        %2545 = vmatprep.mubr.bf16.mxu0 0
        %2546 = vmatmul.mubr.bf16.gmra.mxu0 %v2454
        %v2547 = vpop.f32.mrf.mxu0
        %v2548 = vadd.f32 0.0, %v2547
        %v2549 = vpop.f32.mrf.mxu0
        %v2550 = vpop.f32.mrf.mxu0
        %v2551 = vpop.f32.mrf.mxu0
        %2552 = vdwg.mxu0
        %v2553 = vmul.f32 %v2491, %v519
        %v2554 = vmul.f32 %v2548, %v520
        %v2555 = vadd.f32 %v2553, %v2554
        %s2556 = scalar_lea.vmem %s5, 32
        %v2557 = vld [vmem:[%s2556] sm:$0xf]
        %v2558 = vld [vmem:[%s2556 + $0x4] sm:$0xf]
        %v2559 = vld [vmem:[%s2556 + $0x8] sm:$0xf]
        %v2560 = vld [vmem:[%s2556 + $0xc] sm:$0xf]
        %v2565 = vunpack.c.l.b16 %v2557
        %v2566 = vunpack.c.l.b16 %v2558
        %v2567 = vunpack.c.l.b16 %v2559
        %v2568 = vunpack.c.l.b16 %v2560
        %v2569 = vpack.c.b16 %v2566, %v2565
        %v2570 = vpack.c.b16 %v2568, %v2567
        %2573 = vmatprep.subr.bf16.mxu0 0
        %2574 = vmatpush1.bf16.msra.mxu0 0
        %2575 = vmatprep.subr.bf16.mxu0 0
        %2576 = vmatpush1.bf16.msra.mxu0 0
        %2577 = vmatprep.subr.bf16.mxu0 0
        %2578 = vmatpush1.bf16.msra.mxu0 0
        %2579 = vmatprep.subr.bf16.mxu0 0
        %2580 = vmatpush1.bf16.msra.mxu0 0
        %2581 = vmatprep.subr.bf16.mxu0 0
        %2582 = vmatpush1.bf16.msra.mxu0 0
        %2583 = vmatprep.subr.bf16.mxu0 0
        %2584 = vmatpush1.bf16.msra.mxu0 0
        %2585 = vmatprep.subr.bf16.mxu0 0
        %2586 = vmatpush1.bf16.msra.mxu0 %v2570
        %2587 = vmatprep.subr.bf16.mxu0 0
        %2588 = vmatpush1.bf16.msra.mxu0 %v2569
        %2589 = vmatprep.subr.bf16.mxu0 0
        %2590 = vmatpush2.bf16.msra.mxu0 0
        %2591 = vmatprep.subr.bf16.mxu0 0
        %2592 = vmatpush2.bf16.msra.mxu0 0
        %2593 = vmatprep.subr.bf16.mxu0 0
        %2594 = vmatpush2.bf16.msra.mxu0 0
        %2595 = vmatprep.subr.bf16.mxu0 0
        %2596 = vmatpush2.bf16.msra.mxu0 0
        %2597 = vmatprep.subr.bf16.mxu0 0
        %2598 = vmatpush2.bf16.msra.mxu0 0
        %2599 = vmatprep.subr.bf16.mxu0 0
        %2600 = vmatpush2.bf16.msra.mxu0 0
        %2601 = vmatprep.subr.bf16.mxu0 0
        %2602 = vmatpush2.bf16.msra.mxu0 0
        %2603 = vmatprep.subr.bf16.mxu0 0
        %2604 = vmatpush2.bf16.msra.mxu0 0
        %2605 = vmatprep.mubr.bf16.mxu0 0
        %2606 = vmatmul.mubr.bf16.gmra.mxu0 %v2454
        %v2607 = vpop.f32.mrf.mxu0
        %v2608 = vadd.f32 0.0, %v2607
        %v2609 = vpop.f32.mrf.mxu0
        %v2610 = vpop.f32.mrf.mxu0
        %v2611 = vpop.f32.mrf.mxu0
        %2612 = vdwg.mxu0
        %s2613 = scalar_lea.vmem %s3, 48
        %v2614 = vld [vmem:[%s2613] sm:$0xf]
        %v2615 = vld [vmem:[%s2613 + $0x4] sm:$0xf]
        %v2616 = vld [vmem:[%s2613 + $0x8] sm:$0xf]
        %v2617 = vld [vmem:[%s2613 + $0xc] sm:$0xf]
        %v2622 = vunpack.c.l.b16 %v2614
        %v2623 = vunpack.c.l.b16 %v2615
        %v2624 = vunpack.c.l.b16 %v2616
        %v2625 = vunpack.c.l.b16 %v2617
        %v2626 = vpack.c.b16 %v2623, %v2622
        %v2627 = vpack.c.b16 %v2625, %v2624
        %2630 = vmatprep.subr.bf16.mxu0 0
        %2631 = vmatpush1.bf16.msra.mxu0 0
        %2632 = vmatprep.subr.bf16.mxu0 0
        %2633 = vmatpush1.bf16.msra.mxu0 0
        %2634 = vmatprep.subr.bf16.mxu0 0
        %2635 = vmatpush1.bf16.msra.mxu0 0
        %2636 = vmatprep.subr.bf16.mxu0 0
        %2637 = vmatpush1.bf16.msra.mxu0 0
        %2638 = vmatprep.subr.bf16.mxu0 0
        %2639 = vmatpush1.bf16.msra.mxu0 0
        %2640 = vmatprep.subr.bf16.mxu0 0
        %2641 = vmatpush1.bf16.msra.mxu0 0
        %2642 = vmatprep.subr.bf16.mxu0 0
        %2643 = vmatpush1.bf16.msra.mxu0 %v2627
        %2644 = vmatprep.subr.bf16.mxu0 0
        %2645 = vmatpush1.bf16.msra.mxu0 %v2626
        %2646 = vmatprep.subr.bf16.mxu0 0
        %2647 = vmatpush2.bf16.msra.mxu0 0
        %2648 = vmatprep.subr.bf16.mxu0 0
        %2649 = vmatpush2.bf16.msra.mxu0 0
        %2650 = vmatprep.subr.bf16.mxu0 0
        %2651 = vmatpush2.bf16.msra.mxu0 0
        %2652 = vmatprep.subr.bf16.mxu0 0
        %2653 = vmatpush2.bf16.msra.mxu0 0
        %2654 = vmatprep.subr.bf16.mxu0 0
        %2655 = vmatpush2.bf16.msra.mxu0 0
        %2656 = vmatprep.subr.bf16.mxu0 0
        %2657 = vmatpush2.bf16.msra.mxu0 0
        %2658 = vmatprep.subr.bf16.mxu0 0
        %2659 = vmatpush2.bf16.msra.mxu0 0
        %2660 = vmatprep.subr.bf16.mxu0 0
        %2661 = vmatpush2.bf16.msra.mxu0 0
        %2662 = vmatprep.mubr.bf16.mxu0 0
        %2663 = vmatmul.mubr.bf16.gmra.mxu0 %v2454
        %v2664 = vpop.f32.mrf.mxu0
        %v2665 = vadd.f32 0.0, %v2664
        %v2666 = vpop.f32.mrf.mxu0
        %v2667 = vpop.f32.mrf.mxu0
        %v2668 = vpop.f32.mrf.mxu0
        %2669 = vdwg.mxu0
        %s2670 = scalar_lea.vmem %s4, 48
        %v2671 = vld [vmem:[%s2670] sm:$0xf]
        %v2672 = vld [vmem:[%s2670 + $0x4] sm:$0xf]
        %v2673 = vld [vmem:[%s2670 + $0x8] sm:$0xf]
        %v2674 = vld [vmem:[%s2670 + $0xc] sm:$0xf]
        %v2679 = vunpack.c.l.b16 %v2671
        %v2680 = vunpack.c.l.b16 %v2672
        %v2681 = vunpack.c.l.b16 %v2673
        %v2682 = vunpack.c.l.b16 %v2674
        %v2683 = vpack.c.b16 %v2680, %v2679
        %v2684 = vpack.c.b16 %v2682, %v2681
        %2687 = vmatprep.subr.bf16.mxu0 0
        %2688 = vmatpush1.bf16.msra.mxu0 0
        %2689 = vmatprep.subr.bf16.mxu0 0
        %2690 = vmatpush1.bf16.msra.mxu0 0
        %2691 = vmatprep.subr.bf16.mxu0 0
        %2692 = vmatpush1.bf16.msra.mxu0 0
        %2693 = vmatprep.subr.bf16.mxu0 0
        %2694 = vmatpush1.bf16.msra.mxu0 0
        %2695 = vmatprep.subr.bf16.mxu0 0
        %2696 = vmatpush1.bf16.msra.mxu0 0
        %2697 = vmatprep.subr.bf16.mxu0 0
        %2698 = vmatpush1.bf16.msra.mxu0 0
        %2699 = vmatprep.subr.bf16.mxu0 0
        %2700 = vmatpush1.bf16.msra.mxu0 %v2684
        %2701 = vmatprep.subr.bf16.mxu0 0
        %2702 = vmatpush1.bf16.msra.mxu0 %v2683
        %2703 = vmatprep.subr.bf16.mxu0 0
        %2704 = vmatpush2.bf16.msra.mxu0 0
        %2705 = vmatprep.subr.bf16.mxu0 0
        %2706 = vmatpush2.bf16.msra.mxu0 0
        %2707 = vmatprep.subr.bf16.mxu0 0
        %2708 = vmatpush2.bf16.msra.mxu0 0
        %2709 = vmatprep.subr.bf16.mxu0 0
        %2710 = vmatpush2.bf16.msra.mxu0 0
        %2711 = vmatprep.subr.bf16.mxu0 0
        %2712 = vmatpush2.bf16.msra.mxu0 0
        %2713 = vmatprep.subr.bf16.mxu0 0
        %2714 = vmatpush2.bf16.msra.mxu0 0
        %2715 = vmatprep.subr.bf16.mxu0 0
        %2716 = vmatpush2.bf16.msra.mxu0 0
        %2717 = vmatprep.subr.bf16.mxu0 0
        %2718 = vmatpush2.bf16.msra.mxu0 0
        %2719 = vmatprep.mubr.bf16.mxu0 0
        %2720 = vmatmul.mubr.bf16.gmra.mxu0 %v2454
        %v2721 = vpop.f32.mrf.mxu0
        %v2722 = vadd.f32 0.0, %v2721
        %v2723 = vpop.f32.mrf.mxu0
        %v2724 = vpop.f32.mrf.mxu0
        %v2725 = vpop.f32.mrf.mxu0
        %2726 = vdwg.mxu0
        %v2727 = vmul.f32 %v2665, %v519
        %v2728 = vmul.f32 %v2722, %v520
        %v2729 = vadd.f32 %v2727, %v2728
        %s2730 = scalar_lea.vmem %s5, 48
        %v2731 = vld [vmem:[%s2730] sm:$0xf]
        %v2732 = vld [vmem:[%s2730 + $0x4] sm:$0xf]
        %v2733 = vld [vmem:[%s2730 + $0x8] sm:$0xf]
        %v2734 = vld [vmem:[%s2730 + $0xc] sm:$0xf]
        %v2739 = vunpack.c.l.b16 %v2731
        %v2740 = vunpack.c.l.b16 %v2732
        %v2741 = vunpack.c.l.b16 %v2733
        %v2742 = vunpack.c.l.b16 %v2734
        %v2743 = vpack.c.b16 %v2740, %v2739
        %v2744 = vpack.c.b16 %v2742, %v2741
        %2747 = vmatprep.subr.bf16.mxu0 0
        %2748 = vmatpush1.bf16.msra.mxu0 0
        %2749 = vmatprep.subr.bf16.mxu0 0
        %2750 = vmatpush1.bf16.msra.mxu0 0
        %2751 = vmatprep.subr.bf16.mxu0 0
        %2752 = vmatpush1.bf16.msra.mxu0 0
        %2753 = vmatprep.subr.bf16.mxu0 0
        %2754 = vmatpush1.bf16.msra.mxu0 0
        %2755 = vmatprep.subr.bf16.mxu0 0
        %2756 = vmatpush1.bf16.msra.mxu0 0
        %2757 = vmatprep.subr.bf16.mxu0 0
        %2758 = vmatpush1.bf16.msra.mxu0 0
        %2759 = vmatprep.subr.bf16.mxu0 0
        %2760 = vmatpush1.bf16.msra.mxu0 %v2744
        %2761 = vmatprep.subr.bf16.mxu0 0
        %2762 = vmatpush1.bf16.msra.mxu0 %v2743
        %2763 = vmatprep.subr.bf16.mxu0 0
        %2764 = vmatpush2.bf16.msra.mxu0 0
        %2765 = vmatprep.subr.bf16.mxu0 0
        %2766 = vmatpush2.bf16.msra.mxu0 0
        %2767 = vmatprep.subr.bf16.mxu0 0
        %2768 = vmatpush2.bf16.msra.mxu0 0
        %2769 = vmatprep.subr.bf16.mxu0 0
        %2770 = vmatpush2.bf16.msra.mxu0 0
        %2771 = vmatprep.subr.bf16.mxu0 0
        %2772 = vmatpush2.bf16.msra.mxu0 0
        %2773 = vmatprep.subr.bf16.mxu0 0
        %2774 = vmatpush2.bf16.msra.mxu0 0
        %2775 = vmatprep.subr.bf16.mxu0 0
        %2776 = vmatpush2.bf16.msra.mxu0 0
        %2777 = vmatprep.subr.bf16.mxu0 0
        %2778 = vmatpush2.bf16.msra.mxu0 0
        %2779 = vmatprep.mubr.bf16.mxu0 0
        %2780 = vmatmul.mubr.bf16.gmra.mxu0 %v2454
        %v2781 = vpop.f32.mrf.mxu0
        %v2782 = vadd.f32 0.0, %v2781
        %v2783 = vpop.f32.mrf.mxu0
        %v2784 = vpop.f32.mrf.mxu0
        %v2785 = vpop.f32.mrf.mxu0
        %2786 = vdwg.mxu0
        %s2787 = scalar_lea.vmem %s1, 64
        %v2788 = vld [vmem:[%s2787] sm:$0xf]
        %v2789 = vld [vmem:[%s2787 + $0x4] sm:$0xf]
        %v2790 = vld [vmem:[%s2787 + $0x8] sm:$0xf]
        %v2791 = vld [vmem:[%s2787 + $0xc] sm:$0xf]
        %v2796 = vunpack.c.l.b16 %v2788
        %v2797 = vunpack.c.l.b16 %v2789
        %v2798 = vunpack.c.l.b16 %v2790
        %v2799 = vunpack.c.l.b16 %v2791
        %v2800 = vpack.c.b16 %v2797, %v2796
        %v2801 = vpack.c.b16 %v2799, %v2798
        %2804 = vmatprep.subr.bf16.mxu0 0
        %2805 = vmatpush1.bf16.msra.mxu0 0
        %2806 = vmatprep.subr.bf16.mxu0 0
        %2807 = vmatpush1.bf16.msra.mxu0 0
        %2808 = vmatprep.subr.bf16.mxu0 0
        %2809 = vmatpush1.bf16.msra.mxu0 0
        %2810 = vmatprep.subr.bf16.mxu0 0
        %2811 = vmatpush1.bf16.msra.mxu0 0
        %2812 = vmatprep.subr.bf16.mxu0 0
        %2813 = vmatpush1.bf16.msra.mxu0 0
        %2814 = vmatprep.subr.bf16.mxu0 0
        %2815 = vmatpush1.bf16.msra.mxu0 0
        %2816 = vmatprep.subr.bf16.mxu0 0
        %2817 = vmatpush1.bf16.msra.mxu0 %v2801
        %2818 = vmatprep.subr.bf16.mxu0 0
        %2819 = vmatpush1.bf16.msra.mxu0 %v2800
        %2820 = vmatprep.subr.bf16.mxu0 0
        %2821 = vmatpush2.bf16.msra.mxu0 0
        %2822 = vmatprep.subr.bf16.mxu0 0
        %2823 = vmatpush2.bf16.msra.mxu0 0
        %2824 = vmatprep.subr.bf16.mxu0 0
        %2825 = vmatpush2.bf16.msra.mxu0 0
        %2826 = vmatprep.subr.bf16.mxu0 0
        %2827 = vmatpush2.bf16.msra.mxu0 0
        %2828 = vmatprep.subr.bf16.mxu0 0
        %2829 = vmatpush2.bf16.msra.mxu0 0
        %2830 = vmatprep.subr.bf16.mxu0 0
        %2831 = vmatpush2.bf16.msra.mxu0 0
        %2832 = vmatprep.subr.bf16.mxu0 0
        %2833 = vmatpush2.bf16.msra.mxu0 0
        %2834 = vmatprep.subr.bf16.mxu0 0
        %2835 = vmatpush2.bf16.msra.mxu0 0
        %2836 = vmatprep.mubr.bf16.mxu0 0
        %2837 = vmatmul.mubr.bf16.gmra.mxu0 %v2454
        %v2838 = vpop.f32.mrf.mxu0
        %v2839 = vadd.f32 0.0, %v2838
        %v2840 = vpop.f32.mrf.mxu0
        %v2841 = vpop.f32.mrf.mxu0
        %v2842 = vpop.f32.mrf.mxu0
        %2843 = vdwg.mxu0
        %s2844 = scalar_lea.vmem %s2, 64
        %v2845 = vld [vmem:[%s2844] sm:$0xf]
        %v2846 = vld [vmem:[%s2844 + $0x4] sm:$0xf]
        %v2847 = vld [vmem:[%s2844 + $0x8] sm:$0xf]
        %v2848 = vld [vmem:[%s2844 + $0xc] sm:$0xf]
        %v2853 = vunpack.c.l.b16 %v2845
        %v2854 = vunpack.c.l.b16 %v2846
        %v2855 = vunpack.c.l.b16 %v2847
        %v2856 = vunpack.c.l.b16 %v2848
        %v2857 = vpack.c.b16 %v2854, %v2853
        %v2858 = vpack.c.b16 %v2856, %v2855
        %2861 = vmatprep.subr.bf16.mxu0 0
        %2862 = vmatpush1.bf16.msra.mxu0 0
        %2863 = vmatprep.subr.bf16.mxu0 0
        %2864 = vmatpush1.bf16.msra.mxu0 0
        %2865 = vmatprep.subr.bf16.mxu0 0
        %2866 = vmatpush1.bf16.msra.mxu0 0
        %2867 = vmatprep.subr.bf16.mxu0 0
        %2868 = vmatpush1.bf16.msra.mxu0 0
        %2869 = vmatprep.subr.bf16.mxu0 0
        %2870 = vmatpush1.bf16.msra.mxu0 0
        %2871 = vmatprep.subr.bf16.mxu0 0
        %2872 = vmatpush1.bf16.msra.mxu0 0
        %2873 = vmatprep.subr.bf16.mxu0 0
        %2874 = vmatpush1.bf16.msra.mxu0 %v2858
        %2875 = vmatprep.subr.bf16.mxu0 0
        %2876 = vmatpush1.bf16.msra.mxu0 %v2857
        %2877 = vmatprep.subr.bf16.mxu0 0
        %2878 = vmatpush2.bf16.msra.mxu0 0
        %2879 = vmatprep.subr.bf16.mxu0 0
        %2880 = vmatpush2.bf16.msra.mxu0 0
        %2881 = vmatprep.subr.bf16.mxu0 0
        %2882 = vmatpush2.bf16.msra.mxu0 0
        %2883 = vmatprep.subr.bf16.mxu0 0
        %2884 = vmatpush2.bf16.msra.mxu0 0
        %2885 = vmatprep.subr.bf16.mxu0 0
        %2886 = vmatpush2.bf16.msra.mxu0 0
        %2887 = vmatprep.subr.bf16.mxu0 0
        %2888 = vmatpush2.bf16.msra.mxu0 0
        %2889 = vmatprep.subr.bf16.mxu0 0
        %2890 = vmatpush2.bf16.msra.mxu0 0
        %2891 = vmatprep.subr.bf16.mxu0 0
        %2892 = vmatpush2.bf16.msra.mxu0 0
        %2893 = vmatprep.mubr.bf16.mxu0 0
        %2894 = vmatmul.mubr.bf16.gmra.mxu0 %v2454
        %v2895 = vpop.f32.mrf.mxu0
        %v2896 = vadd.f32 0.0, %v2895
        %v2897 = vpop.f32.mrf.mxu0
        %v2898 = vpop.f32.mrf.mxu0
        %v2899 = vpop.f32.mrf.mxu0
        %2900 = vdwg.mxu0
        %v2901 = vmul.f32 %v2839, %v519
        %v2902 = vmul.f32 %v2896, %v520
        %v2903 = vadd.f32 %v2901, %v2902
        %v2905 = vsel %vm1008, %v2903, 0
        %v2908 = vsel %vm1008, %v2555, 0
        %2910 = vmatprep.subr.mxu0 0.0
        %2911 = vmatpush1.xpose.msra.mxu0 0.0
        %2912 = vmatprep.subr.mxu0 0.0
        %2913 = vmatpush1.xpose.msra.mxu0 0.0
        %2914 = vmatprep.subr.mxu0 0.0
        %2915 = vmatpush1.xpose.msra.mxu0 0.0
        %2916 = vmatprep.subr.mxu0 0.0
        %2917 = vmatpush1.xpose.msra.mxu0 0.0
        %2918 = vmatprep.subr.mxu0 0.0
        %2919 = vmatpush1.xpose.msra.mxu0 0.0
        %2920 = vmatprep.subr.mxu0 0.0
        %2921 = vmatpush1.xpose.msra.mxu0 0.0
        %2922 = vmatprep.subr.mxu0 0.0
        %2923 = vmatpush1.xpose.msra.mxu0 0.0
        %2924 = vmatprep.subr.mxu0 0.0
        %2925 = vmatpush1.xpose.msra.mxu0 0.0
        %2926 = vmatprep.subr.mxu0 0.0
        %2927 = vmatpush1.xpose.msra.mxu0 0.0
        %2928 = vmatprep.subr.mxu0 0.0
        %2929 = vmatpush1.xpose.msra.mxu0 0.0
        %2930 = vmatprep.subr.mxu0 0.0
        %2931 = vmatpush1.xpose.msra.mxu0 0.0
        %2932 = vmatprep.subr.mxu0 0.0
        %2933 = vmatpush1.xpose.msra.mxu0 0.0
        %2934 = vmatprep.subr.mxu0 0.0
        %2935 = vmatpush1.xpose.msra.mxu0 0.0
        %2936 = vmatprep.subr.mxu0 0.0
        %2937 = vmatpush1.xpose.msra.mxu0 0.0
        %2938 = vmatprep.subr.mxu0 0.0
        %2939 = vmatpush1.xpose.msra.mxu0 0.0
        %2940 = vmatprep.subr.mxu0 0.0
        %2941 = vmatpush1.xpose.msra.mxu0 %v2908
        %2942 = vmatprep.subr.mxu0 0.0
        %2943 = vmatpush2.xpose.msra.mxu0 0.0
        %2944 = vmatprep.subr.mxu0 0.0
        %2945 = vmatpush2.xpose.msra.mxu0 0.0
        %2946 = vmatprep.subr.mxu0 0.0
        %2947 = vmatpush2.xpose.msra.mxu0 0.0
        %2948 = vmatprep.subr.mxu0 0.0
        %2949 = vmatpush2.xpose.msra.mxu0 0.0
        %2950 = vmatprep.subr.mxu0 0.0
        %2951 = vmatpush2.xpose.msra.mxu0 0.0
        %2952 = vmatprep.subr.mxu0 0.0
        %2953 = vmatpush2.xpose.msra.mxu0 0.0
        %2954 = vmatprep.subr.mxu0 0.0
        %2955 = vmatpush2.xpose.msra.mxu0 0.0
        %2956 = vmatprep.subr.mxu0 0.0
        %2957 = vmatpush2.xpose.msra.mxu0 0.0
        %2958 = vmatprep.subr.mxu0 0.0
        %2959 = vmatpush2.xpose.msra.mxu0 0.0
        %2960 = vmatprep.subr.mxu0 0.0
        %2961 = vmatpush2.xpose.msra.mxu0 0.0
        %2962 = vmatprep.subr.mxu0 0.0
        %2963 = vmatpush2.xpose.msra.mxu0 0.0
        %2964 = vmatprep.subr.mxu0 0.0
        %2965 = vmatpush2.xpose.msra.mxu0 0.0
        %2966 = vmatprep.subr.mxu0 0.0
        %2967 = vmatpush2.xpose.msra.mxu0 0.0
        %2968 = vmatprep.subr.mxu0 0.0
        %2969 = vmatpush2.xpose.msra.mxu0 0.0
        %2970 = vmatprep.subr.mxu0 0.0
        %2971 = vmatpush2.xpose.msra.mxu0 0.0
        %2972 = vmatprep.subr.mxu0 0.0
        %2973 = vmatpush2.xpose.msra.mxu0 0.0
        %2974 = vmatprep.mubr.f32.mxu0 0.0
        %2975 = vmatmul.mubr.f32.gmra.mxu0 %v2905
        %v2976 = vpop.f32.mrf.mxu0
        %v2977 = vadd.f32 0.0, %v2976
        %v2978 = vpop.f32.mrf.mxu0
        %2979 = vdwg.mxu0
        %v2980 = vmul.f32 %v2977, 0.35355338
        %v2981 = vsel %vm525, %v2980, -1e+30
        %v2982 = vsel %vm1008, %v2981, -inf
        %2983 = vmax.xlane.f32.xlu0 %v2982
        %v2984 = vpop.xlane.xlu0 %2983
        %v2985 = vsub.f32 %v2981, %v2984
        %v2986 = vmul.f32 %v2985, 1.442695
        %v2987 = vpow.pop %v2986
        %v2988 = vsel %vm1008, %v2987, 0.0
        %2989 = vadd.xlane.f32.xlu0 %v2988
        %v2990 = vpop.xlane.xlu0 %2989
        %v2991 = vrcp.pop %v2990
        %v2992 = vmul.f32 %v2987, %v2991
        %v2994 = vsel %vm1008, %v2992, 0
        %2996 = vmatprep.subr.mxu0 0.0
        %2997 = vmatpush1.msra.mxu0 0.0
        %2998 = vmatprep.subr.mxu0 0.0
        %2999 = vmatpush1.msra.mxu0 0.0
        %3000 = vmatprep.subr.mxu0 0.0
        %3001 = vmatpush1.msra.mxu0 0.0
        %3002 = vmatprep.subr.mxu0 0.0
        %3003 = vmatpush1.msra.mxu0 0.0
        %3004 = vmatprep.subr.mxu0 0.0
        %3005 = vmatpush1.msra.mxu0 0.0
        %3006 = vmatprep.subr.mxu0 0.0
        %3007 = vmatpush1.msra.mxu0 0.0
        %3008 = vmatprep.subr.mxu0 0.0
        %3009 = vmatpush1.msra.mxu0 0.0
        %3010 = vmatprep.subr.mxu0 0.0
        %3011 = vmatpush1.msra.mxu0 0.0
        %3012 = vmatprep.subr.mxu0 0.0
        %3013 = vmatpush1.msra.mxu0 0.0
        %3014 = vmatprep.subr.mxu0 0.0
        %3015 = vmatpush1.msra.mxu0 0.0
        %3016 = vmatprep.subr.mxu0 0.0
        %3017 = vmatpush1.msra.mxu0 0.0
        %3018 = vmatprep.subr.mxu0 0.0
        %3019 = vmatpush1.msra.mxu0 0.0
        %3020 = vmatprep.subr.mxu0 0.0
        %3021 = vmatpush1.msra.mxu0 0.0
        %3022 = vmatprep.subr.mxu0 0.0
        %3023 = vmatpush1.msra.mxu0 0.0
        %3024 = vmatprep.subr.mxu0 0.0
        %3025 = vmatpush1.msra.mxu0 0.0
        %3026 = vmatprep.subr.mxu0 0.0
        %3027 = vmatpush1.msra.mxu0 %v2608
        %3028 = vmatprep.subr.mxu0 0.0
        %3029 = vmatpush2.msra.mxu0 0.0
        %3030 = vmatprep.subr.mxu0 0.0
        %3031 = vmatpush2.msra.mxu0 0.0
        %3032 = vmatprep.subr.mxu0 0.0
        %3033 = vmatpush2.msra.mxu0 0.0
        %3034 = vmatprep.subr.mxu0 0.0
        %3035 = vmatpush2.msra.mxu0 0.0
        %3036 = vmatprep.subr.mxu0 0.0
        %3037 = vmatpush2.msra.mxu0 0.0
        %3038 = vmatprep.subr.mxu0 0.0
        %3039 = vmatpush2.msra.mxu0 0.0
        %3040 = vmatprep.subr.mxu0 0.0
        %3041 = vmatpush2.msra.mxu0 0.0
        %3042 = vmatprep.subr.mxu0 0.0
        %3043 = vmatpush2.msra.mxu0 0.0
        %3044 = vmatprep.subr.mxu0 0.0
        %3045 = vmatpush2.msra.mxu0 0.0
        %3046 = vmatprep.subr.mxu0 0.0
        %3047 = vmatpush2.msra.mxu0 0.0
        %3048 = vmatprep.subr.mxu0 0.0
        %3049 = vmatpush2.msra.mxu0 0.0
        %3050 = vmatprep.subr.mxu0 0.0
        %3051 = vmatpush2.msra.mxu0 0.0
        %3052 = vmatprep.subr.mxu0 0.0
        %3053 = vmatpush2.msra.mxu0 0.0
        %3054 = vmatprep.subr.mxu0 0.0
        %3055 = vmatpush2.msra.mxu0 0.0
        %3056 = vmatprep.subr.mxu0 0.0
        %3057 = vmatpush2.msra.mxu0 0.0
        %3058 = vmatprep.subr.mxu0 0.0
        %3059 = vmatpush2.msra.mxu0 0.0
        %3060 = vmatprep.mubr.f32.mxu0 0.0
        %3061 = vmatmul.mubr.f32.gmra.mxu0 %v2994
        %v3062 = vpop.f32.mrf.mxu0
        %v3063 = vadd.f32 0.0, %v3062
        %v3064 = vpop.f32.mrf.mxu0
        %3065 = vdwg.mxu0
        %v3066 = vpack.c.bf16 %v3063, %v3063
        %s3067 = scalar_lea.vmem %s6, 16
        %v3068 = vld [vmem:[%s3067] sm:$0xf]
        %s3069 = scalar_lea.vmem %s1, 80
        %v3070 = vld [vmem:[%s3069] sm:$0xf]
        %v3071 = vld [vmem:[%s3069 + $0x4] sm:$0xf]
        %v3072 = vld [vmem:[%s3069 + $0x8] sm:$0xf]
        %v3073 = vld [vmem:[%s3069 + $0xc] sm:$0xf]
        %v3078 = vunpack.c.l.b16 %v3070
        %v3079 = vunpack.c.l.b16 %v3071
        %v3080 = vunpack.c.l.b16 %v3072
        %v3081 = vunpack.c.l.b16 %v3073
        %v3082 = vpack.c.b16 %v3079, %v3078
        %v3083 = vpack.c.b16 %v3081, %v3080
        %3086 = vmatprep.subr.bf16.mxu0 0
        %3087 = vmatpush1.bf16.msra.mxu0 0
        %3088 = vmatprep.subr.bf16.mxu0 0
        %3089 = vmatpush1.bf16.msra.mxu0 0
        %3090 = vmatprep.subr.bf16.mxu0 0
        %3091 = vmatpush1.bf16.msra.mxu0 0
        %3092 = vmatprep.subr.bf16.mxu0 0
        %3093 = vmatpush1.bf16.msra.mxu0 0
        %3094 = vmatprep.subr.bf16.mxu0 0
        %3095 = vmatpush1.bf16.msra.mxu0 0
        %3096 = vmatprep.subr.bf16.mxu0 0
        %3097 = vmatpush1.bf16.msra.mxu0 0
        %3098 = vmatprep.subr.bf16.mxu0 0
        %3099 = vmatpush1.bf16.msra.mxu0 %v3083
        %3100 = vmatprep.subr.bf16.mxu0 0
        %3101 = vmatpush1.bf16.msra.mxu0 %v3082
        %3102 = vmatprep.subr.bf16.mxu0 0
        %3103 = vmatpush2.bf16.msra.mxu0 0
        %3104 = vmatprep.subr.bf16.mxu0 0
        %3105 = vmatpush2.bf16.msra.mxu0 0
        %3106 = vmatprep.subr.bf16.mxu0 0
        %3107 = vmatpush2.bf16.msra.mxu0 0
        %3108 = vmatprep.subr.bf16.mxu0 0
        %3109 = vmatpush2.bf16.msra.mxu0 0
        %3110 = vmatprep.subr.bf16.mxu0 0
        %3111 = vmatpush2.bf16.msra.mxu0 0
        %3112 = vmatprep.subr.bf16.mxu0 0
        %3113 = vmatpush2.bf16.msra.mxu0 0
        %3114 = vmatprep.subr.bf16.mxu0 0
        %3115 = vmatpush2.bf16.msra.mxu0 0
        %3116 = vmatprep.subr.bf16.mxu0 0
        %3117 = vmatpush2.bf16.msra.mxu0 0
        %3118 = vmatprep.mubr.bf16.mxu0 0
        %3119 = vmatmul.mubr.bf16.gmra.mxu0 %v2454
        %v3120 = vpop.f32.mrf.mxu0
        %v3121 = vadd.f32 0.0, %v3120
        %v3122 = vpop.f32.mrf.mxu0
        %v3123 = vpop.f32.mrf.mxu0
        %v3124 = vpop.f32.mrf.mxu0
        %3125 = vdwg.mxu0
        %s3126 = scalar_lea.vmem %s2, 80
        %v3127 = vld [vmem:[%s3126] sm:$0xf]
        %v3128 = vld [vmem:[%s3126 + $0x4] sm:$0xf]
        %v3129 = vld [vmem:[%s3126 + $0x8] sm:$0xf]
        %v3130 = vld [vmem:[%s3126 + $0xc] sm:$0xf]
        %v3135 = vunpack.c.l.b16 %v3127
        %v3136 = vunpack.c.l.b16 %v3128
        %v3137 = vunpack.c.l.b16 %v3129
        %v3138 = vunpack.c.l.b16 %v3130
        %v3139 = vpack.c.b16 %v3136, %v3135
        %v3140 = vpack.c.b16 %v3138, %v3137
        %3143 = vmatprep.subr.bf16.mxu0 0
        %3144 = vmatpush1.bf16.msra.mxu0 0
        %3145 = vmatprep.subr.bf16.mxu0 0
        %3146 = vmatpush1.bf16.msra.mxu0 0
        %3147 = vmatprep.subr.bf16.mxu0 0
        %3148 = vmatpush1.bf16.msra.mxu0 0
        %3149 = vmatprep.subr.bf16.mxu0 0
        %3150 = vmatpush1.bf16.msra.mxu0 0
        %3151 = vmatprep.subr.bf16.mxu0 0
        %3152 = vmatpush1.bf16.msra.mxu0 0
        %3153 = vmatprep.subr.bf16.mxu0 0
        %3154 = vmatpush1.bf16.msra.mxu0 0
        %3155 = vmatprep.subr.bf16.mxu0 0
        %3156 = vmatpush1.bf16.msra.mxu0 %v3140
        %3157 = vmatprep.subr.bf16.mxu0 0
        %3158 = vmatpush1.bf16.msra.mxu0 %v3139
        %3159 = vmatprep.subr.bf16.mxu0 0
        %3160 = vmatpush2.bf16.msra.mxu0 0
        %3161 = vmatprep.subr.bf16.mxu0 0
        %3162 = vmatpush2.bf16.msra.mxu0 0
        %3163 = vmatprep.subr.bf16.mxu0 0
        %3164 = vmatpush2.bf16.msra.mxu0 0
        %3165 = vmatprep.subr.bf16.mxu0 0
        %3166 = vmatpush2.bf16.msra.mxu0 0
        %3167 = vmatprep.subr.bf16.mxu0 0
        %3168 = vmatpush2.bf16.msra.mxu0 0
        %3169 = vmatprep.subr.bf16.mxu0 0
        %3170 = vmatpush2.bf16.msra.mxu0 0
        %3171 = vmatprep.subr.bf16.mxu0 0
        %3172 = vmatpush2.bf16.msra.mxu0 0
        %3173 = vmatprep.subr.bf16.mxu0 0
        %3174 = vmatpush2.bf16.msra.mxu0 0
        %3175 = vmatprep.mubr.bf16.mxu0 0
        %3176 = vmatmul.mubr.bf16.gmra.mxu0 %v2454
        %v3177 = vpop.f32.mrf.mxu0
        %v3178 = vadd.f32 0.0, %v3177
        %v3179 = vpop.f32.mrf.mxu0
        %v3180 = vpop.f32.mrf.mxu0
        %v3181 = vpop.f32.mrf.mxu0
        %3182 = vdwg.mxu0
        %v3183 = vmul.f32 %v3121, %v519
        %v3184 = vmul.f32 %v3178, %v520
        %v3185 = vadd.f32 %v3183, %v3184
        %v3187 = vsel %vm1008, %v3185, 0
        %3189 = vmatprep.subr.mxu0 0.0
        %3190 = vmatpush1.xpose.msra.mxu0 0.0
        %3191 = vmatprep.subr.mxu0 0.0
        %3192 = vmatpush1.xpose.msra.mxu0 0.0
        %3193 = vmatprep.subr.mxu0 0.0
        %3194 = vmatpush1.xpose.msra.mxu0 0.0
        %3195 = vmatprep.subr.mxu0 0.0
        %3196 = vmatpush1.xpose.msra.mxu0 0.0
        %3197 = vmatprep.subr.mxu0 0.0
        %3198 = vmatpush1.xpose.msra.mxu0 0.0
        %3199 = vmatprep.subr.mxu0 0.0
        %3200 = vmatpush1.xpose.msra.mxu0 0.0
        %3201 = vmatprep.subr.mxu0 0.0
        %3202 = vmatpush1.xpose.msra.mxu0 0.0
        %3203 = vmatprep.subr.mxu0 0.0
        %3204 = vmatpush1.xpose.msra.mxu0 0.0
        %3205 = vmatprep.subr.mxu0 0.0
        %3206 = vmatpush1.xpose.msra.mxu0 0.0
        %3207 = vmatprep.subr.mxu0 0.0
        %3208 = vmatpush1.xpose.msra.mxu0 0.0
        %3209 = vmatprep.subr.mxu0 0.0
        %3210 = vmatpush1.xpose.msra.mxu0 0.0
        %3211 = vmatprep.subr.mxu0 0.0
        %3212 = vmatpush1.xpose.msra.mxu0 0.0
        %3213 = vmatprep.subr.mxu0 0.0
        %3214 = vmatpush1.xpose.msra.mxu0 0.0
        %3215 = vmatprep.subr.mxu0 0.0
        %3216 = vmatpush1.xpose.msra.mxu0 0.0
        %3217 = vmatprep.subr.mxu0 0.0
        %3218 = vmatpush1.xpose.msra.mxu0 0.0
        %3219 = vmatprep.subr.mxu0 0.0
        %3220 = vmatpush1.xpose.msra.mxu0 %v2908
        %3221 = vmatprep.subr.mxu0 0.0
        %3222 = vmatpush2.xpose.msra.mxu0 0.0
        %3223 = vmatprep.subr.mxu0 0.0
        %3224 = vmatpush2.xpose.msra.mxu0 0.0
        %3225 = vmatprep.subr.mxu0 0.0
        %3226 = vmatpush2.xpose.msra.mxu0 0.0
        %3227 = vmatprep.subr.mxu0 0.0
        %3228 = vmatpush2.xpose.msra.mxu0 0.0
        %3229 = vmatprep.subr.mxu0 0.0
        %3230 = vmatpush2.xpose.msra.mxu0 0.0
        %3231 = vmatprep.subr.mxu0 0.0
        %3232 = vmatpush2.xpose.msra.mxu0 0.0
        %3233 = vmatprep.subr.mxu0 0.0
        %3234 = vmatpush2.xpose.msra.mxu0 0.0
        %3235 = vmatprep.subr.mxu0 0.0
        %3236 = vmatpush2.xpose.msra.mxu0 0.0
        %3237 = vmatprep.subr.mxu0 0.0
        %3238 = vmatpush2.xpose.msra.mxu0 0.0
        %3239 = vmatprep.subr.mxu0 0.0
        %3240 = vmatpush2.xpose.msra.mxu0 0.0
        %3241 = vmatprep.subr.mxu0 0.0
        %3242 = vmatpush2.xpose.msra.mxu0 0.0
        %3243 = vmatprep.subr.mxu0 0.0
        %3244 = vmatpush2.xpose.msra.mxu0 0.0
        %3245 = vmatprep.subr.mxu0 0.0
        %3246 = vmatpush2.xpose.msra.mxu0 0.0
        %3247 = vmatprep.subr.mxu0 0.0
        %3248 = vmatpush2.xpose.msra.mxu0 0.0
        %3249 = vmatprep.subr.mxu0 0.0
        %3250 = vmatpush2.xpose.msra.mxu0 0.0
        %3251 = vmatprep.subr.mxu0 0.0
        %3252 = vmatpush2.xpose.msra.mxu0 0.0
        %3253 = vmatprep.mubr.f32.mxu0 0.0
        %3254 = vmatmul.mubr.f32.gmra.mxu0 %v3187
        %v3255 = vpop.f32.mrf.mxu0
        %v3256 = vadd.f32 0.0, %v3255
        %v3257 = vpop.f32.mrf.mxu0
        %3258 = vdwg.mxu0
        %v3259 = vmul.f32 %v3256, 0.35355338
        %v3260 = vsel %vm525, %v3259, -1e+30
        %v3261 = vsel %vm1008, %v3260, -inf
        %3262 = vmax.xlane.f32.xlu0 %v3261
        %v3263 = vpop.xlane.xlu0 %3262
        %v3264 = vsub.f32 %v3260, %v3263
        %v3265 = vmul.f32 %v3264, 1.442695
        %v3266 = vpow.pop %v3265
        %v3267 = vsel %vm1008, %v3266, 0.0
        %3268 = vadd.xlane.f32.xlu0 %v3267
        %v3269 = vpop.xlane.xlu0 %3268
        %v3270 = vrcp.pop %v3269
        %v3271 = vmul.f32 %v3266, %v3270
        %v3273 = vsel %vm1008, %v3271, 0
        %3275 = vmatprep.subr.mxu0 0.0
        %3276 = vmatpush1.msra.mxu0 0.0
        %3277 = vmatprep.subr.mxu0 0.0
        %3278 = vmatpush1.msra.mxu0 0.0
        %3279 = vmatprep.subr.mxu0 0.0
        %3280 = vmatpush1.msra.mxu0 0.0
        %3281 = vmatprep.subr.mxu0 0.0
        %3282 = vmatpush1.msra.mxu0 0.0
        %3283 = vmatprep.subr.mxu0 0.0
        %3284 = vmatpush1.msra.mxu0 0.0
        %3285 = vmatprep.subr.mxu0 0.0
        %3286 = vmatpush1.msra.mxu0 0.0
        %3287 = vmatprep.subr.mxu0 0.0
        %3288 = vmatpush1.msra.mxu0 0.0
        %3289 = vmatprep.subr.mxu0 0.0
        %3290 = vmatpush1.msra.mxu0 0.0
        %3291 = vmatprep.subr.mxu0 0.0
        %3292 = vmatpush1.msra.mxu0 0.0
        %3293 = vmatprep.subr.mxu0 0.0
        %3294 = vmatpush1.msra.mxu0 0.0
        %3295 = vmatprep.subr.mxu0 0.0
        %3296 = vmatpush1.msra.mxu0 0.0
        %3297 = vmatprep.subr.mxu0 0.0
        %3298 = vmatpush1.msra.mxu0 0.0
        %3299 = vmatprep.subr.mxu0 0.0
        %3300 = vmatpush1.msra.mxu0 0.0
        %3301 = vmatprep.subr.mxu0 0.0
        %3302 = vmatpush1.msra.mxu0 0.0
        %3303 = vmatprep.subr.mxu0 0.0
        %3304 = vmatpush1.msra.mxu0 0.0
        %3305 = vmatprep.subr.mxu0 0.0
        %3306 = vmatpush1.msra.mxu0 %v2608
        %3307 = vmatprep.subr.mxu0 0.0
        %3308 = vmatpush2.msra.mxu0 0.0
        %3309 = vmatprep.subr.mxu0 0.0
        %3310 = vmatpush2.msra.mxu0 0.0
        %3311 = vmatprep.subr.mxu0 0.0
        %3312 = vmatpush2.msra.mxu0 0.0
        %3313 = vmatprep.subr.mxu0 0.0
        %3314 = vmatpush2.msra.mxu0 0.0
        %3315 = vmatprep.subr.mxu0 0.0
        %3316 = vmatpush2.msra.mxu0 0.0
        %3317 = vmatprep.subr.mxu0 0.0
        %3318 = vmatpush2.msra.mxu0 0.0
        %3319 = vmatprep.subr.mxu0 0.0
        %3320 = vmatpush2.msra.mxu0 0.0
        %3321 = vmatprep.subr.mxu0 0.0
        %3322 = vmatpush2.msra.mxu0 0.0
        %3323 = vmatprep.subr.mxu0 0.0
        %3324 = vmatpush2.msra.mxu0 0.0
        %3325 = vmatprep.subr.mxu0 0.0
        %3326 = vmatpush2.msra.mxu0 0.0
        %3327 = vmatprep.subr.mxu0 0.0
        %3328 = vmatpush2.msra.mxu0 0.0
        %3329 = vmatprep.subr.mxu0 0.0
        %3330 = vmatpush2.msra.mxu0 0.0
        %3331 = vmatprep.subr.mxu0 0.0
        %3332 = vmatpush2.msra.mxu0 0.0
        %3333 = vmatprep.subr.mxu0 0.0
        %3334 = vmatpush2.msra.mxu0 0.0
        %3335 = vmatprep.subr.mxu0 0.0
        %3336 = vmatpush2.msra.mxu0 0.0
        %3337 = vmatprep.subr.mxu0 0.0
        %3338 = vmatpush2.msra.mxu0 0.0
        %3339 = vmatprep.mubr.f32.mxu0 0.0
        %3340 = vmatmul.mubr.f32.gmra.mxu0 %v3273
        %v3341 = vpop.f32.mrf.mxu0
        %v3342 = vadd.f32 0.0, %v3341
        %v3343 = vpop.f32.mrf.mxu0
        %3344 = vdwg.mxu0
        %v3345 = vpack.c.bf16 %v3342, %v3342
        %s3346 = scalar_lea.vmem %s6, 20
        %v3347 = vld [vmem:[%s3346] sm:$0xf]
        %v3349 = vsel %vm1008, %v3345, 0
        %v3352 = vsel %vm1455, %v3347, 0
        %3354 = vmatprep.subr.bf16.mxu0 0
        %3355 = vmatpush1.bf16.msra.mxu0 0
        %3356 = vmatprep.subr.bf16.mxu0 0
        %3357 = vmatpush1.bf16.msra.mxu0 0
        %3358 = vmatprep.subr.bf16.mxu0 0
        %3359 = vmatpush1.bf16.msra.mxu0 0
        %3360 = vmatprep.subr.bf16.mxu0 0
        %3361 = vmatpush1.bf16.msra.mxu0 0
        %3362 = vmatprep.subr.bf16.mxu0 0
        %3363 = vmatpush1.bf16.msra.mxu0 0
        %3364 = vmatprep.subr.bf16.mxu0 0
        %3365 = vmatpush1.bf16.msra.mxu0 0
        %3366 = vmatprep.subr.bf16.mxu0 0
        %3367 = vmatpush1.bf16.msra.mxu0 0
        %3368 = vmatprep.subr.bf16.mxu0 0
        %3369 = vmatpush1.bf16.msra.mxu0 %v3352
        %3370 = vmatprep.subr.bf16.mxu0 0
        %3371 = vmatpush2.bf16.msra.mxu0 0
        %3372 = vmatprep.subr.bf16.mxu0 0
        %3373 = vmatpush2.bf16.msra.mxu0 0
        %3374 = vmatprep.subr.bf16.mxu0 0
        %3375 = vmatpush2.bf16.msra.mxu0 0
        %3376 = vmatprep.subr.bf16.mxu0 0
        %3377 = vmatpush2.bf16.msra.mxu0 0
        %3378 = vmatprep.subr.bf16.mxu0 0
        %3379 = vmatpush2.bf16.msra.mxu0 0
        %3380 = vmatprep.subr.bf16.mxu0 0
        %3381 = vmatpush2.bf16.msra.mxu0 0
        %3382 = vmatprep.subr.bf16.mxu0 0
        %3383 = vmatpush2.bf16.msra.mxu0 0
        %3384 = vmatprep.subr.bf16.mxu0 0
        %3385 = vmatpush2.bf16.msra.mxu0 0
        %3386 = vmatprep.mubr.bf16.mxu0 0
        %3387 = vmatmul.mubr.bf16.gmra.mxu0 %v3349
        %v3388 = vpop.f32.mrf.mxu0
        %v3389 = vadd.f32 0.0, %v3388
        %v3390 = vpop.f32.mrf.mxu0
        %v3391 = vpop.f32.mrf.mxu0
        %v3392 = vpop.f32.mrf.mxu0
        %3393 = vdwg.mxu0
        %v3395 = vsel %vm1008, %v3066, 0
        %v3398 = vsel %vm1455, %v3068, 0
        %3400 = vmatprep.subr.bf16.mxu0 0
        %3401 = vmatpush1.bf16.msra.mxu0 0
        %3402 = vmatprep.subr.bf16.mxu0 0
        %3403 = vmatpush1.bf16.msra.mxu0 0
        %3404 = vmatprep.subr.bf16.mxu0 0
        %3405 = vmatpush1.bf16.msra.mxu0 0
        %3406 = vmatprep.subr.bf16.mxu0 0
        %3407 = vmatpush1.bf16.msra.mxu0 0
        %3408 = vmatprep.subr.bf16.mxu0 0
        %3409 = vmatpush1.bf16.msra.mxu0 0
        %3410 = vmatprep.subr.bf16.mxu0 0
        %3411 = vmatpush1.bf16.msra.mxu0 0
        %3412 = vmatprep.subr.bf16.mxu0 0
        %3413 = vmatpush1.bf16.msra.mxu0 0
        %3414 = vmatprep.subr.bf16.mxu0 0
        %3415 = vmatpush1.bf16.msra.mxu0 %v3398
        %3416 = vmatprep.subr.bf16.mxu0 0
        %3417 = vmatpush2.bf16.msra.mxu0 0
        %3418 = vmatprep.subr.bf16.mxu0 0
        %3419 = vmatpush2.bf16.msra.mxu0 0
        %3420 = vmatprep.subr.bf16.mxu0 0
        %3421 = vmatpush2.bf16.msra.mxu0 0
        %3422 = vmatprep.subr.bf16.mxu0 0
        %3423 = vmatpush2.bf16.msra.mxu0 0
        %3424 = vmatprep.subr.bf16.mxu0 0
        %3425 = vmatpush2.bf16.msra.mxu0 0
        %3426 = vmatprep.subr.bf16.mxu0 0
        %3427 = vmatpush2.bf16.msra.mxu0 0
        %3428 = vmatprep.subr.bf16.mxu0 0
        %3429 = vmatpush2.bf16.msra.mxu0 0
        %3430 = vmatprep.subr.bf16.mxu0 0
        %3431 = vmatpush2.bf16.msra.mxu0 0
        %3432 = vmatprep.mubr.bf16.mxu0 0
        %3433 = vmatmul.mubr.bf16.gmra.mxu0 %v3395
        %v3434 = vpop.f32.mrf.mxu0
        %v3435 = vadd.f32 %v3389, %v3434
        %v3436 = vpop.f32.mrf.mxu0
        %v3437 = vpop.f32.mrf.mxu0
        %v3438 = vpop.f32.mrf.mxu0
        %3439 = vdwg.mxu0
        %s3440 = scalar_lea.vmem %s1, 96
        %v3441 = vld [vmem:[%s3440] sm:$0xf]
        %v3442 = vld [vmem:[%s3440 + $0x4] sm:$0xf]
        %v3443 = vld [vmem:[%s3440 + $0x8] sm:$0xf]
        %v3444 = vld [vmem:[%s3440 + $0xc] sm:$0xf]
        %v3449 = vunpack.c.l.b16 %v3441
        %v3450 = vunpack.c.l.b16 %v3442
        %v3451 = vunpack.c.l.b16 %v3443
        %v3452 = vunpack.c.l.b16 %v3444
        %v3453 = vpack.c.b16 %v3450, %v3449
        %v3454 = vpack.c.b16 %v3452, %v3451
        %3457 = vmatprep.subr.bf16.mxu0 0
        %3458 = vmatpush1.bf16.msra.mxu0 0
        %3459 = vmatprep.subr.bf16.mxu0 0
        %3460 = vmatpush1.bf16.msra.mxu0 0
        %3461 = vmatprep.subr.bf16.mxu0 0
        %3462 = vmatpush1.bf16.msra.mxu0 0
        %3463 = vmatprep.subr.bf16.mxu0 0
        %3464 = vmatpush1.bf16.msra.mxu0 0
        %3465 = vmatprep.subr.bf16.mxu0 0
        %3466 = vmatpush1.bf16.msra.mxu0 0
        %3467 = vmatprep.subr.bf16.mxu0 0
        %3468 = vmatpush1.bf16.msra.mxu0 0
        %3469 = vmatprep.subr.bf16.mxu0 0
        %3470 = vmatpush1.bf16.msra.mxu0 %v3454
        %3471 = vmatprep.subr.bf16.mxu0 0
        %3472 = vmatpush1.bf16.msra.mxu0 %v3453
        %3473 = vmatprep.subr.bf16.mxu0 0
        %3474 = vmatpush2.bf16.msra.mxu0 0
        %3475 = vmatprep.subr.bf16.mxu0 0
        %3476 = vmatpush2.bf16.msra.mxu0 0
        %3477 = vmatprep.subr.bf16.mxu0 0
        %3478 = vmatpush2.bf16.msra.mxu0 0
        %3479 = vmatprep.subr.bf16.mxu0 0
        %3480 = vmatpush2.bf16.msra.mxu0 0
        %3481 = vmatprep.subr.bf16.mxu0 0
        %3482 = vmatpush2.bf16.msra.mxu0 0
        %3483 = vmatprep.subr.bf16.mxu0 0
        %3484 = vmatpush2.bf16.msra.mxu0 0
        %3485 = vmatprep.subr.bf16.mxu0 0
        %3486 = vmatpush2.bf16.msra.mxu0 0
        %3487 = vmatprep.subr.bf16.mxu0 0
        %3488 = vmatpush2.bf16.msra.mxu0 0
        %3489 = vmatprep.mubr.bf16.mxu0 0
        %3490 = vmatmul.mubr.bf16.gmra.mxu0 %v2454
        %v3491 = vpop.f32.mrf.mxu0
        %v3492 = vadd.f32 0.0, %v3491
        %v3493 = vpop.f32.mrf.mxu0
        %v3494 = vpop.f32.mrf.mxu0
        %v3495 = vpop.f32.mrf.mxu0
        %3496 = vdwg.mxu0
        %s3497 = scalar_lea.vmem %s2, 96
        %v3498 = vld [vmem:[%s3497] sm:$0xf]
        %v3499 = vld [vmem:[%s3497 + $0x4] sm:$0xf]
        %v3500 = vld [vmem:[%s3497 + $0x8] sm:$0xf]
        %v3501 = vld [vmem:[%s3497 + $0xc] sm:$0xf]
        %v3506 = vunpack.c.l.b16 %v3498
        %v3507 = vunpack.c.l.b16 %v3499
        %v3508 = vunpack.c.l.b16 %v3500
        %v3509 = vunpack.c.l.b16 %v3501
        %v3510 = vpack.c.b16 %v3507, %v3506
        %v3511 = vpack.c.b16 %v3509, %v3508
        %3514 = vmatprep.subr.bf16.mxu0 0
        %3515 = vmatpush1.bf16.msra.mxu0 0
        %3516 = vmatprep.subr.bf16.mxu0 0
        %3517 = vmatpush1.bf16.msra.mxu0 0
        %3518 = vmatprep.subr.bf16.mxu0 0
        %3519 = vmatpush1.bf16.msra.mxu0 0
        %3520 = vmatprep.subr.bf16.mxu0 0
        %3521 = vmatpush1.bf16.msra.mxu0 0
        %3522 = vmatprep.subr.bf16.mxu0 0
        %3523 = vmatpush1.bf16.msra.mxu0 0
        %3524 = vmatprep.subr.bf16.mxu0 0
        %3525 = vmatpush1.bf16.msra.mxu0 0
        %3526 = vmatprep.subr.bf16.mxu0 0
        %3527 = vmatpush1.bf16.msra.mxu0 %v3511
        %3528 = vmatprep.subr.bf16.mxu0 0
        %3529 = vmatpush1.bf16.msra.mxu0 %v3510
        %3530 = vmatprep.subr.bf16.mxu0 0
        %3531 = vmatpush2.bf16.msra.mxu0 0
        %3532 = vmatprep.subr.bf16.mxu0 0
        %3533 = vmatpush2.bf16.msra.mxu0 0
        %3534 = vmatprep.subr.bf16.mxu0 0
        %3535 = vmatpush2.bf16.msra.mxu0 0
        %3536 = vmatprep.subr.bf16.mxu0 0
        %3537 = vmatpush2.bf16.msra.mxu0 0
        %3538 = vmatprep.subr.bf16.mxu0 0
        %3539 = vmatpush2.bf16.msra.mxu0 0
        %3540 = vmatprep.subr.bf16.mxu0 0
        %3541 = vmatpush2.bf16.msra.mxu0 0
        %3542 = vmatprep.subr.bf16.mxu0 0
        %3543 = vmatpush2.bf16.msra.mxu0 0
        %3544 = vmatprep.subr.bf16.mxu0 0
        %3545 = vmatpush2.bf16.msra.mxu0 0
        %3546 = vmatprep.mubr.bf16.mxu0 0
        %3547 = vmatmul.mubr.bf16.gmra.mxu0 %v2454
        %v3548 = vpop.f32.mrf.mxu0
        %v3549 = vadd.f32 0.0, %v3548
        %v3550 = vpop.f32.mrf.mxu0
        %v3551 = vpop.f32.mrf.mxu0
        %v3552 = vpop.f32.mrf.mxu0
        %3553 = vdwg.mxu0
        %v3554 = vmul.f32 %v3492, %v519
        %v3555 = vmul.f32 %v3549, %v520
        %v3556 = vadd.f32 %v3554, %v3555
        %v3558 = vsel %vm1008, %v3556, 0
        %v3561 = vsel %vm1008, %v2729, 0
        %3563 = vmatprep.subr.mxu0 0.0
        %3564 = vmatpush1.xpose.msra.mxu0 0.0
        %3565 = vmatprep.subr.mxu0 0.0
        %3566 = vmatpush1.xpose.msra.mxu0 0.0
        %3567 = vmatprep.subr.mxu0 0.0
        %3568 = vmatpush1.xpose.msra.mxu0 0.0
        %3569 = vmatprep.subr.mxu0 0.0
        %3570 = vmatpush1.xpose.msra.mxu0 0.0
        %3571 = vmatprep.subr.mxu0 0.0
        %3572 = vmatpush1.xpose.msra.mxu0 0.0
        %3573 = vmatprep.subr.mxu0 0.0
        %3574 = vmatpush1.xpose.msra.mxu0 0.0
        %3575 = vmatprep.subr.mxu0 0.0
        %3576 = vmatpush1.xpose.msra.mxu0 0.0
        %3577 = vmatprep.subr.mxu0 0.0
        %3578 = vmatpush1.xpose.msra.mxu0 0.0
        %3579 = vmatprep.subr.mxu0 0.0
        %3580 = vmatpush1.xpose.msra.mxu0 0.0
        %3581 = vmatprep.subr.mxu0 0.0
        %3582 = vmatpush1.xpose.msra.mxu0 0.0
        %3583 = vmatprep.subr.mxu0 0.0
        %3584 = vmatpush1.xpose.msra.mxu0 0.0
        %3585 = vmatprep.subr.mxu0 0.0
        %3586 = vmatpush1.xpose.msra.mxu0 0.0
        %3587 = vmatprep.subr.mxu0 0.0
        %3588 = vmatpush1.xpose.msra.mxu0 0.0
        %3589 = vmatprep.subr.mxu0 0.0
        %3590 = vmatpush1.xpose.msra.mxu0 0.0
        %3591 = vmatprep.subr.mxu0 0.0
        %3592 = vmatpush1.xpose.msra.mxu0 0.0
        %3593 = vmatprep.subr.mxu0 0.0
        %3594 = vmatpush1.xpose.msra.mxu0 %v3561
        %3595 = vmatprep.subr.mxu0 0.0
        %3596 = vmatpush2.xpose.msra.mxu0 0.0
        %3597 = vmatprep.subr.mxu0 0.0
        %3598 = vmatpush2.xpose.msra.mxu0 0.0
        %3599 = vmatprep.subr.mxu0 0.0
        %3600 = vmatpush2.xpose.msra.mxu0 0.0
        %3601 = vmatprep.subr.mxu0 0.0
        %3602 = vmatpush2.xpose.msra.mxu0 0.0
        %3603 = vmatprep.subr.mxu0 0.0
        %3604 = vmatpush2.xpose.msra.mxu0 0.0
        %3605 = vmatprep.subr.mxu0 0.0
        %3606 = vmatpush2.xpose.msra.mxu0 0.0
        %3607 = vmatprep.subr.mxu0 0.0
        %3608 = vmatpush2.xpose.msra.mxu0 0.0
        %3609 = vmatprep.subr.mxu0 0.0
        %3610 = vmatpush2.xpose.msra.mxu0 0.0
        %3611 = vmatprep.subr.mxu0 0.0
        %3612 = vmatpush2.xpose.msra.mxu0 0.0
        %3613 = vmatprep.subr.mxu0 0.0
        %3614 = vmatpush2.xpose.msra.mxu0 0.0
        %3615 = vmatprep.subr.mxu0 0.0
        %3616 = vmatpush2.xpose.msra.mxu0 0.0
        %3617 = vmatprep.subr.mxu0 0.0
        %3618 = vmatpush2.xpose.msra.mxu0 0.0
        %3619 = vmatprep.subr.mxu0 0.0
        %3620 = vmatpush2.xpose.msra.mxu0 0.0
        %3621 = vmatprep.subr.mxu0 0.0
        %3622 = vmatpush2.xpose.msra.mxu0 0.0
        %3623 = vmatprep.subr.mxu0 0.0
        %3624 = vmatpush2.xpose.msra.mxu0 0.0
        %3625 = vmatprep.subr.mxu0 0.0
        %3626 = vmatpush2.xpose.msra.mxu0 0.0
        %3627 = vmatprep.mubr.f32.mxu0 0.0
        %3628 = vmatmul.mubr.f32.gmra.mxu0 %v3558
        %v3629 = vpop.f32.mrf.mxu0
        %v3630 = vadd.f32 0.0, %v3629
        %v3631 = vpop.f32.mrf.mxu0
        %3632 = vdwg.mxu0
        %v3633 = vmul.f32 %v3630, 0.35355338
        %v3634 = vsel %vm525, %v3633, -1e+30
        %v3635 = vsel %vm1008, %v3634, -inf
        %3636 = vmax.xlane.f32.xlu0 %v3635
        %v3637 = vpop.xlane.xlu0 %3636
        %v3638 = vsub.f32 %v3634, %v3637
        %v3639 = vmul.f32 %v3638, 1.442695
        %v3640 = vpow.pop %v3639
        %v3641 = vsel %vm1008, %v3640, 0.0
        %3642 = vadd.xlane.f32.xlu0 %v3641
        %v3643 = vpop.xlane.xlu0 %3642
        %v3644 = vrcp.pop %v3643
        %v3645 = vmul.f32 %v3640, %v3644
        %v3647 = vsel %vm1008, %v3645, 0
        %3649 = vmatprep.subr.mxu0 0.0
        %3650 = vmatpush1.msra.mxu0 0.0
        %3651 = vmatprep.subr.mxu0 0.0
        %3652 = vmatpush1.msra.mxu0 0.0
        %3653 = vmatprep.subr.mxu0 0.0
        %3654 = vmatpush1.msra.mxu0 0.0
        %3655 = vmatprep.subr.mxu0 0.0
        %3656 = vmatpush1.msra.mxu0 0.0
        %3657 = vmatprep.subr.mxu0 0.0
        %3658 = vmatpush1.msra.mxu0 0.0
        %3659 = vmatprep.subr.mxu0 0.0
        %3660 = vmatpush1.msra.mxu0 0.0
        %3661 = vmatprep.subr.mxu0 0.0
        %3662 = vmatpush1.msra.mxu0 0.0
        %3663 = vmatprep.subr.mxu0 0.0
        %3664 = vmatpush1.msra.mxu0 0.0
        %3665 = vmatprep.subr.mxu0 0.0
        %3666 = vmatpush1.msra.mxu0 0.0
        %3667 = vmatprep.subr.mxu0 0.0
        %3668 = vmatpush1.msra.mxu0 0.0
        %3669 = vmatprep.subr.mxu0 0.0
        %3670 = vmatpush1.msra.mxu0 0.0
        %3671 = vmatprep.subr.mxu0 0.0
        %3672 = vmatpush1.msra.mxu0 0.0
        %3673 = vmatprep.subr.mxu0 0.0
        %3674 = vmatpush1.msra.mxu0 0.0
        %3675 = vmatprep.subr.mxu0 0.0
        %3676 = vmatpush1.msra.mxu0 0.0
        %3677 = vmatprep.subr.mxu0 0.0
        %3678 = vmatpush1.msra.mxu0 0.0
        %3679 = vmatprep.subr.mxu0 0.0
        %3680 = vmatpush1.msra.mxu0 %v2782
        %3681 = vmatprep.subr.mxu0 0.0
        %3682 = vmatpush2.msra.mxu0 0.0
        %3683 = vmatprep.subr.mxu0 0.0
        %3684 = vmatpush2.msra.mxu0 0.0
        %3685 = vmatprep.subr.mxu0 0.0
        %3686 = vmatpush2.msra.mxu0 0.0
        %3687 = vmatprep.subr.mxu0 0.0
        %3688 = vmatpush2.msra.mxu0 0.0
        %3689 = vmatprep.subr.mxu0 0.0
        %3690 = vmatpush2.msra.mxu0 0.0
        %3691 = vmatprep.subr.mxu0 0.0
        %3692 = vmatpush2.msra.mxu0 0.0
        %3693 = vmatprep.subr.mxu0 0.0
        %3694 = vmatpush2.msra.mxu0 0.0
        %3695 = vmatprep.subr.mxu0 0.0
        %3696 = vmatpush2.msra.mxu0 0.0
        %3697 = vmatprep.subr.mxu0 0.0
        %3698 = vmatpush2.msra.mxu0 0.0
        %3699 = vmatprep.subr.mxu0 0.0
        %3700 = vmatpush2.msra.mxu0 0.0
        %3701 = vmatprep.subr.mxu0 0.0
        %3702 = vmatpush2.msra.mxu0 0.0
        %3703 = vmatprep.subr.mxu0 0.0
        %3704 = vmatpush2.msra.mxu0 0.0
        %3705 = vmatprep.subr.mxu0 0.0
        %3706 = vmatpush2.msra.mxu0 0.0
        %3707 = vmatprep.subr.mxu0 0.0
        %3708 = vmatpush2.msra.mxu0 0.0
        %3709 = vmatprep.subr.mxu0 0.0
        %3710 = vmatpush2.msra.mxu0 0.0
        %3711 = vmatprep.subr.mxu0 0.0
        %3712 = vmatpush2.msra.mxu0 0.0
        %3713 = vmatprep.mubr.f32.mxu0 0.0
        %3714 = vmatmul.mubr.f32.gmra.mxu0 %v3647
        %v3715 = vpop.f32.mrf.mxu0
        %v3716 = vadd.f32 0.0, %v3715
        %v3717 = vpop.f32.mrf.mxu0
        %3718 = vdwg.mxu0
        %v3719 = vpack.c.bf16 %v3716, %v3716
        %s3720 = scalar_lea.vmem %s6, 24
        %v3721 = vld [vmem:[%s3720] sm:$0xf]
        %v3723 = vsel %vm1008, %v3719, 0
        %v3726 = vsel %vm1455, %v3721, 0
        %3728 = vmatprep.subr.bf16.mxu0 0
        %3729 = vmatpush1.bf16.msra.mxu0 0
        %3730 = vmatprep.subr.bf16.mxu0 0
        %3731 = vmatpush1.bf16.msra.mxu0 0
        %3732 = vmatprep.subr.bf16.mxu0 0
        %3733 = vmatpush1.bf16.msra.mxu0 0
        %3734 = vmatprep.subr.bf16.mxu0 0
        %3735 = vmatpush1.bf16.msra.mxu0 0
        %3736 = vmatprep.subr.bf16.mxu0 0
        %3737 = vmatpush1.bf16.msra.mxu0 0
        %3738 = vmatprep.subr.bf16.mxu0 0
        %3739 = vmatpush1.bf16.msra.mxu0 0
        %3740 = vmatprep.subr.bf16.mxu0 0
        %3741 = vmatpush1.bf16.msra.mxu0 0
        %3742 = vmatprep.subr.bf16.mxu0 0
        %3743 = vmatpush1.bf16.msra.mxu0 %v3726
        %3744 = vmatprep.subr.bf16.mxu0 0
        %3745 = vmatpush2.bf16.msra.mxu0 0
        %3746 = vmatprep.subr.bf16.mxu0 0
        %3747 = vmatpush2.bf16.msra.mxu0 0
        %3748 = vmatprep.subr.bf16.mxu0 0
        %3749 = vmatpush2.bf16.msra.mxu0 0
        %3750 = vmatprep.subr.bf16.mxu0 0
        %3751 = vmatpush2.bf16.msra.mxu0 0
        %3752 = vmatprep.subr.bf16.mxu0 0
        %3753 = vmatpush2.bf16.msra.mxu0 0
        %3754 = vmatprep.subr.bf16.mxu0 0
        %3755 = vmatpush2.bf16.msra.mxu0 0
        %3756 = vmatprep.subr.bf16.mxu0 0
        %3757 = vmatpush2.bf16.msra.mxu0 0
        %3758 = vmatprep.subr.bf16.mxu0 0
        %3759 = vmatpush2.bf16.msra.mxu0 0
        %3760 = vmatprep.mubr.bf16.mxu0 0
        %3761 = vmatmul.mubr.bf16.gmra.mxu0 %v3723
        %v3762 = vpop.f32.mrf.mxu0
        %v3763 = vadd.f32 0.0, %v3762
        %v3764 = vpop.f32.mrf.mxu0
        %v3765 = vpop.f32.mrf.mxu0
        %v3766 = vpop.f32.mrf.mxu0
        %3767 = vdwg.mxu0
        %v3768 = vadd.f32 %v3435, %v3763
        %s3769 = scalar_lea.vmem %s1, 112
        %v3770 = vld [vmem:[%s3769] sm:$0xf]
        %v3771 = vld [vmem:[%s3769 + $0x4] sm:$0xf]
        %v3772 = vld [vmem:[%s3769 + $0x8] sm:$0xf]
        %v3773 = vld [vmem:[%s3769 + $0xc] sm:$0xf]
        %v3778 = vunpack.c.l.b16 %v3770
        %v3779 = vunpack.c.l.b16 %v3771
        %v3780 = vunpack.c.l.b16 %v3772
        %v3781 = vunpack.c.l.b16 %v3773
        %v3782 = vpack.c.b16 %v3779, %v3778
        %v3783 = vpack.c.b16 %v3781, %v3780
        %3786 = vmatprep.subr.bf16.mxu0 0
        %3787 = vmatpush1.bf16.msra.mxu0 0
        %3788 = vmatprep.subr.bf16.mxu0 0
        %3789 = vmatpush1.bf16.msra.mxu0 0
        %3790 = vmatprep.subr.bf16.mxu0 0
        %3791 = vmatpush1.bf16.msra.mxu0 0
        %3792 = vmatprep.subr.bf16.mxu0 0
        %3793 = vmatpush1.bf16.msra.mxu0 0
        %3794 = vmatprep.subr.bf16.mxu0 0
        %3795 = vmatpush1.bf16.msra.mxu0 0
        %3796 = vmatprep.subr.bf16.mxu0 0
        %3797 = vmatpush1.bf16.msra.mxu0 0
        %3798 = vmatprep.subr.bf16.mxu0 0
        %3799 = vmatpush1.bf16.msra.mxu0 %v3783
        %3800 = vmatprep.subr.bf16.mxu0 0
        %3801 = vmatpush1.bf16.msra.mxu0 %v3782
        %3802 = vmatprep.subr.bf16.mxu0 0
        %3803 = vmatpush2.bf16.msra.mxu0 0
        %3804 = vmatprep.subr.bf16.mxu0 0
        %3805 = vmatpush2.bf16.msra.mxu0 0
        %3806 = vmatprep.subr.bf16.mxu0 0
        %3807 = vmatpush2.bf16.msra.mxu0 0
        %3808 = vmatprep.subr.bf16.mxu0 0
        %3809 = vmatpush2.bf16.msra.mxu0 0
        %3810 = vmatprep.subr.bf16.mxu0 0
        %3811 = vmatpush2.bf16.msra.mxu0 0
        %3812 = vmatprep.subr.bf16.mxu0 0
        %3813 = vmatpush2.bf16.msra.mxu0 0
        %3814 = vmatprep.subr.bf16.mxu0 0
        %3815 = vmatpush2.bf16.msra.mxu0 0
        %3816 = vmatprep.subr.bf16.mxu0 0
        %3817 = vmatpush2.bf16.msra.mxu0 0
        %3818 = vmatprep.mubr.bf16.mxu0 0
        %3819 = vmatmul.mubr.bf16.gmra.mxu0 %v2454
        %v3820 = vpop.f32.mrf.mxu0
        %v3821 = vadd.f32 0.0, %v3820
        %v3822 = vpop.f32.mrf.mxu0
        %v3823 = vpop.f32.mrf.mxu0
        %v3824 = vpop.f32.mrf.mxu0
        %3825 = vdwg.mxu0
        %s3826 = scalar_lea.vmem %s2, 112
        %v3827 = vld [vmem:[%s3826] sm:$0xf]
        %v3828 = vld [vmem:[%s3826 + $0x4] sm:$0xf]
        %v3829 = vld [vmem:[%s3826 + $0x8] sm:$0xf]
        %v3830 = vld [vmem:[%s3826 + $0xc] sm:$0xf]
        %v3835 = vunpack.c.l.b16 %v3827
        %v3836 = vunpack.c.l.b16 %v3828
        %v3837 = vunpack.c.l.b16 %v3829
        %v3838 = vunpack.c.l.b16 %v3830
        %v3839 = vpack.c.b16 %v3836, %v3835
        %v3840 = vpack.c.b16 %v3838, %v3837
        %3843 = vmatprep.subr.bf16.mxu0 0
        %3844 = vmatpush1.bf16.msra.mxu0 0
        %3845 = vmatprep.subr.bf16.mxu0 0
        %3846 = vmatpush1.bf16.msra.mxu0 0
        %3847 = vmatprep.subr.bf16.mxu0 0
        %3848 = vmatpush1.bf16.msra.mxu0 0
        %3849 = vmatprep.subr.bf16.mxu0 0
        %3850 = vmatpush1.bf16.msra.mxu0 0
        %3851 = vmatprep.subr.bf16.mxu0 0
        %3852 = vmatpush1.bf16.msra.mxu0 0
        %3853 = vmatprep.subr.bf16.mxu0 0
        %3854 = vmatpush1.bf16.msra.mxu0 0
        %3855 = vmatprep.subr.bf16.mxu0 0
        %3856 = vmatpush1.bf16.msra.mxu0 %v3840
        %3857 = vmatprep.subr.bf16.mxu0 0
        %3858 = vmatpush1.bf16.msra.mxu0 %v3839
        %3859 = vmatprep.subr.bf16.mxu0 0
        %3860 = vmatpush2.bf16.msra.mxu0 0
        %3861 = vmatprep.subr.bf16.mxu0 0
        %3862 = vmatpush2.bf16.msra.mxu0 0
        %3863 = vmatprep.subr.bf16.mxu0 0
        %3864 = vmatpush2.bf16.msra.mxu0 0
        %3865 = vmatprep.subr.bf16.mxu0 0
        %3866 = vmatpush2.bf16.msra.mxu0 0
        %3867 = vmatprep.subr.bf16.mxu0 0
        %3868 = vmatpush2.bf16.msra.mxu0 0
        %3869 = vmatprep.subr.bf16.mxu0 0
        %3870 = vmatpush2.bf16.msra.mxu0 0
        %3871 = vmatprep.subr.bf16.mxu0 0
        %3872 = vmatpush2.bf16.msra.mxu0 0
        %3873 = vmatprep.subr.bf16.mxu0 0
        %3874 = vmatpush2.bf16.msra.mxu0 0
        %3875 = vmatprep.mubr.bf16.mxu0 0
        %3876 = vmatmul.mubr.bf16.gmra.mxu0 %v2454
        %v3877 = vpop.f32.mrf.mxu0
        %v3878 = vadd.f32 0.0, %v3877
        %v3879 = vpop.f32.mrf.mxu0
        %v3880 = vpop.f32.mrf.mxu0
        %v3881 = vpop.f32.mrf.mxu0
        %3882 = vdwg.mxu0
        %v3883 = vmul.f32 %v3821, %v519
        %v3884 = vmul.f32 %v3878, %v520
        %v3885 = vadd.f32 %v3883, %v3884
        %v3887 = vsel %vm1008, %v3885, 0
        %3889 = vmatprep.subr.mxu0 0.0
        %3890 = vmatpush1.xpose.msra.mxu0 0.0
        %3891 = vmatprep.subr.mxu0 0.0
        %3892 = vmatpush1.xpose.msra.mxu0 0.0
        %3893 = vmatprep.subr.mxu0 0.0
        %3894 = vmatpush1.xpose.msra.mxu0 0.0
        %3895 = vmatprep.subr.mxu0 0.0
        %3896 = vmatpush1.xpose.msra.mxu0 0.0
        %3897 = vmatprep.subr.mxu0 0.0
        %3898 = vmatpush1.xpose.msra.mxu0 0.0
        %3899 = vmatprep.subr.mxu0 0.0
        %3900 = vmatpush1.xpose.msra.mxu0 0.0
        %3901 = vmatprep.subr.mxu0 0.0
        %3902 = vmatpush1.xpose.msra.mxu0 0.0
        %3903 = vmatprep.subr.mxu0 0.0
        %3904 = vmatpush1.xpose.msra.mxu0 0.0
        %3905 = vmatprep.subr.mxu0 0.0
        %3906 = vmatpush1.xpose.msra.mxu0 0.0
        %3907 = vmatprep.subr.mxu0 0.0
        %3908 = vmatpush1.xpose.msra.mxu0 0.0
        %3909 = vmatprep.subr.mxu0 0.0
        %3910 = vmatpush1.xpose.msra.mxu0 0.0
        %3911 = vmatprep.subr.mxu0 0.0
        %3912 = vmatpush1.xpose.msra.mxu0 0.0
        %3913 = vmatprep.subr.mxu0 0.0
        %3914 = vmatpush1.xpose.msra.mxu0 0.0
        %3915 = vmatprep.subr.mxu0 0.0
        %3916 = vmatpush1.xpose.msra.mxu0 0.0
        %3917 = vmatprep.subr.mxu0 0.0
        %3918 = vmatpush1.xpose.msra.mxu0 0.0
        %3919 = vmatprep.subr.mxu0 0.0
        %3920 = vmatpush1.xpose.msra.mxu0 %v3561
        %3921 = vmatprep.subr.mxu0 0.0
        %3922 = vmatpush2.xpose.msra.mxu0 0.0
        %3923 = vmatprep.subr.mxu0 0.0
        %3924 = vmatpush2.xpose.msra.mxu0 0.0
        %3925 = vmatprep.subr.mxu0 0.0
        %3926 = vmatpush2.xpose.msra.mxu0 0.0
        %3927 = vmatprep.subr.mxu0 0.0
        %3928 = vmatpush2.xpose.msra.mxu0 0.0
        %3929 = vmatprep.subr.mxu0 0.0
        %3930 = vmatpush2.xpose.msra.mxu0 0.0
        %3931 = vmatprep.subr.mxu0 0.0
        %3932 = vmatpush2.xpose.msra.mxu0 0.0
        %3933 = vmatprep.subr.mxu0 0.0
        %3934 = vmatpush2.xpose.msra.mxu0 0.0
        %3935 = vmatprep.subr.mxu0 0.0
        %3936 = vmatpush2.xpose.msra.mxu0 0.0
        %3937 = vmatprep.subr.mxu0 0.0
        %3938 = vmatpush2.xpose.msra.mxu0 0.0
        %3939 = vmatprep.subr.mxu0 0.0
        %3940 = vmatpush2.xpose.msra.mxu0 0.0
        %3941 = vmatprep.subr.mxu0 0.0
        %3942 = vmatpush2.xpose.msra.mxu0 0.0
        %3943 = vmatprep.subr.mxu0 0.0
        %3944 = vmatpush2.xpose.msra.mxu0 0.0
        %3945 = vmatprep.subr.mxu0 0.0
        %3946 = vmatpush2.xpose.msra.mxu0 0.0
        %3947 = vmatprep.subr.mxu0 0.0
        %3948 = vmatpush2.xpose.msra.mxu0 0.0
        %3949 = vmatprep.subr.mxu0 0.0
        %3950 = vmatpush2.xpose.msra.mxu0 0.0
        %3951 = vmatprep.subr.mxu0 0.0
        %3952 = vmatpush2.xpose.msra.mxu0 0.0
        %3953 = vmatprep.mubr.f32.mxu0 0.0
        %3954 = vmatmul.mubr.f32.gmra.mxu0 %v3887
        %v3955 = vpop.f32.mrf.mxu0
        %v3956 = vadd.f32 0.0, %v3955
        %v3957 = vpop.f32.mrf.mxu0
        %3958 = vdwg.mxu0
        %v3959 = vmul.f32 %v3956, 0.35355338
        %v3960 = vsel %vm525, %v3959, -1e+30
        %v3961 = vsel %vm1008, %v3960, -inf
        %3962 = vmax.xlane.f32.xlu0 %v3961
        %v3963 = vpop.xlane.xlu0 %3962
        %v3964 = vsub.f32 %v3960, %v3963
        %v3965 = vmul.f32 %v3964, 1.442695
        %v3966 = vpow.pop %v3965
        %v3967 = vsel %vm1008, %v3966, 0.0
        %3968 = vadd.xlane.f32.xlu0 %v3967
        %v3969 = vpop.xlane.xlu0 %3968
        %v3970 = vrcp.pop %v3969
        %v3971 = vmul.f32 %v3966, %v3970
        %v3973 = vsel %vm1008, %v3971, 0
        %3975 = vmatprep.subr.mxu0 0.0
        %3976 = vmatpush1.msra.mxu0 0.0
        %3977 = vmatprep.subr.mxu0 0.0
        %3978 = vmatpush1.msra.mxu0 0.0
        %3979 = vmatprep.subr.mxu0 0.0
        %3980 = vmatpush1.msra.mxu0 0.0
        %3981 = vmatprep.subr.mxu0 0.0
        %3982 = vmatpush1.msra.mxu0 0.0
        %3983 = vmatprep.subr.mxu0 0.0
        %3984 = vmatpush1.msra.mxu0 0.0
        %3985 = vmatprep.subr.mxu0 0.0
        %3986 = vmatpush1.msra.mxu0 0.0
        %3987 = vmatprep.subr.mxu0 0.0
        %3988 = vmatpush1.msra.mxu0 0.0
        %3989 = vmatprep.subr.mxu0 0.0
        %3990 = vmatpush1.msra.mxu0 0.0
        %3991 = vmatprep.subr.mxu0 0.0
        %3992 = vmatpush1.msra.mxu0 0.0
        %3993 = vmatprep.subr.mxu0 0.0
        %3994 = vmatpush1.msra.mxu0 0.0
        %3995 = vmatprep.subr.mxu0 0.0
        %3996 = vmatpush1.msra.mxu0 0.0
        %3997 = vmatprep.subr.mxu0 0.0
        %3998 = vmatpush1.msra.mxu0 0.0
        %3999 = vmatprep.subr.mxu0 0.0
        %4000 = vmatpush1.msra.mxu0 0.0
        %4001 = vmatprep.subr.mxu0 0.0
        %4002 = vmatpush1.msra.mxu0 0.0
        %4003 = vmatprep.subr.mxu0 0.0
        %4004 = vmatpush1.msra.mxu0 0.0
        %4005 = vmatprep.subr.mxu0 0.0
        %4006 = vmatpush1.msra.mxu0 %v2782
        %4007 = vmatprep.subr.mxu0 0.0
        %4008 = vmatpush2.msra.mxu0 0.0
        %4009 = vmatprep.subr.mxu0 0.0
        %4010 = vmatpush2.msra.mxu0 0.0
        %4011 = vmatprep.subr.mxu0 0.0
        %4012 = vmatpush2.msra.mxu0 0.0
        %4013 = vmatprep.subr.mxu0 0.0
        %4014 = vmatpush2.msra.mxu0 0.0
        %4015 = vmatprep.subr.mxu0 0.0
        %4016 = vmatpush2.msra.mxu0 0.0
        %4017 = vmatprep.subr.mxu0 0.0
        %4018 = vmatpush2.msra.mxu0 0.0
        %4019 = vmatprep.subr.mxu0 0.0
        %4020 = vmatpush2.msra.mxu0 0.0
        %4021 = vmatprep.subr.mxu0 0.0
        %4022 = vmatpush2.msra.mxu0 0.0
        %4023 = vmatprep.subr.mxu0 0.0
        %4024 = vmatpush2.msra.mxu0 0.0
        %4025 = vmatprep.subr.mxu0 0.0
        %4026 = vmatpush2.msra.mxu0 0.0
        %4027 = vmatprep.subr.mxu0 0.0
        %4028 = vmatpush2.msra.mxu0 0.0
        %4029 = vmatprep.subr.mxu0 0.0
        %4030 = vmatpush2.msra.mxu0 0.0
        %4031 = vmatprep.subr.mxu0 0.0
        %4032 = vmatpush2.msra.mxu0 0.0
        %4033 = vmatprep.subr.mxu0 0.0
        %4034 = vmatpush2.msra.mxu0 0.0
        %4035 = vmatprep.subr.mxu0 0.0
        %4036 = vmatpush2.msra.mxu0 0.0
        %4037 = vmatprep.subr.mxu0 0.0
        %4038 = vmatpush2.msra.mxu0 0.0
        %4039 = vmatprep.mubr.f32.mxu0 0.0
        %4040 = vmatmul.mubr.f32.gmra.mxu0 %v3973
        %v4041 = vpop.f32.mrf.mxu0
        %v4042 = vadd.f32 0.0, %v4041
        %v4043 = vpop.f32.mrf.mxu0
        %4044 = vdwg.mxu0
        %v4045 = vpack.c.bf16 %v4042, %v4042
        %s4046 = scalar_lea.vmem %s6, 28
        %v4047 = vld [vmem:[%s4046] sm:$0xf]
        %v4049 = vsel %vm1008, %v4045, 0
        %v4052 = vsel %vm1455, %v4047, 0
        %4054 = vmatprep.subr.bf16.mxu0 0
        %4055 = vmatpush1.bf16.msra.mxu0 0
        %4056 = vmatprep.subr.bf16.mxu0 0
        %4057 = vmatpush1.bf16.msra.mxu0 0
        %4058 = vmatprep.subr.bf16.mxu0 0
        %4059 = vmatpush1.bf16.msra.mxu0 0
        %4060 = vmatprep.subr.bf16.mxu0 0
        %4061 = vmatpush1.bf16.msra.mxu0 0
        %4062 = vmatprep.subr.bf16.mxu0 0
        %4063 = vmatpush1.bf16.msra.mxu0 0
        %4064 = vmatprep.subr.bf16.mxu0 0
        %4065 = vmatpush1.bf16.msra.mxu0 0
        %4066 = vmatprep.subr.bf16.mxu0 0
        %4067 = vmatpush1.bf16.msra.mxu0 0
        %4068 = vmatprep.subr.bf16.mxu0 0
        %4069 = vmatpush1.bf16.msra.mxu0 %v4052
        %4070 = vmatprep.subr.bf16.mxu0 0
        %4071 = vmatpush2.bf16.msra.mxu0 0
        %4072 = vmatprep.subr.bf16.mxu0 0
        %4073 = vmatpush2.bf16.msra.mxu0 0
        %4074 = vmatprep.subr.bf16.mxu0 0
        %4075 = vmatpush2.bf16.msra.mxu0 0
        %4076 = vmatprep.subr.bf16.mxu0 0
        %4077 = vmatpush2.bf16.msra.mxu0 0
        %4078 = vmatprep.subr.bf16.mxu0 0
        %4079 = vmatpush2.bf16.msra.mxu0 0
        %4080 = vmatprep.subr.bf16.mxu0 0
        %4081 = vmatpush2.bf16.msra.mxu0 0
        %4082 = vmatprep.subr.bf16.mxu0 0
        %4083 = vmatpush2.bf16.msra.mxu0 0
        %4084 = vmatprep.subr.bf16.mxu0 0
        %4085 = vmatpush2.bf16.msra.mxu0 0
        %4086 = vmatprep.mubr.bf16.mxu0 0
        %4087 = vmatmul.mubr.bf16.gmra.mxu0 %v4049
        %v4088 = vpop.f32.mrf.mxu0
        %v4089 = vadd.f32 0.0, %v4088
        %v4090 = vpop.f32.mrf.mxu0
        %v4091 = vpop.f32.mrf.mxu0
        %v4092 = vpop.f32.mrf.mxu0
        %4093 = vdwg.mxu0
        %v4094 = vadd.f32 %v3768, %v4089
        %v4095 = vadd.f32 %v2413, %v4094
        %s4096 = scalar_lea.vmem %s11, 1
        %v4097 = vld [vmem:[%s4096] sm:$0x1]
        %v4098 = vmul.f32 %v4095, %v4095
        %v4099 = vsel %vm528, %v4098, 0.0
        %4100 = vadd.xlane.f32.xlu0 %v4099
        %v4101 = vpop.xlane.xlu0 %4100
        %v4102 = vmul.f32 %v4101, %v532
        %v4103 = vadd.f32 %v4102, 1e-05
        %v4104 = vrsqrt.pop %v4103
        %v4105 = vmul.f32 %v4095, %v4104
        %v4107 = vlaneseq
        %v4108 = vshrl.u32 %v4107, 7
        %v4109 = vsub.s32 0, %v4108
        %v4110 = vrot.slane %v4097, %v4109
        %v4112 = vmul.f32 %v4105, %v4110
        %v4113 = vpack.c.bf16 %v4112, %v4112
        %s4114 = scalar_lea.vmem %s7, 16
        %v4115 = vld [vmem:[%s4114] sm:$0xf]
        %v4116 = vld [vmem:[%s4114 + $0x4] sm:$0xf]
        %v4117 = vld [vmem:[%s4114 + $0x8] sm:$0xf]
        %v4118 = vld [vmem:[%s4114 + $0xc] sm:$0xf]
        %v4123 = vunpack.c.l.b16 %v4115
        %v4124 = vunpack.c.l.b16 %v4116
        %v4125 = vunpack.c.l.b16 %v4117
        %v4126 = vunpack.c.l.b16 %v4118
        %v4127 = vpack.c.b16 %v4124, %v4123
        %v4128 = vpack.c.b16 %v4126, %v4125
        %v4132 = vsel %vm528, %v4113, 0
        %4134 = vmatprep.subr.bf16.mxu0 0
        %4135 = vmatpush1.bf16.msra.mxu0 0
        %4136 = vmatprep.subr.bf16.mxu0 0
        %4137 = vmatpush1.bf16.msra.mxu0 0
        %4138 = vmatprep.subr.bf16.mxu0 0
        %4139 = vmatpush1.bf16.msra.mxu0 0
        %4140 = vmatprep.subr.bf16.mxu0 0
        %4141 = vmatpush1.bf16.msra.mxu0 0
        %4142 = vmatprep.subr.bf16.mxu0 0
        %4143 = vmatpush1.bf16.msra.mxu0 0
        %4144 = vmatprep.subr.bf16.mxu0 0
        %4145 = vmatpush1.bf16.msra.mxu0 0
        %4146 = vmatprep.subr.bf16.mxu0 0
        %4147 = vmatpush1.bf16.msra.mxu0 %v4128
        %4148 = vmatprep.subr.bf16.mxu0 0
        %4149 = vmatpush1.bf16.msra.mxu0 %v4127
        %4150 = vmatprep.subr.bf16.mxu0 0
        %4151 = vmatpush2.bf16.msra.mxu0 0
        %4152 = vmatprep.subr.bf16.mxu0 0
        %4153 = vmatpush2.bf16.msra.mxu0 0
        %4154 = vmatprep.subr.bf16.mxu0 0
        %4155 = vmatpush2.bf16.msra.mxu0 0
        %4156 = vmatprep.subr.bf16.mxu0 0
        %4157 = vmatpush2.bf16.msra.mxu0 0
        %4158 = vmatprep.subr.bf16.mxu0 0
        %4159 = vmatpush2.bf16.msra.mxu0 0
        %4160 = vmatprep.subr.bf16.mxu0 0
        %4161 = vmatpush2.bf16.msra.mxu0 0
        %4162 = vmatprep.subr.bf16.mxu0 0
        %4163 = vmatpush2.bf16.msra.mxu0 0
        %4164 = vmatprep.subr.bf16.mxu0 0
        %4165 = vmatpush2.bf16.msra.mxu0 0
        %4166 = vmatprep.mubr.bf16.mxu0 0
        %4167 = vmatmul.mubr.bf16.gmra.mxu0 %v4132
        %v4168 = vpop.f32.mrf.mxu0
        %v4169 = vadd.f32 0.0, %v4168
        %v4170 = vpop.f32.mrf.mxu0
        %v4171 = vpop.f32.mrf.mxu0
        %v4172 = vpop.f32.mrf.mxu0
        %4173 = vdwg.mxu0
        %v4174 = vxor.u32 %v4169, 2147483648
        %v4175 = vmul.f32 %v4174, 1.442695
        %v4176 = vpow.pop %v4175
        %v4177 = vadd.f32 %v4176, 1.0
        %v4178 = vrcp.pop %v4177
        %v4179 = vmul.f32 1.0, %v4178
        %v4180 = vmul.f32 %v4169, %v4179
        %s4181 = scalar_lea.vmem %s8, 16
        %v4182 = vld [vmem:[%s4181] sm:$0xf]
        %v4183 = vld [vmem:[%s4181 + $0x4] sm:$0xf]
        %v4184 = vld [vmem:[%s4181 + $0x8] sm:$0xf]
        %v4185 = vld [vmem:[%s4181 + $0xc] sm:$0xf]
        %v4190 = vunpack.c.l.b16 %v4182
        %v4191 = vunpack.c.l.b16 %v4183
        %v4192 = vunpack.c.l.b16 %v4184
        %v4193 = vunpack.c.l.b16 %v4185
        %v4194 = vpack.c.b16 %v4191, %v4190
        %v4195 = vpack.c.b16 %v4193, %v4192
        %4198 = vmatprep.subr.bf16.mxu0 0
        %4199 = vmatpush1.bf16.msra.mxu0 0
        %4200 = vmatprep.subr.bf16.mxu0 0
        %4201 = vmatpush1.bf16.msra.mxu0 0
        %4202 = vmatprep.subr.bf16.mxu0 0
        %4203 = vmatpush1.bf16.msra.mxu0 0
        %4204 = vmatprep.subr.bf16.mxu0 0
        %4205 = vmatpush1.bf16.msra.mxu0 0
        %4206 = vmatprep.subr.bf16.mxu0 0
        %4207 = vmatpush1.bf16.msra.mxu0 0
        %4208 = vmatprep.subr.bf16.mxu0 0
        %4209 = vmatpush1.bf16.msra.mxu0 0
        %4210 = vmatprep.subr.bf16.mxu0 0
        %4211 = vmatpush1.bf16.msra.mxu0 %v4195
        %4212 = vmatprep.subr.bf16.mxu0 0
        %4213 = vmatpush1.bf16.msra.mxu0 %v4194
        %4214 = vmatprep.subr.bf16.mxu0 0
        %4215 = vmatpush2.bf16.msra.mxu0 0
        %4216 = vmatprep.subr.bf16.mxu0 0
        %4217 = vmatpush2.bf16.msra.mxu0 0
        %4218 = vmatprep.subr.bf16.mxu0 0
        %4219 = vmatpush2.bf16.msra.mxu0 0
        %4220 = vmatprep.subr.bf16.mxu0 0
        %4221 = vmatpush2.bf16.msra.mxu0 0
        %4222 = vmatprep.subr.bf16.mxu0 0
        %4223 = vmatpush2.bf16.msra.mxu0 0
        %4224 = vmatprep.subr.bf16.mxu0 0
        %4225 = vmatpush2.bf16.msra.mxu0 0
        %4226 = vmatprep.subr.bf16.mxu0 0
        %4227 = vmatpush2.bf16.msra.mxu0 0
        %4228 = vmatprep.subr.bf16.mxu0 0
        %4229 = vmatpush2.bf16.msra.mxu0 0
        %4230 = vmatprep.mubr.bf16.mxu0 0
        %4231 = vmatmul.mubr.bf16.gmra.mxu0 %v4132
        %v4232 = vpop.f32.mrf.mxu0
        %v4233 = vadd.f32 0.0, %v4232
        %v4234 = vpop.f32.mrf.mxu0
        %v4235 = vpop.f32.mrf.mxu0
        %v4236 = vpop.f32.mrf.mxu0
        %4237 = vdwg.mxu0
        %v4238 = vmul.f32 %v4180, %v4233
        %v4239 = vpack.c.bf16 %v4238, %v4238
        %s4240 = scalar_lea.vmem %s9, 32
        %v4241 = vld [vmem:[%s4240] sm:$0xf]
        %v4242 = vld [vmem:[%s4240 + $0x4] sm:$0xf]
        %v4243 = vld [vmem:[%s4240 + $0x8] sm:$0xf]
        %v4244 = vld [vmem:[%s4240 + $0xc] sm:$0xf]
        %v4245 = vld [vmem:[%s4240 + $0x10] sm:$0xf]
        %v4246 = vld [vmem:[%s4240 + $0x14] sm:$0xf]
        %v4247 = vld [vmem:[%s4240 + $0x18] sm:$0xf]
        %v4248 = vld [vmem:[%s4240 + $0x1c] sm:$0xf]
        %v4257 = vunpack.c.l.b16 %v4241
        %v4258 = vunpack.c.l.b16 %v4242
        %v4259 = vunpack.c.l.b16 %v4243
        %v4260 = vunpack.c.l.b16 %v4244
        %v4261 = vunpack.c.l.b16 %v4245
        %v4262 = vunpack.c.l.b16 %v4246
        %v4263 = vunpack.c.l.b16 %v4247
        %v4264 = vunpack.c.l.b16 %v4248
        %v4265 = vpack.c.b16 %v4258, %v4257
        %v4266 = vpack.c.b16 %v4260, %v4259
        %v4267 = vpack.c.b16 %v4262, %v4261
        %v4268 = vpack.c.b16 %v4264, %v4263
        %v4274 = vsel %vm2374, %v4239, 0
        %4276 = vmatprep.subr.bf16.mxu0 0
        %4277 = vmatpush1.bf16.msra.mxu0 0
        %4278 = vmatprep.subr.bf16.mxu0 0
        %4279 = vmatpush1.bf16.msra.mxu0 0
        %4280 = vmatprep.subr.bf16.mxu0 0
        %4281 = vmatpush1.bf16.msra.mxu0 0
        %4282 = vmatprep.subr.bf16.mxu0 0
        %4283 = vmatpush1.bf16.msra.mxu0 0
        %4284 = vmatprep.subr.bf16.mxu0 0
        %4285 = vmatpush1.bf16.msra.mxu0 %v4268
        %4286 = vmatprep.subr.bf16.mxu0 0
        %4287 = vmatpush1.bf16.msra.mxu0 %v4267
        %4288 = vmatprep.subr.bf16.mxu0 0
        %4289 = vmatpush1.bf16.msra.mxu0 %v4266
        %4290 = vmatprep.subr.bf16.mxu0 0
        %4291 = vmatpush1.bf16.msra.mxu0 %v4265
        %4292 = vmatprep.subr.bf16.mxu0 0
        %4293 = vmatpush2.bf16.msra.mxu0 0
        %4294 = vmatprep.subr.bf16.mxu0 0
        %4295 = vmatpush2.bf16.msra.mxu0 0
        %4296 = vmatprep.subr.bf16.mxu0 0
        %4297 = vmatpush2.bf16.msra.mxu0 0
        %4298 = vmatprep.subr.bf16.mxu0 0
        %4299 = vmatpush2.bf16.msra.mxu0 0
        %4300 = vmatprep.subr.bf16.mxu0 0
        %4301 = vmatpush2.bf16.msra.mxu0 0
        %4302 = vmatprep.subr.bf16.mxu0 0
        %4303 = vmatpush2.bf16.msra.mxu0 0
        %4304 = vmatprep.subr.bf16.mxu0 0
        %4305 = vmatpush2.bf16.msra.mxu0 0
        %4306 = vmatprep.subr.bf16.mxu0 0
        %4307 = vmatpush2.bf16.msra.mxu0 0
        %4308 = vmatprep.mubr.bf16.mxu0 0
        %4309 = vmatmul.mubr.bf16.gmra.mxu0 %v4274
        %v4310 = vpop.f32.mrf.mxu0
        %v4311 = vadd.f32 0.0, %v4310
        %v4312 = vpop.f32.mrf.mxu0
        %v4313 = vpop.f32.mrf.mxu0
        %v4314 = vpop.f32.mrf.mxu0
        %4315 = vdwg.mxu0
        %v4316 = vld [vmem:[%s14] sm:$0x1]
        %v4317 = vmul.f32 %v4311, %v4311
        %v4318 = vsel %vm528, %v4317, 0.0
        %4319 = vadd.xlane.f32.xlu0 %v4318
        %v4320 = vpop.xlane.xlu0 %4319
        %v4321 = vmul.f32 %v4320, %v532
        %v4322 = vadd.f32 %v4321, 1e-05
        %v4323 = vrsqrt.pop %v4322
        %v4324 = vmul.f32 %v4311, %v4323
        %v4326 = vlaneseq
        %v4327 = vshrl.u32 %v4326, 7
        %v4328 = vsub.s32 0, %v4327
        %v4329 = vrot.slane %v4316, %v4328
        %v4331 = vmul.f32 %v4324, %v4329
        %v4332 = vpack.c.bf16 %v4331, %v4331
        %v4333 = vld [vmem:[%s15] sm:$0xf]
        %v4334 = vld [vmem:[%s15 + $0x4] sm:$0xf]
        %v4335 = vld [vmem:[%s15 + $0x8] sm:$0xf]
        %v4336 = vld [vmem:[%s15 + $0xc] sm:$0xf]
        %v4341 = vunpack.c.l.b16 %v4333
        %v4342 = vunpack.c.l.b16 %v4334
        %v4343 = vunpack.c.l.b16 %v4335
        %v4344 = vunpack.c.l.b16 %v4336
        %v4345 = vpack.c.b16 %v4342, %v4341
        %v4346 = vpack.c.b16 %v4344, %v4343
        %v4350 = vsel %vm528, %v4332, 0
        %4352 = vmatprep.subr.bf16.mxu0 0
        %4353 = vmatpush1.bf16.msra.mxu0 0
        %4354 = vmatprep.subr.bf16.mxu0 0
        %4355 = vmatpush1.bf16.msra.mxu0 0
        %4356 = vmatprep.subr.bf16.mxu0 0
        %4357 = vmatpush1.bf16.msra.mxu0 0
        %4358 = vmatprep.subr.bf16.mxu0 0
        %4359 = vmatpush1.bf16.msra.mxu0 0
        %4360 = vmatprep.subr.bf16.mxu0 0
        %4361 = vmatpush1.bf16.msra.mxu0 0
        %4362 = vmatprep.subr.bf16.mxu0 0
        %4363 = vmatpush1.bf16.msra.mxu0 0
        %4364 = vmatprep.subr.bf16.mxu0 0
        %4365 = vmatpush1.bf16.msra.mxu0 %v4346
        %4366 = vmatprep.subr.bf16.mxu0 0
        %4367 = vmatpush1.bf16.msra.mxu0 %v4345
        %4368 = vmatprep.subr.bf16.mxu0 0
        %4369 = vmatpush2.bf16.msra.mxu0 0
        %4370 = vmatprep.subr.bf16.mxu0 0
        %4371 = vmatpush2.bf16.msra.mxu0 0
        %4372 = vmatprep.subr.bf16.mxu0 0
        %4373 = vmatpush2.bf16.msra.mxu0 0
        %4374 = vmatprep.subr.bf16.mxu0 0
        %4375 = vmatpush2.bf16.msra.mxu0 0
        %4376 = vmatprep.subr.bf16.mxu0 0
        %4377 = vmatpush2.bf16.msra.mxu0 0
        %4378 = vmatprep.subr.bf16.mxu0 0
        %4379 = vmatpush2.bf16.msra.mxu0 0
        %4380 = vmatprep.subr.bf16.mxu0 0
        %4381 = vmatpush2.bf16.msra.mxu0 0
        %4382 = vmatprep.subr.bf16.mxu0 0
        %4383 = vmatpush2.bf16.msra.mxu0 0
        %4384 = vmatprep.mubr.bf16.mxu0 0
        %4385 = vmatmul.mubr.bf16.gmra.mxu0 %v4350
        %v4386 = vpop.f32.mrf.mxu0
        %v4387 = vadd.f32 0.0, %v4386
        %v4388 = vpop.f32.mrf.mxu0
        %v4389 = vpop.f32.mrf.mxu0
        %v4390 = vpop.f32.mrf.mxu0
        %4391 = vdwg.mxu0
        %4392 = vst.msk [vmem:[%s512] sm:$0xff] %vm2374, %v4387
        %s4393 = sand.u32 %s379, 1
        %s4394 = scalar_lea.sflag [#allocation3], %s4393
        %s4395 = sand.u32 %s379, 1
        %s4396 = smul.addr %s4395, 8
        %s4397 = scalar_lea.vmem [#allocation2], %s4396
        // Predicated region
        $region85: #{llama_forward.1} parent=83 // pred_check
          %p4398 = pneg %p389
        $region86: #{llama_forward.1} parent=83 // pred_check_branch
          %4400 = sbr.rel (%p4398) target = $region88
        $region87: #{llama_forward.1} parent=83 // pred_region
          %s4402 = ssub.s32 128, 128
          %4403 = vsyncadd %s4394, %s4402
          %s4404 = smul.addr %s30, 128
          %s4405 = scalar_lea.hbm %s16, %s4404
          %s4407 = sshll.u32 %s4397, 4
          %s4408 = int_to_ptr.vmem [resolvable:$true] %s4407
          %4410 = dma.vmem_to_hbm [thread:$0]  %s4408, 128, %s4405, %s4394
        $region88: #{llama_forward.1} parent=83 // pred_fallthru
          _
      $region84: #{llama_forward.1} parent=5 // pred_fallthru
        _
      %p4411 = scmp.le.s32.totalorder 2, %s25
      // Predicated region
      $region89: #{llama_forward.1} parent=5 // pred_check
        %p4412 = pneg %p4411
      $region90: #{llama_forward.1} parent=5 // pred_check_branch
        %4414 = sbr.rel (%p4412) target = $region92
      $region91: #{llama_forward.1} parent=5 // pred_region
        %s4415 = ssub.s32 %s25, 2
        // Predicated region
        $region93: #{llama_forward.1} parent=91 // pred_check
          %p4416 = pneg %p395
        $region94: #{llama_forward.1} parent=91 // pred_check_branch
          %4418 = sbr.rel (%p4416) target = $region96
        $region95: #{llama_forward.1} parent=91 // pred_region
          %s4419 = sand.u32 %s380, 1
          %s4420 = scalar_lea.sflag [#allocation3], %s4419
          %s4421 = sand.u32 %s380, 1
          %s4422 = smul.addr %s4421, 8
          %s4423 = scalar_lea.vmem [#allocation2], %s4422
          %4424 = dma.done %s4420, 128
        $region96: #{llama_forward.1} parent=91 // pred_fallthru
          _
      $region92: #{llama_forward.1} parent=5 // pred_fallthru
        _
    $region6: #{llama_forward.1} parent=1 // loop_footer
      %s29 = sadd.s32 1, %s25
    $region7: #{llama_forward.1} parent=1 // loop_footer_branch
      %24 = sbr.rel target = $region3
    $region8: #{llama_forward.1} parent=1 // loop_exit
      _
    %4425 = vsyncpa [#allocation3], 1
    %s4426 = scalar_lea.sflag [#allocation3], 1
    %4427 = vsyncpa %s4426, 1

</llo_original>
